<compile_context>
chip_gen: v7x
topology: tpu7x:2x2x1
jax: 0.10.0
libtpu: 0.0.40
codegen_flags: <defaults>
</compile_context>

<pallas_src>
import functools

import jax
import jax.numpy as jnp
from jax.experimental import pallas as pl
from jax.experimental.pallas import tpu as pltpu

N_GROUPS = 32
EPS = 1e-5

_PARALLEL = pltpu.CompilerParams(dimension_semantics=("parallel",))


# --------------------------------------------------------------------------- #
# Layout helpers (wrapper side)
# --------------------------------------------------------------------------- #
def _layout(H, W):
    """Flat, zero-padded spatial layout used by the ResidualBlock kernel."""
    Wp = W + 2                       # 1 col of zero padding on each side
    Hp = H + 3                       # 1 row top, 2 rows bottom (tap headroom)
    lead = (-(Wp + 1)) % 8           # align the interior frame to 8 sublanes
    Np = lead + Hp * Wp              # flat padded length per image
    M = H * Wp                       # conv output frame (2 junk cols per row)
    base = lead + Wp + 1             # flat index of data pixel (0, 0)
    return Wp, Np, M, base, lead


def _to_padded_flat(x_nhwc, lead):
    """(B, H, W, C) -> (B, lead + (H+3)*(W+2), C), zero padded, row-major flat."""
    B, H, W, C = x_nhwc.shape
    xp = jnp.pad(x_nhwc, ((0, 0), (1, 2), (1, 1), (0, 0)))
    xp = xp.reshape(B, (H + 3) * (W + 2), C)
    return jnp.pad(xp, ((0, 0), (lead, 0), (0, 0)))


def _group_matrix(c):
    """(C, C) group-membership matrix: sums @ gmat = per-group sums (broadcast)."""
    ids = jnp.arange(c) // (c // N_GROUPS)
    return (ids[:, None] == ids[None, :]).astype(jnp.float32)


def _conv3x3_taps(w):
    """torch conv weight (Cout, Cin, 3, 3) -> (3, Cin, 3*Cout) bf16.

    For each ky the 3 kx taps are stacked along the output (N) dimension so the
    in-kernel conv is 3 wide matmuls instead of 9 narrow ones.
    """
    cout, cin = w.shape[0], w.shape[1]
    return jnp.transpose(w, (2, 1, 3, 0)).reshape(3, cin, 3 * cout).astype(jnp.bfloat16)


# --------------------------------------------------------------------------- #
# In-kernel building blocks (traced helpers)
# --------------------------------------------------------------------------- #
def _gn_swish_bf16(x, gamma, beta, gmat, mask, n_pix):
    """GroupNorm(32) + Swish on an (Np, C) f32 slab; returns masked bf16 slab."""
    s = jnp.sum(x, axis=0, keepdims=True)                     # (1, C)
    ss = jnp.sum(x * x, axis=0, keepdims=True)                # (1, C)
    gsum = jnp.dot(s, gmat, preferred_element_type=jnp.float32)
    gsq = jnp.dot(ss, gmat, preferred_element_type=jnp.float32)
    mean = gsum * (1.0 / n_pix)
    var = gsq * (1.0 / n_pix) - mean * mean
    inv = jax.lax.rsqrt(var + EPS)
    scale = gamma * inv
    shift = beta - mean * scale
    y = x * scale + shift
    y = y * jax.nn.sigmoid(y)                                 # Swish
    y = y * mask                                              # re-zero padding/junk
    return y.astype(jnp.bfloat16)                             # single cast for the conv


def _conv3x3(yb, w_ref, Wp, M, frame0):
    """3x3 'same' conv: per ky, one (M+2, Cin) x (Cin, 3*Cout) MXU matmul."""
    cout = w_ref.shape[-1] // 3
    acc = jnp.zeros((M, cout), jnp.float32)
    for ky in range(3):
        off = frame0 + ky * Wp
        z = jnp.dot(yb[off:off + M + 2, :], w_ref[ky],
                    preferred_element_type=jnp.float32)       # (M+2, 3*Cout)
        acc = (acc
               + z[0:M, 0:cout]
               + z[1:M + 1, cout:2 * cout]
               + z[2:M + 2, 2 * cout:3 * cout])
    return acc


# --------------------------------------------------------------------------- #
# Kernels
# --------------------------------------------------------------------------- #
def _resblock_kernel(xp_ref, temb_ref, pmask_ref,
                     g1_ref, be1_ref, gmat1_ref, w1_ref, cb1_ref,
                     g2_ref, be2_ref, gmat2_ref, w2_ref, cb2_ref,
                     wadj_ref, badj_ref,
                     o_ref, hp_ref,
                     *, H, W, Wp, Np, M, base, n_pix1, n_pix2):
    """Fused ResidualBlock for one batch element; `h` stays in VMEM."""
    frame0 = base - Wp - 1
    pmask = pmask_ref[...]                                    # (Np, 1) f32
    qmask = pmask[base:base + M, :]                           # interior junk-col mask

    # ---- GN1 + Swish + conv_1 + time embedding ----
    xp = xp_ref[0].astype(jnp.float32)                        # (Np, Cin) f32
    y1 = _gn_swish_bf16(xp, g1_ref[...], be1_ref[...], gmat1_ref[...], pmask, n_pix1)
    h = _conv3x3(y1, w1_ref, Wp, M, frame0)                   # (M, Cout) f32
    h = (h + cb1_ref[...] + temb_ref[0]) * qmask              # zero junk columns

    # Stash h in the zero-padded flat layout (VMEM scratch only, never HBM).
    cout = h.shape[-1]
    hp_ref[0:base, :] = jnp.zeros((base, cout), jnp.float32)          # top border
    hp_ref[base + M:Np, :] = jnp.zeros((Np - base - M, cout), jnp.float32)  # bottom
    hp_ref[base:base + M, :] = h

    # ---- GN2 + Swish + conv_2 + 1x1 skip ----
    y2 = _gn_swish_bf16(hp_ref[...], g2_ref[...], be2_ref[...], gmat2_ref[...],
                        pmask, n_pix2)
    h2 = _conv3x3(y2, w2_ref, Wp, M, frame0)                  # (M, Cout) f32
    xs = xp_ref[0][base:base + M, :]                          # bf16 (M, Cin)
    skip = jnp.dot(xs, wadj_ref[...],
                   preferred_element_type=jnp.float32) + badj_ref[...]
    out = h2 + cb2_ref[...] + skip                            # (M, Cout) f32

    # Dense store: drop the 2 junk columns per row inside the kernel.
    dense = jnp.concatenate([out[r * Wp:r * Wp + W, :] for r in range(H)], axis=0)
    o_ref[0] = dense.astype(o_ref.dtype)                      # (H*W, Cout)


def _attn_kernel(x_ref, wqkv_ref, bqkv_ref, wo_ref, bo_ref, o_ref, *, scale):
    """Single-head self-attention (d_k = C) with fused QKV + residual add."""
    # TODO(synk): flash-style kv-axis tiling (online softmax) for large H*W; the
    # whole (HW, HW) score tile only fits VMEM for modest images (fine here).
    xb = x_ref[0]                                             # (HW, C) bf16
    x = xb.astype(jnp.float32)
    C = x.shape[-1]
    qkv = jnp.dot(xb, wqkv_ref[...],
                  preferred_element_type=jnp.float32) + bqkv_ref[...]
    q = (qkv[:, 0:C] * scale).astype(jnp.bfloat16)            # fold 1/sqrt(d_k) into q
    k = qkv[:, C:2 * C].astype(jnp.bfloat16)
    v = qkv[:, 2 * C:3 * C].astype(jnp.bfloat16)
    s = jax.lax.dot_general(q, k, (((1,), (1,)), ((), ())),
                            preferred_element_type=jnp.float32)   # (HW, HW)
    m = jnp.max(s, axis=-1, keepdims=True)
    e = jnp.exp(s - m)
    p = e * pl.reciprocal(jnp.sum(e, axis=-1, keepdims=True), approx=True)
    res = jnp.dot(p.astype(jnp.bfloat16), v, preferred_element_type=jnp.float32)
    out = jnp.dot(res.astype(jnp.bfloat16), wo_ref[...],
                  preferred_element_type=jnp.float32) + bo_ref[...] + x
    o_ref[0] = out.astype(o_ref.dtype)


# --------------------------------------------------------------------------- #
# pallas_call wrappers
# --------------------------------------------------------------------------- #
def _const(shape):
    return pl.BlockSpec(shape, lambda b: (0,) * len(shape))


def residual_block(xp, temb, pmask, g1, be1, gmat1, w1, cb1,
                   g2, be2, gmat2, w2, cb2, wadj, badj, *, H, W):
    B, Np, ct = xp.shape
    Wp, Np_exp, M, base, _ = _layout(H, W)
    assert Np == Np_exp
    cout = cb1.shape[-1]
    kernel = functools.partial(
        _resblock_kernel, H=H, W=W, Wp=Wp, Np=Np, M=M, base=base,
        n_pix1=float(H * W * (ct // N_GROUPS)),
        n_pix2=float(H * W * (cout // N_GROUPS)))
    return pl.pallas_call(
        kernel,
        out_shape=jax.ShapeDtypeStruct((B, H * W, cout), jnp.bfloat16),
        grid=(B,),
        in_specs=[pl.BlockSpec((1, Np, ct), lambda b: (b, 0, 0)),       # xp (bf16)
                  pl.BlockSpec((1, 1, cout), lambda b: (b, 0, 0)),      # temb
                  _const((Np, 1)),                                      # pad mask
                  _const((1, ct)), _const((1, ct)), _const((ct, ct)),   # GN1
                  _const((3, ct, 3 * cout)), _const((1, cout)),         # conv1
                  _const((1, cout)), _const((1, cout)), _const((cout, cout)),  # GN2
                  _const((3, cout, 3 * cout)), _const((1, cout)),       # conv2
                  _const((ct, cout)), _const((1, cout))],               # 1x1 skip
        out_specs=pl.BlockSpec((1, H * W, cout), lambda b: (b, 0, 0)),
        scratch_shapes=[pltpu.VMEM((Np, cout), jnp.float32)],           # h slab
        compiler_params=_PARALLEL,
    )(xp, temb, pmask, g1, be1, gmat1, w1, cb1, g2, be2, gmat2, w2, cb2, wadj, badj)


def attention(x, wqkv, bqkv, wo, bo):
    B, HW, C = x.shape
    kernel = functools.partial(_attn_kernel, scale=float(C) ** -0.5)
    return pl.pallas_call(
        kernel,
        out_shape=jax.ShapeDtypeStruct((B, HW, C), jnp.float32),
        grid=(B,),
        in_specs=[pl.BlockSpec((1, HW, C), lambda b: (b, 0, 0)),
                  _const((C, 3 * C)), _const((1, 3 * C)),
                  _const((C, C)), _const((1, C))],
        out_specs=pl.BlockSpec((1, HW, C), lambda b: (b, 0, 0)),
        compiler_params=_PARALLEL,
    )(x, wqkv, bqkv, wo, bo)


# --------------------------------------------------------------------------- #
# Parameters & forward
# --------------------------------------------------------------------------- #
def init_params(key, in_channels, out_channels, time_channels):
    ct = in_channels + out_channels          # ResidualBlock input channels
    c = out_channels
    ks = jax.random.split(key, 16)

    def rnd(k, shape, scale=0.05):
        return scale * jax.random.normal(k, shape, dtype=jnp.float32)

    wq, wk, wv = rnd(ks[0], (c, c)), rnd(ks[1], (c, c)), rnd(ks[2], (c, c))
    bq, bk, bv = rnd(ks[3], (1, c)), rnd(ks[4], (1, c)), rnd(ks[5], (1, c))
    return dict(
        gn1_gamma=jnp.ones((1, ct), jnp.float32),
        gn1_beta=jnp.zeros((1, ct), jnp.float32),
        conv1_w=_conv3x3_taps(rnd(ks[6], (c, ct, 3, 3))),          # (3, ct, 3c) bf16
        conv1_b=rnd(ks[7], (1, c)),
        time_w=rnd(ks[8], (time_channels, c)),                     # f32 (XLA-side)
        time_b=rnd(ks[9], (1, c)),
        gn2_gamma=jnp.ones((1, c), jnp.float32),
        gn2_beta=jnp.zeros((1, c), jnp.float32),
        conv2_w=_conv3x3_taps(rnd(ks[10], (c, c, 3, 3))),          # (3, c, 3c) bf16
        conv2_b=rnd(ks[11], (1, c)),
        adjust_w=rnd(ks[12], (c, ct, 1, 1))[:, :, 0, 0].T.astype(jnp.bfloat16),
        adjust_b=rnd(ks[13], (1, c)),
        # AttentionBlock: Linear(C, 3C) fused QKV projection + output Linear(C, C)
        attn_wqkv=jnp.concatenate([wq, wk, wv], axis=1).astype(jnp.bfloat16),
        attn_bqkv=jnp.concatenate([bq, bk, bv], axis=1),
        attn_wo=rnd(ks[14], (c, c)).astype(jnp.bfloat16),
        attn_bo=rnd(ks[15], (1, c)),
    )


def up_block_forward(params, x_nchw, t, has_attn=True):
    """UpBlock.forward.  x_nchw: (B, in_ch + out_ch, H, W), t: (B, time_ch)."""
    B, ct, H, W = x_nchw.shape
    cout = params["conv1_b"].shape[-1]
    _, _, _, _, lead = _layout(H, W)

    # Layout plumbing: NCHW -> channel-last, zero-padded, flattened, bf16 in HBM.
    x_nhwc = jnp.transpose(x_nchw, (0, 2, 3, 1))
    xp = _to_padded_flat(x_nhwc, lead).astype(jnp.bfloat16)                # (B, Np, ct)
    pmask = _to_padded_flat(jnp.ones((1, H, W, 1), jnp.float32), lead)[0]  # (Np, 1)

    # Time-embedding path hoisted to a tiny XLA op: Swish(t) @ W_t + b_t.
    t_sw = t * jax.nn.sigmoid(t)
    temb = (t_sw @ params["time_w"] + params["time_b"]).reshape(B, 1, cout)

    gmat1 = _group_matrix(ct)
    gmat2 = _group_matrix(cout)

    # ---- ResidualBlock (single fused kernel) ----
    res = residual_block(xp, temb, pmask,
                         params["gn1_gamma"], params["gn1_beta"], gmat1,
                         params["conv1_w"], params["conv1_b"],
                         params["gn2_gamma"], params["gn2_beta"], gmat2,
                         params["conv2_w"], params["conv2_b"],
                         params["adjust_w"], params["adjust_b"],
                         H=H, W=W)                                         # (B, H*W, cout) bf16

    # ---- AttentionBlock (nn.Identity when has_attn=False) ----
    if has_attn:
        out = attention(res, params["attn_wqkv"], params["attn_bqkv"],
                        params["attn_wo"], params["attn_bo"])              # (B, H*W, cout) f32
    else:
        out = res.astype(jnp.float32)

    return jnp.transpose(out.reshape(B, H, W, cout), (0, 3, 1, 2))


# --------------------------------------------------------------------------- #
# Demo
# --------------------------------------------------------------------------- #
if __name__ == "__main__":
    # GroupNorm(32, C) requires channel counts that are multiples of 32; 128 output
    # channels keeps every kernel output lane-dense (>= 128 lanes).
    in_channels, out_channels, time_channels = 64, 128, 128
    B, H, W = 2, 8, 8

    key = jax.random.PRNGKey(0)
    kx, kt, kp = jax.random.split(key, 3)
    # UpBlock's ResidualBlock expects in_channels + out_channels input channels.
    x = jax.random.normal(kx, (B, in_channels + out_channels, H, W), jnp.float32)
    t = jax.random.normal(kt, (B, time_channels), jnp.float32)
    params = init_params(kp, in_channels, out_channels, time_channels)

    fwd = jax.jit(up_block_forward, static_argnames=("has_attn",))
    out = fwd(params, x, t, has_attn=True)
    out = jax.block_until_ready(out)
    assert out.shape == (B, out_channels, H, W)
    assert bool(jnp.all(jnp.isfinite(out)))
    print("KERNEL_OK")
</pallas_src>

<mosaic_0001>
module attributes {stable_mosaic.version = 11 : i64} {
  func.func @_attn_kernel(%arg0: i32, %arg1: memref<1x64x128xbf16, #tpu.memory_space<vmem>>, %arg2: memref<128x384xbf16, #tpu.memory_space<vmem>>, %arg3: memref<1x384xf32, #tpu.memory_space<vmem>>, %arg4: memref<128x128xbf16, #tpu.memory_space<vmem>>, %arg5: memref<1x128xf32, #tpu.memory_space<vmem>>, %arg6: memref<1x64x128xf32, #tpu.memory_space<vmem>>) attributes {dimension_semantics = [#tpu.dimension_semantics<parallel>], iteration_bounds = array<i64: 2>, scalar_prefetch = 0 : i64, scratch_operands = 0 : i64, tpu.core_type = #tpu.core_type<tc>, window_params = [{transform_indices = @transform_0, window_bounds = array<i64: 1, 64, 128>}, {pipeline_mode = #tpu.pipeline_mode<synchronous>, transform_indices = @transform_1, window_bounds = array<i64: 128, 384>}, {pipeline_mode = #tpu.pipeline_mode<synchronous>, transform_indices = @transform_2, window_bounds = array<i64: 1, 384>}, {pipeline_mode = #tpu.pipeline_mode<synchronous>, transform_indices = @transform_3, window_bounds = array<i64: 128, 128>}, {pipeline_mode = #tpu.pipeline_mode<synchronous>, transform_indices = @transform_4, window_bounds = array<i64: 1, 128>}, {transform_indices = @transform_5, window_bounds = array<i64: 1, 64, 128>}]} {
    %c0 = arith.constant 0 : index
    %c0_0 = arith.constant 0 : index
    %c0_1 = arith.constant 0 : index
    %0 = vector.load %arg1[%c0, %c0_0, %c0_1] : memref<1x64x128xbf16, #tpu.memory_space<vmem>>, vector<1x64x128xbf16>
    %1 = vector.shape_cast %0 : vector<1x64x128xbf16> to vector<64x128xbf16>
    %2 = arith.extf %1 : vector<64x128xbf16> to vector<64x128xf32>
    %c0_2 = arith.constant 0 : index
    %c0_3 = arith.constant 0 : index
    %3 = vector.load %arg2[%c0_2, %c0_3] : memref<128x384xbf16, #tpu.memory_space<vmem>>, vector<128x384xbf16>
    %cst = arith.constant dense<0.000000e+00> : vector<64x384xf32>
    %4 = tpu.matmul %1, %3, %cst {dimension_numbers = #tpu.dot_dimension_numbers<[1], [0], [0], [1], [0, 0, 1, 1], [], []>} : vector<64x128xbf16>, vector<128x384xbf16>, vector<64x384xf32> -> vector<64x384xf32>
    %c0_4 = arith.constant 0 : index
    %c0_5 = arith.constant 0 : index
    %5 = vector.load %arg3[%c0_4, %c0_5] : memref<1x384xf32, #tpu.memory_space<vmem>>, vector<1x384xf32>
    %6 = vector.broadcast %5 : vector<1x384xf32> to vector<64x384xf32>
    %7 = arith.addf %4, %6 : vector<64x384xf32>
    %8 = vector.extract_strided_slice %7 {offsets = [0, 0], sizes = [64, 128], strides = [1, 1]} : vector<64x384xf32> to vector<64x128xf32>
    %cst_6 = arith.constant 0.0883883461 : f32
    %9 = vector.broadcast %cst_6 : f32 to vector<64x128xf32>
    %10 = arith.mulf %8, %9 : vector<64x128xf32>
    %11 = arith.truncf %10 : vector<64x128xf32> to vector<64x128xbf16>
    %12 = vector.extract_strided_slice %7 {offsets = [0, 128], sizes = [64, 128], strides = [1, 1]} : vector<64x384xf32> to vector<64x128xf32>
    %13 = arith.truncf %12 : vector<64x128xf32> to vector<64x128xbf16>
    %14 = vector.extract_strided_slice %7 {offsets = [0, 256], sizes = [64, 128], strides = [1, 1]} : vector<64x384xf32> to vector<64x128xf32>
    %15 = arith.truncf %14 : vector<64x128xf32> to vector<64x128xbf16>
    %cst_7 = arith.constant dense<0.000000e+00> : vector<64x64xf32>
    %16 = tpu.matmul %11, %13, %cst_7 {dimension_numbers = #tpu.dot_dimension_numbers<[1], [1], [0], [0], [0, 0, 1, 0], [], []>} : vector<64x128xbf16>, vector<64x128xbf16>, vector<64x64xf32> -> vector<64x64xf32>
    %cst_8 = arith.constant dense<0xFF800000> : vector<64xf32>
    %17 = vector.multi_reduction <maximumf>, %16, %cst_8 [1] : vector<64x64xf32> to vector<64xf32>
    %18 = vector.shape_cast %17 : vector<64xf32> to vector<64x1xf32>
    %19 = vector.broadcast %18 : vector<64x1xf32> to vector<64x64xf32>
    %20 = arith.subf %16, %19 : vector<64x64xf32>
    %21 = math.exp %20 : vector<64x64xf32>
    %cst_9 = arith.constant dense<0.000000e+00> : vector<64xf32>
    %22 = vector.multi_reduction <add>, %21, %cst_9 [1] : vector<64x64xf32> to vector<64xf32>
    %23 = vector.shape_cast %22 : vector<64xf32> to vector<64x1xf32>
    %24 = tpu.reciprocal %23 {approx = true} : vector<64x1xf32> -> vector<64x1xf32>
    %25 = vector.broadcast %24 : vector<64x1xf32> to vector<64x64xf32>
    %26 = arith.mulf %21, %25 : vector<64x64xf32>
    %27 = arith.truncf %26 : vector<64x64xf32> to vector<64x64xbf16>
    %cst_10 = arith.constant dense<0.000000e+00> : vector<64x128xf32>
    %28 = tpu.matmul %27, %15, %cst_10 {dimension_numbers = #tpu.dot_dimension_numbers<[1], [0], [0], [1], [0, 0, 1, 1], [], []>} : vector<64x64xbf16>, vector<64x128xbf16>, vector<64x128xf32> -> vector<64x128xf32>
    %29 = arith.truncf %28 : vector<64x128xf32> to vector<64x128xbf16>
    %c0_11 = arith.constant 0 : index
    %c0_12 = arith.constant 0 : index
    %30 = vector.load %arg4[%c0_11, %c0_12] : memref<128x128xbf16, #tpu.memory_space<vmem>>, vector<128x128xbf16>
    %cst_13 = arith.constant dense<0.000000e+00> : vector<64x128xf32>
    %31 = tpu.matmul %29, %30, %cst_13 {dimension_numbers = #tpu.dot_dimension_numbers<[1], [0], [0], [1], [0, 0, 1, 1], [], []>} : vector<64x128xbf16>, vector<128x128xbf16>, vector<64x128xf32> -> vector<64x128xf32>
    %c0_14 = arith.constant 0 : index
    %c0_15 = arith.constant 0 : index
    %32 = vector.load %arg5[%c0_14, %c0_15] : memref<1x128xf32, #tpu.memory_space<vmem>>, vector<1x128xf32>
    %33 = vector.broadcast %32 : vector<1x128xf32> to vector<64x128xf32>
    %34 = arith.addf %31, %33 : vector<64x128xf32>
    %35 = arith.addf %34, %2 : vector<64x128xf32>
    %c0_16 = arith.constant 0 : index
    %c0_17 = arith.constant 0 : index
    %c0_18 = arith.constant 0 : index
    %36 = vector.load %arg6[%c0_16, %c0_17, %c0_18] : memref<1x64x128xf32, #tpu.memory_space<vmem>>, vector<1x64x128xf32>
    %37 = vector.shape_cast %36 : vector<1x64x128xf32> to vector<64x128xf32>
    %38 = vector.shape_cast %35 : vector<64x128xf32> to vector<1x64x128xf32>
    tpu.vector_store %arg6[%c0_16, %c0_17, %c0_18], %38 {strides = array<i32>} : memref<1x64x128xf32, #tpu.memory_space<vmem>>, vector<1x64x128xf32>,
    return
  }
  func.func @transform_0(%arg0: i32) -> (i32, i32, i32) {
    %c0_i32 = arith.constant 0 : i32
    %c0_i32_0 = arith.constant 0 : i32
    %c0_i32_1 = arith.constant 0 : i32
    return %arg0, %c0_i32, %c0_i32_0 : i32, i32, i32
  }
  func.func @transform_1(%arg0: i32) -> (i32, i32) {
    %c0_i32 = arith.constant 0 : i32
    %c0_i32_0 = arith.constant 0 : i32
    %c0_i32_1 = arith.constant 0 : i32
    return %c0_i32, %c0_i32_0 : i32, i32
  }
  func.func @transform_2(%arg0: i32) -> (i32, i32) {
    %c0_i32 = arith.constant 0 : i32
    %c0_i32_0 = arith.constant 0 : i32
    %c0_i32_1 = arith.constant 0 : i32
    return %c0_i32, %c0_i32_0 : i32, i32
  }
  func.func @transform_3(%arg0: i32) -> (i32, i32) {
    %c0_i32 = arith.constant 0 : i32
    %c0_i32_0 = arith.constant 0 : i32
    %c0_i32_1 = arith.constant 0 : i32
    return %c0_i32, %c0_i32_0 : i32, i32
  }
  func.func @transform_4(%arg0: i32) -> (i32, i32) {
    %c0_i32 = arith.constant 0 : i32
    %c0_i32_0 = arith.constant 0 : i32
    %c0_i32_1 = arith.constant 0 : i32
    return %c0_i32, %c0_i32_0 : i32, i32
  }
  func.func @transform_5(%arg0: i32) -> (i32, i32, i32) {
    %c0_i32 = arith.constant 0 : i32
    %c0_i32_0 = arith.constant 0 : i32
    %c0_i32_1 = arith.constant 0 : i32
    return %arg0, %c0_i32, %c0_i32_0 : i32, i32, i32
  }
}

module attributes {stable_mosaic.version = 11 : i64} {
  func.func @_resblock_kernel(%arg0: i32, %arg1: memref<1x115x192xbf16, #tpu.memory_space<vmem>>, %arg2: memref<1x1x128xf32, #tpu.memory_space<vmem>>, %arg3: memref<115x1xf32, #tpu.memory_space<vmem>>, %arg4: memref<1x192xf32, #tpu.memory_space<vmem>>, %arg5: memref<1x192xf32, #tpu.memory_space<vmem>>, %arg6: memref<192x192xf32, #tpu.memory_space<vmem>>, %arg7: memref<3x192x384xbf16, #tpu.memory_space<vmem>>, %arg8: memref<1x128xf32, #tpu.memory_space<vmem>>, %arg9: memref<1x128xf32, #tpu.memory_space<vmem>>, %arg10: memref<1x128xf32, #tpu.memory_space<vmem>>, %arg11: memref<128x128xf32, #tpu.memory_space<vmem>>, %arg12: memref<3x128x384xbf16, #tpu.memory_space<vmem>>, %arg13: memref<1x128xf32, #tpu.memory_space<vmem>>, %arg14: memref<192x128xbf16, #tpu.memory_space<vmem>>, %arg15: memref<1x128xf32, #tpu.memory_space<vmem>>, %arg16: memref<1x64x128xbf16, #tpu.memory_space<vmem>>, %arg17: memref<115x128xf32, #tpu.memory_space<vmem>>) attributes {dimension_semantics = [#tpu.dimension_semantics<parallel>], iteration_bounds = array<i64: 2>, scalar_prefetch = 0 : i64, scratch_operands = 1 : i64, tpu.core_type = #tpu.core_type<tc>, window_params = [{transform_indices = @transform_0, window_bounds = array<i64: 1, 115, 192>}, {transform_indices = @transform_1, window_bounds = array<i64: 1, 1, 128>}, {pipeline_mode = #tpu.pipeline_mode<synchronous>, transform_indices = @transform_2, window_bounds = array<i64: 115, 1>}, {pipeline_mode = #tpu.pipeline_mode<synchronous>, transform_indices = @transform_3, window_bounds = array<i64: 1, 192>}, {pipeline_mode = #tpu.pipeline_mode<synchronous>, transform_indices = @transform_4, window_bounds = array<i64: 1, 192>}, {pipeline_mode = #tpu.pipeline_mode<synchronous>, transform_indices = @transform_5, window_bounds = array<i64: 192, 192>}, {pipeline_mode = #tpu.pipeline_mode<synchronous>, transform_indices = @transform_6, window_bounds = array<i64: 3, 192, 384>}, {pipeline_mode = #tpu.pipeline_mode<synchronous>, transform_indices = @transform_7, window_bounds = array<i64: 1, 128>}, {pipeline_mode = #tpu.pipeline_mode<synchronous>, transform_indices = @transform_8, window_bounds = array<i64: 1, 128>}, {pipeline_mode = #tpu.pipeline_mode<synchronous>, transform_indices = @transform_9, window_bounds = array<i64: 1, 128>}, {pipeline_mode = #tpu.pipeline_mode<synchronous>, transform_indices = @transform_10, window_bounds = array<i64: 128, 128>}, {pipeline_mode = #tpu.pipeline_mode<synchronous>, transform_indices = @transform_11, window_bounds = array<i64: 3, 128, 384>}, {pipeline_mode = #tpu.pipeline_mode<synchronous>, transform_indices = @transform_12, window_bounds = array<i64: 1, 128>}, {pipeline_mode = #tpu.pipeline_mode<synchronous>, transform_indices = @transform_13, window_bounds = array<i64: 192, 128>}, {pipeline_mode = #tpu.pipeline_mode<synchronous>, transform_indices = @transform_14, window_bounds = array<i64: 1, 128>}, {transform_indices = @transform_15, window_bounds = array<i64: 1, 64, 128>}]} {
    %c0 = arith.constant 0 : index
    %c0_0 = arith.constant 0 : index
    %0 = vector.load %arg3[%c0, %c0_0] : memref<115x1xf32, #tpu.memory_space<vmem>>, vector<115x1xf32>
    %1 = vector.extract_strided_slice %0 {offsets = [16, 0], sizes = [80, 1], strides = [1, 1]} : vector<115x1xf32> to vector<80x1xf32>
    %c0_1 = arith.constant 0 : index
    %c0_2 = arith.constant 0 : index
    %c0_3 = arith.constant 0 : index
    %2 = vector.load %arg1[%c0_1, %c0_2, %c0_3] : memref<1x115x192xbf16, #tpu.memory_space<vmem>>, vector<1x115x192xbf16>
    %3 = vector.shape_cast %2 : vector<1x115x192xbf16> to vector<115x192xbf16>
    %4 = arith.extf %3 : vector<115x192xbf16> to vector<115x192xf32>
    %c0_4 = arith.constant 0 : index
    %c0_5 = arith.constant 0 : index
    %5 = vector.load %arg4[%c0_4, %c0_5] : memref<1x192xf32, #tpu.memory_space<vmem>>, vector<1x192xf32>
    %c0_6 = arith.constant 0 : index
    %c0_7 = arith.constant 0 : index
    %6 = vector.load %arg5[%c0_6, %c0_7] : memref<1x192xf32, #tpu.memory_space<vmem>>, vector<1x192xf32>
    %c0_8 = arith.constant 0 : index
    %c0_9 = arith.constant 0 : index
    %7 = vector.load %arg6[%c0_8, %c0_9] : memref<192x192xf32, #tpu.memory_space<vmem>>, vector<192x192xf32>
    %cst = arith.constant dense<0.000000e+00> : vector<192xf32>
    %8 = vector.multi_reduction <add>, %4, %cst [0] : vector<115x192xf32> to vector<192xf32>
    %9 = vector.shape_cast %8 : vector<192xf32> to vector<1x192xf32>
    %10 = arith.mulf %4, %4 : vector<115x192xf32>
    %cst_10 = arith.constant dense<0.000000e+00> : vector<192xf32>
    %11 = vector.multi_reduction <add>, %10, %cst_10 [0] : vector<115x192xf32> to vector<192xf32>
    %12 = vector.shape_cast %11 : vector<192xf32> to vector<1x192xf32>
    %cst_11 = arith.constant dense<0.000000e+00> : vector<1x192xf32>
    %13 = tpu.matmul %9, %7, %cst_11 {dimension_numbers = #tpu.dot_dimension_numbers<[1], [0], [0], [1], [0, 0, 1, 1], [], []>} : vector<1x192xf32>, vector<192x192xf32>, vector<1x192xf32> -> vector<1x192xf32>
    %cst_12 = arith.constant dense<0.000000e+00> : vector<1x192xf32>
    %14 = tpu.matmul %12, %7, %cst_12 {dimension_numbers = #tpu.dot_dimension_numbers<[1], [0], [0], [1], [0, 0, 1, 1], [], []>} : vector<1x192xf32>, vector<192x192xf32>, vector<1x192xf32> -> vector<1x192xf32>
    %cst_13 = arith.constant 0.00260416674 : f32
    %15 = vector.broadcast %cst_13 : f32 to vector<1x192xf32>
    %16 = arith.mulf %13, %15 : vector<1x192xf32>
    %cst_14 = arith.constant 0.00260416674 : f32
    %17 = vector.broadcast %cst_14 : f32 to vector<1x192xf32>
    %18 = arith.mulf %14, %17 : vector<1x192xf32>
    %19 = arith.mulf %16, %16 : vector<1x192xf32>
    %20 = arith.subf %18, %19 : vector<1x192xf32>
    %cst_15 = arith.constant 9.99999974E-6 : f32
    %21 = vector.broadcast %cst_15 : f32 to vector<1x192xf32>
    %22 = arith.addf %20, %21 : vector<1x192xf32>
    %23 = math.rsqrt %22 : vector<1x192xf32>
    %24 = arith.mulf %5, %23 : vector<1x192xf32>
    %25 = arith.mulf %16, %24 : vector<1x192xf32>
    %26 = arith.subf %6, %25 : vector<1x192xf32>
    %27 = vector.broadcast %24 : vector<1x192xf32> to vector<115x192xf32>
    %28 = arith.mulf %4, %27 : vector<115x192xf32>
    %29 = vector.broadcast %26 : vector<1x192xf32> to vector<115x192xf32>
    %30 = arith.addf %28, %29 : vector<115x192xf32>
    %31 = arith.negf %30 : vector<115x192xf32>
    %32 = math.exp %31 : vector<115x192xf32>
    %cst_16 = arith.constant 1.000000e+00 : f32
    %33 = vector.broadcast %cst_16 : f32 to vector<115x192xf32>
    %34 = arith.addf %33, %32 : vector<115x192xf32>
    %35 = arith.divf %33, %34 : vector<115x192xf32>
    %36 = arith.mulf %30, %35 : vector<115x192xf32>
    %37 = vector.broadcast %0 : vector<115x1xf32> to vector<115x192xf32>
    %38 = arith.mulf %36, %37 : vector<115x192xf32>
    %39 = arith.truncf %38 : vector<115x192xf32> to vector<115x192xbf16>
    %cst_17 = arith.constant 0.000000e+00 : f32
    %40 = vector.broadcast %cst_17 : f32 to vector<80x128xf32>
    %41 = vector.extract_strided_slice %39 {offsets = [5, 0], sizes = [82, 192], strides = [1, 1]} : vector<115x192xbf16> to vector<82x192xbf16>
    %c0_18 = arith.constant 0 : index
    %c0_19 = arith.constant 0 : index
    %c0_20 = arith.constant 0 : index
    %42 = vector.load %arg7[%c0_18, %c0_19, %c0_20] : memref<3x192x384xbf16, #tpu.memory_space<vmem>>, vector<1x192x384xbf16>
    %43 = vector.shape_cast %42 : vector<1x192x384xbf16> to vector<192x384xbf16>
    %cst_21 = arith.constant dense<0.000000e+00> : vector<82x384xf32>
    %44 = tpu.matmul %41, %43, %cst_21 {dimension_numbers = #tpu.dot_dimension_numbers<[1], [0], [0], [1], [0, 0, 1, 1], [], []>} : vector<82x192xbf16>, vector<192x384xbf16>, vector<82x384xf32> -> vector<82x384xf32>
    %45 = vector.extract_strided_slice %44 {offsets = [0, 0], sizes = [80, 128], strides = [1, 1]} : vector<82x384xf32> to vector<80x128xf32>
    %46 = arith.addf %40, %45 : vector<80x128xf32>
    %47 = vector.extract_strided_slice %44 {offsets = [1, 128], sizes = [80, 128], strides = [1, 1]} : vector<82x384xf32> to vector<80x128xf32>
    %48 = arith.addf %46, %47 : vector<80x128xf32>
    %49 = vector.extract_strided_slice %44 {offsets = [2, 256], sizes = [80, 128], strides = [1, 1]} : vector<82x384xf32> to vector<80x128xf32>
    %50 = arith.addf %48, %49 : vector<80x128xf32>
    %51 = vector.extract_strided_slice %39 {offsets = [15, 0], sizes = [82, 192], strides = [1, 1]} : vector<115x192xbf16> to vector<82x192xbf16>
    %c1 = arith.constant 1 : index
    %c0_22 = arith.constant 0 : index
    %c0_23 = arith.constant 0 : index
    %52 = vector.load %arg7[%c1, %c0_22, %c0_23] : memref<3x192x384xbf16, #tpu.memory_space<vmem>>, vector<1x192x384xbf16>
    %53 = vector.shape_cast %52 : vector<1x192x384xbf16> to vector<192x384xbf16>
    %cst_24 = arith.constant dense<0.000000e+00> : vector<82x384xf32>
    %54 = tpu.matmul %51, %53, %cst_24 {dimension_numbers = #tpu.dot_dimension_numbers<[1], [0], [0], [1], [0, 0, 1, 1], [], []>} : vector<82x192xbf16>, vector<192x384xbf16>, vector<82x384xf32> -> vector<82x384xf32>
    %55 = vector.extract_strided_slice %54 {offsets = [0, 0], sizes = [80, 128], strides = [1, 1]} : vector<82x384xf32> to vector<80x128xf32>
    %56 = arith.addf %50, %55 : vector<80x128xf32>
    %57 = vector.extract_strided_slice %54 {offsets = [1, 128], sizes = [80, 128], strides = [1, 1]} : vector<82x384xf32> to vector<80x128xf32>
    %58 = arith.addf %56, %57 : vector<80x128xf32>
    %59 = vector.extract_strided_slice %54 {offsets = [2, 256], sizes = [80, 128], strides = [1, 1]} : vector<82x384xf32> to vector<80x128xf32>
    %60 = arith.addf %58, %59 : vector<80x128xf32>
    %61 = vector.extract_strided_slice %39 {offsets = [25, 0], sizes = [82, 192], strides = [1, 1]} : vector<115x192xbf16> to vector<82x192xbf16>
    %c2 = arith.constant 2 : index
    %c0_25 = arith.constant 0 : index
    %c0_26 = arith.constant 0 : index
    %62 = vector.load %arg7[%c2, %c0_25, %c0_26] : memref<3x192x384xbf16, #tpu.memory_space<vmem>>, vector<1x192x384xbf16>
    %63 = vector.shape_cast %62 : vector<1x192x384xbf16> to vector<192x384xbf16>
    %cst_27 = arith.constant dense<0.000000e+00> : vector<82x384xf32>
    %64 = tpu.matmul %61, %63, %cst_27 {dimension_numbers = #tpu.dot_dimension_numbers<[1], [0], [0], [1], [0, 0, 1, 1], [], []>} : vector<82x192xbf16>, vector<192x384xbf16>, vector<82x384xf32> -> vector<82x384xf32>
    %65 = vector.extract_strided_slice %64 {offsets = [0, 0], sizes = [80, 128], strides = [1, 1]} : vector<82x384xf32> to vector<80x128xf32>
    %66 = arith.addf %60, %65 : vector<80x128xf32>
    %67 = vector.extract_strided_slice %64 {offsets = [1, 128], sizes = [80, 128], strides = [1, 1]} : vector<82x384xf32> to vector<80x128xf32>
    %68 = arith.addf %66, %67 : vector<80x128xf32>
    %69 = vector.extract_strided_slice %64 {offsets = [2, 256], sizes = [80, 128], strides = [1, 1]} : vector<82x384xf32> to vector<80x128xf32>
    %70 = arith.addf %68, %69 : vector<80x128xf32>
    %c0_28 = arith.constant 0 : index
    %c0_29 = arith.constant 0 : index
    %71 = vector.load %arg8[%c0_28, %c0_29] : memref<1x128xf32, #tpu.memory_space<vmem>>, vector<1x128xf32>
    %72 = vector.broadcast %71 : vector<1x128xf32> to vector<80x128xf32>
    %73 = arith.addf %70, %72 : vector<80x128xf32>
    %c0_30 = arith.constant 0 : index
    %c0_31 = arith.constant 0 : index
    %c0_32 = arith.constant 0 : index
    %74 = vector.load %arg2[%c0_30, %c0_31, %c0_32] : memref<1x1x128xf32, #tpu.memory_space<vmem>>, vector<1x1x128xf32>
    %75 = vector.shape_cast %74 : vector<1x1x128xf32> to vector<1x128xf32>
    %76 = vector.broadcast %75 : vector<1x128xf32> to vector<80x128xf32>
    %77 = arith.addf %73, %76 : vector<80x128xf32>
    %78 = vector.broadcast %1 : vector<80x1xf32> to vector<80x128xf32>
    %79 = arith.mulf %77, %78 : vector<80x128xf32>
    %cst_33 = arith.constant 0.000000e+00 : f32
    %80 = vector.broadcast %cst_33 : f32 to vector<16x128xf32>
    %c0_34 = arith.constant 0 : index
    %c0_35 = arith.constant 0 : index
    %81 = vector.load %arg17[%c0_34, %c0_35] : memref<115x128xf32, #tpu.memory_space<vmem>>, vector<16x128xf32>
    tpu.vector_store %arg17[%c0_34, %c0_35], %80 {strides = array<i32>} : memref<115x128xf32, #tpu.memory_space<vmem>>, vector<16x128xf32>,
    %cst_36 = arith.constant 0.000000e+00 : f32
    %82 = vector.broadcast %cst_36 : f32 to vector<19x128xf32>
    %c96 = arith.constant 96 : index
    %c0_37 = arith.constant 0 : index
    %83 = vector.load %arg17[%c96, %c0_37] : memref<115x128xf32, #tpu.memory_space<vmem>>, vector<19x128xf32>
    tpu.vector_store %arg17[%c96, %c0_37], %82 {strides = array<i32>} : memref<115x128xf32, #tpu.memory_space<vmem>>, vector<19x128xf32>,
    %c16 = arith.constant 16 : index
    %c0_38 = arith.constant 0 : index
    %84 = vector.load %arg17[%c16, %c0_38] : memref<115x128xf32, #tpu.memory_space<vmem>>, vector<80x128xf32>
    tpu.vector_store %arg17[%c16, %c0_38], %79 {strides = array<i32>} : memref<115x128xf32, #tpu.memory_space<vmem>>, vector<80x128xf32>,
    %c0_39 = arith.constant 0 : index
    %c0_40 = arith.constant 0 : index
    %85 = vector.load %arg17[%c0_39, %c0_40] : memref<115x128xf32, #tpu.memory_space<vmem>>, vector<115x128xf32>
    %c0_41 = arith.constant 0 : index
    %c0_42 = arith.constant 0 : index
    %86 = vector.load %arg9[%c0_41, %c0_42] : memref<1x128xf32, #tpu.memory_space<vmem>>, vector<1x128xf32>
    %c0_43 = arith.constant 0 : index
    %c0_44 = arith.constant 0 : index
    %87 = vector.load %arg10[%c0_43, %c0_44] : memref<1x128xf32, #tpu.memory_space<vmem>>, vector<1x128xf32>
    %c0_45 = arith.constant 0 : index
    %c0_46 = arith.constant 0 : index
    %88 = vector.load %arg11[%c0_45, %c0_46] : memref<128x128xf32, #tpu.memory_space<vmem>>, vector<128x128xf32>
    %cst_47 = arith.constant dense<0.000000e+00> : vector<128xf32>
    %89 = vector.multi_reduction <add>, %85, %cst_47 [0] : vector<115x128xf32> to vector<128xf32>
    %90 = vector.shape_cast %89 : vector<128xf32> to vector<1x128xf32>
    %91 = arith.mulf %85, %85 : vector<115x128xf32>
    %cst_48 = arith.constant dense<0.000000e+00> : vector<128xf32>
    %92 = vector.multi_reduction <add>, %91, %cst_48 [0] : vector<115x128xf32> to vector<128xf32>
    %93 = vector.shape_cast %92 : vector<128xf32> to vector<1x128xf32>
    %cst_49 = arith.constant dense<0.000000e+00> : vector<1x128xf32>
    %94 = tpu.matmul %90, %88, %cst_49 {dimension_numbers = #tpu.dot_dimension_numbers<[1], [0], [0], [1], [0, 0, 1, 1], [], []>} : vector<1x128xf32>, vector<128x128xf32>, vector<1x128xf32> -> vector<1x128xf32>
    %cst_50 = arith.constant dense<0.000000e+00> : vector<1x128xf32>
    %95 = tpu.matmul %93, %88, %cst_50 {dimension_numbers = #tpu.dot_dimension_numbers<[1], [0], [0], [1], [0, 0, 1, 1], [], []>} : vector<1x128xf32>, vector<128x128xf32>, vector<1x128xf32> -> vector<1x128xf32>
    %cst_51 = arith.constant 3.906250e-03 : f32
    %96 = vector.broadcast %cst_51 : f32 to vector<1x128xf32>
    %97 = arith.mulf %94, %96 : vector<1x128xf32>
    %cst_52 = arith.constant 3.906250e-03 : f32
    %98 = vector.broadcast %cst_52 : f32 to vector<1x128xf32>
    %99 = arith.mulf %95, %98 : vector<1x128xf32>
    %100 = arith.mulf %97, %97 : vector<1x128xf32>
    %101 = arith.subf %99, %100 : vector<1x128xf32>
    %cst_53 = arith.constant 9.99999974E-6 : f32
    %102 = vector.broadcast %cst_53 : f32 to vector<1x128xf32>
    %103 = arith.addf %101, %102 : vector<1x128xf32>
    %104 = math.rsqrt %103 : vector<1x128xf32>
    %105 = arith.mulf %86, %104 : vector<1x128xf32>
    %106 = arith.mulf %97, %105 : vector<1x128xf32>
    %107 = arith.subf %87, %106 : vector<1x128xf32>
    %108 = vector.broadcast %105 : vector<1x128xf32> to vector<115x128xf32>
    %109 = arith.mulf %85, %108 : vector<115x128xf32>
    %110 = vector.broadcast %107 : vector<1x128xf32> to vector<115x128xf32>
    %111 = arith.addf %109, %110 : vector<115x128xf32>
    %112 = arith.negf %111 : vector<115x128xf32>
    %113 = math.exp %112 : vector<115x128xf32>
    %cst_54 = arith.constant 1.000000e+00 : f32
    %114 = vector.broadcast %cst_54 : f32 to vector<115x128xf32>
    %115 = arith.addf %114, %113 : vector<115x128xf32>
    %116 = arith.divf %114, %115 : vector<115x128xf32>
    %117 = arith.mulf %111, %116 : vector<115x128xf32>
    %118 = vector.broadcast %0 : vector<115x1xf32> to vector<115x128xf32>
    %119 = arith.mulf %117, %118 : vector<115x128xf32>
    %120 = arith.truncf %119 : vector<115x128xf32> to vector<115x128xbf16>
    %cst_55 = arith.constant 0.000000e+00 : f32
    %121 = vector.broadcast %cst_55 : f32 to vector<80x128xf32>
    %122 = vector.extract_strided_slice %120 {offsets = [5, 0], sizes = [82, 128], strides = [1, 1]} : vector<115x128xbf16> to vector<82x128xbf16>
    %c0_56 = arith.constant 0 : index
    %c0_57 = arith.constant 0 : index
    %c0_58 = arith.constant 0 : index
    %123 = vector.load %arg12[%c0_56, %c0_57, %c0_58] : memref<3x128x384xbf16, #tpu.memory_space<vmem>>, vector<1x128x384xbf16>
    %124 = vector.shape_cast %123 : vector<1x128x384xbf16> to vector<128x384xbf16>
    %cst_59 = arith.constant dense<0.000000e+00> : vector<82x384xf32>
    %125 = tpu.matmul %122, %124, %cst_59 {dimension_numbers = #tpu.dot_dimension_numbers<[1], [0], [0], [1], [0, 0, 1, 1], [], []>} : vector<82x128xbf16>, vector<128x384xbf16>, vector<82x384xf32> -> vector<82x384xf32>
    %126 = vector.extract_strided_slice %125 {offsets = [0, 0], sizes = [80, 128], strides = [1, 1]} : vector<82x384xf32> to vector<80x128xf32>
    %127 = arith.addf %121, %126 : vector<80x128xf32>
    %128 = vector.extract_strided_slice %125 {offsets = [1, 128], sizes = [80, 128], strides = [1, 1]} : vector<82x384xf32> to vector<80x128xf32>
    %129 = arith.addf %127, %128 : vector<80x128xf32>
    %130 = vector.extract_strided_slice %125 {offsets = [2, 256], sizes = [80, 128], strides = [1, 1]} : vector<82x384xf32> to vector<80x128xf32>
    %131 = arith.addf %129, %130 : vector<80x128xf32>
    %132 = vector.extract_strided_slice %120 {offsets = [15, 0], sizes = [82, 128], strides = [1, 1]} : vector<115x128xbf16> to vector<82x128xbf16>
    %c1_60 = arith.constant 1 : index
    %c0_61 = arith.constant 0 : index
    %c0_62 = arith.constant 0 : index
    %133 = vector.load %arg12[%c1_60, %c0_61, %c0_62] : memref<3x128x384xbf16, #tpu.memory_space<vmem>>, vector<1x128x384xbf16>
    %134 = vector.shape_cast %133 : vector<1x128x384xbf16> to vector<128x384xbf16>
    %cst_63 = arith.constant dense<0.000000e+00> : vector<82x384xf32>
    %135 = tpu.matmul %132, %134, %cst_63 {dimension_numbers = #tpu.dot_dimension_numbers<[1], [0], [0], [1], [0, 0, 1, 1], [], []>} : vector<82x128xbf16>, vector<128x384xbf16>, vector<82x384xf32> -> vector<82x384xf32>
    %136 = vector.extract_strided_slice %135 {offsets = [0, 0], sizes = [80, 128], strides = [1, 1]} : vector<82x384xf32> to vector<80x128xf32>
    %137 = arith.addf %131, %136 : vector<80x128xf32>
    %138 = vector.extract_strided_slice %135 {offsets = [1, 128], sizes = [80, 128], strides = [1, 1]} : vector<82x384xf32> to vector<80x128xf32>
    %139 = arith.addf %137, %138 : vector<80x128xf32>
    %140 = vector.extract_strided_slice %135 {offsets = [2, 256], sizes = [80, 128], strides = [1, 1]} : vector<82x384xf32> to vector<80x128xf32>
    %141 = arith.addf %139, %140 : vector<80x128xf32>
    %142 = vector.extract_strided_slice %120 {offsets = [25, 0], sizes = [82, 128], strides = [1, 1]} : vector<115x128xbf16> to vector<82x128xbf16>
    %c2_64 = arith.constant 2 : index
    %c0_65 = arith.constant 0 : index
    %c0_66 = arith.constant 0 : index
    %143 = vector.load %arg12[%c2_64, %c0_65, %c0_66] : memref<3x128x384xbf16, #tpu.memory_space<vmem>>, vector<1x128x384xbf16>
    %144 = vector.shape_cast %143 : vector<1x128x384xbf16> to vector<128x384xbf16>
    %cst_67 = arith.constant dense<0.000000e+00> : vector<82x384xf32>
    %145 = tpu.matmul %142, %144, %cst_67 {dimension_numbers = #tpu.dot_dimension_numbers<[1], [0], [0], [1], [0, 0, 1, 1], [], []>} : vector<82x128xbf16>, vector<128x384xbf16>, vector<82x384xf32> -> vector<82x384xf32>
    %146 = vector.extract_strided_slice %145 {offsets = [0, 0], sizes = [80, 128], strides = [1, 1]} : vector<82x384xf32> to vector<80x128xf32>
    %147 = arith.addf %141, %146 : vector<80x128xf32>
    %148 = vector.extract_strided_slice %145 {offsets = [1, 128], sizes = [80, 128], strides = [1, 1]} : vector<82x384xf32> to vector<80x128xf32>
    %149 = arith.addf %147, %148 : vector<80x128xf32>
    %150 = vector.extract_strided_slice %145 {offsets = [2, 256], sizes = [80, 128], strides = [1, 1]} : vector<82x384xf32> to vector<80x128xf32>
    %151 = arith.addf %149, %150 : vector<80x128xf32>
    %c0_68 = arith.constant 0 : index
    %c0_69 = arith.constant 0 : index
    %c0_70 = arith.constant 0 : index
    %152 = vector.load %arg1[%c0_68, %c0_69, %c0_70] : memref<1x115x192xbf16, #tpu.memory_space<vmem>>, vector<1x115x192xbf16>
    %153 = vector.shape_cast %152 : vector<1x115x192xbf16> to vector<115x192xbf16>
    %154 = vector.extract_strided_slice %153 {offsets = [16, 0], sizes = [80, 192], strides = [1, 1]} : vector<115x192xbf16> to vector<80x192xbf16>
    %c0_71 = arith.constant 0 : index
    %c0_72 = arith.constant 0 : index
    %155 = vector.load %arg14[%c0_71, %c0_72] : memref<192x128xbf16, #tpu.memory_space<vmem>>, vector<192x128xbf16>
    %cst_73 = arith.constant dense<0.000000e+00> : vector<80x128xf32>
    %156 = tpu.matmul %154, %155, %cst_73 {dimension_numbers = #tpu.dot_dimension_numbers<[1], [0], [0], [1], [0, 0, 1, 1], [], []>} : vector<80x192xbf16>, vector<192x128xbf16>, vector<80x128xf32> -> vector<80x128xf32>
    %c0_74 = arith.constant 0 : index
    %c0_75 = arith.constant 0 : index
    %157 = vector.load %arg15[%c0_74, %c0_75] : memref<1x128xf32, #tpu.memory_space<vmem>>, vector<1x128xf32>
    %158 = vector.broadcast %157 : vector<1x128xf32> to vector<80x128xf32>
    %159 = arith.addf %156, %158 : vector<80x128xf32>
    %c0_76 = arith.constant 0 : index
    %c0_77 = arith.constant 0 : index
    %160 = vector.load %arg13[%c0_76, %c0_77] : memref<1x128xf32, #tpu.memory_space<vmem>>, vector<1x128xf32>
    %161 = vector.broadcast %160 : vector<1x128xf32> to vector<80x128xf32>
    %162 = arith.addf %151, %161 : vector<80x128xf32>
    %163 = arith.addf %162, %159 : vector<80x128xf32>
    %164 = vector.extract_strided_slice %163 {offsets = [0, 0], sizes = [8, 128], strides = [1, 1]} : vector<80x128xf32> to vector<8x128xf32>
    %165 = vector.extract_strided_slice %163 {offsets = [10, 0], sizes = [8, 128], strides = [1, 1]} : vector<80x128xf32> to vector<8x128xf32>
    %166 = vector.extract_strided_slice %163 {offsets = [20, 0], sizes = [8, 128], strides = [1, 1]} : vector<80x128xf32> to vector<8x128xf32>
    %167 = vector.extract_strided_slice %163 {offsets = [30, 0], sizes = [8, 128], strides = [1, 1]} : vector<80x128xf32> to vector<8x128xf32>
    %168 = vector.extract_strided_slice %163 {offsets = [40, 0], sizes = [8, 128], strides = [1, 1]} : vector<80x128xf32> to vector<8x128xf32>
    %169 = vector.extract_strided_slice %163 {offsets = [50, 0], sizes = [8, 128], strides = [1, 1]} : vector<80x128xf32> to vector<8x128xf32>
    %170 = vector.extract_strided_slice %163 {offsets = [60, 0], sizes = [8, 128], strides = [1, 1]} : vector<80x128xf32> to vector<8x128xf32>
    %171 = vector.extract_strided_slice %163 {offsets = [70, 0], sizes = [8, 128], strides = [1, 1]} : vector<80x128xf32> to vector<8x128xf32>
    %172 = tpu.concatenate %164, %165, %166, %167, %168, %169, %170, %171 in 0 : vector<8x128xf32>, vector<8x128xf32>, vector<8x128xf32>, vector<8x128xf32>, vector<8x128xf32>, vector<8x128xf32>, vector<8x128xf32>, vector<8x128xf32> -> vector<64x128xf32>
    %173 = arith.truncf %172 : vector<64x128xf32> to vector<64x128xbf16>
    %c0_78 = arith.constant 0 : index
    %c0_79 = arith.constant 0 : index
    %c0_80 = arith.constant 0 : index
    %174 = vector.load %arg16[%c0_78, %c0_79, %c0_80] : memref<1x64x128xbf16, #tpu.memory_space<vmem>>, vector<1x64x128xbf16>
    %175 = vector.shape_cast %174 : vector<1x64x128xbf16> to vector<64x128xbf16>
    %176 = vector.shape_cast %173 : vector<64x128xbf16> to vector<1x64x128xbf16>
    tpu.vector_store %arg16[%c0_78, %c0_79, %c0_80], %176 {strides = array<i32>} : memref<1x64x128xbf16, #tpu.memory_space<vmem>>, vector<1x64x128xbf16>,
    return
  }
  func.func @transform_0(%arg0: i32) -> (i32, i32, i32) {
    %c0_i32 = arith.constant 0 : i32
    %c0_i32_0 = arith.constant 0 : i32
    %c0_i32_1 = arith.constant 0 : i32
    return %arg0, %c0_i32, %c0_i32_0 : i32, i32, i32
  }
  func.func @transform_1(%arg0: i32) -> (i32, i32, i32) {
    %c0_i32 = arith.constant 0 : i32
    %c0_i32_0 = arith.constant 0 : i32
    %c0_i32_1 = arith.constant 0 : i32
    return %arg0, %c0_i32, %c0_i32_0 : i32, i32, i32
  }
  func.func @transform_2(%arg0: i32) -> (i32, i32) {
    %c0_i32 = arith.constant 0 : i32
    %c0_i32_0 = arith.constant 0 : i32
    %c0_i32_1 = arith.constant 0 : i32
    return %c0_i32, %c0_i32_0 : i32, i32
  }
  func.func @transform_3(%arg0: i32) -> (i32, i32) {
    %c0_i32 = arith.constant 0 : i32
    %c0_i32_0 = arith.constant 0 : i32
    %c0_i32_1 = arith.constant 0 : i32
    return %c0_i32, %c0_i32_0 : i32, i32
  }
  func.func @transform_4(%arg0: i32) -> (i32, i32) {
    %c0_i32 = arith.constant 0 : i32
    %c0_i32_0 = arith.constant 0 : i32
    %c0_i32_1 = arith.constant 0 : i32
    return %c0_i32, %c0_i32_0 : i32, i32
  }
  func.func @transform_5(%arg0: i32) -> (i32, i32) {
    %c0_i32 = arith.constant 0 : i32
    %c0_i32_0 = arith.constant 0 : i32
    %c0_i32_1 = arith.constant 0 : i32
    return %c0_i32, %c0_i32_0 : i32, i32
  }
  func.func @transform_6(%arg0: i32) -> (i32, i32, i32) {
    %c0_i32 = arith.constant 0 : i32
    %c0_i32_0 = arith.constant 0 : i32
    %c0_i32_1 = arith.constant 0 : i32
    %c0_i32_2 = arith.constant 0 : i32
    return %c0_i32, %c0_i32_0, %c0_i32_1 : i32, i32, i32
  }
  func.func @transform_7(%arg0: i32) -> (i32, i32) {
    %c0_i32 = arith.constant 0 : i32
    %c0_i32_0 = arith.constant 0 : i32
    %c0_i32_1 = arith.constant 0 : i32
    return %c0_i32, %c0_i32_0 : i32, i32
  }
  func.func @transform_8(%arg0: i32) -> (i32, i32) {
    %c0_i32 = arith.constant 0 : i32
    %c0_i32_0 = arith.constant 0 : i32
    %c0_i32_1 = arith.constant 0 : i32
    return %c0_i32, %c0_i32_0 : i32, i32
  }
  func.func @transform_9(%arg0: i32) -> (i32, i32) {
    %c0_i32 = arith.constant 0 : i32
    %c0_i32_0 = arith.constant 0 : i32
    %c0_i32_1 = arith.constant 0 : i32
    return %c0_i32, %c0_i32_0 : i32, i32
  }
  func.func @transform_10(%arg0: i32) -> (i32, i32) {
    %c0_i32 = arith.constant 0 : i32
    %c0_i32_0 = arith.constant 0 : i32
    %c0_i32_1 = arith.constant 0 : i32
    return %c0_i32, %c0_i32_0 : i32, i32
  }
  func.func @transform_11(%arg0: i32) -> (i32, i32, i32) {
    %c0_i32 = arith.constant 0 : i32
    %c0_i32_0 = arith.constant 0 : i32
    %c0_i32_1 = arith.constant 0 : i32
    %c0_i32_2 = arith.constant 0 : i32
    return %c0_i32, %c0_i32_0, %c0_i32_1 : i32, i32, i32
  }
  func.func @transform_12(%arg0: i32) -> (i32, i32) {
    %c0_i32 = arith.constant 0 : i32
    %c0_i32_0 = arith.constant 0 : i32
    %c0_i32_1 = arith.constant 0 : i32
    return %c0_i32, %c0_i32_0 : i32, i32
  }
  func.func @transform_13(%arg0: i32) -> (i32, i32) {
    %c0_i32 = arith.constant 0 : i32
    %c0_i32_0 = arith.constant 0 : i32
    %c0_i32_1 = arith.constant 0 : i32
    return %c0_i32, %c0_i32_0 : i32, i32
  }
  func.func @transform_14(%arg0: i32) -> (i32, i32) {
    %c0_i32 = arith.constant 0 : i32
    %c0_i32_0 = arith.constant 0 : i32
    %c0_i32_1 = arith.constant 0 : i32
    return %c0_i32, %c0_i32_0 : i32, i32
  }
  func.func @transform_15(%arg0: i32) -> (i32, i32, i32) {
    %c0_i32 = arith.constant 0 : i32
    %c0_i32_0 = arith.constant 0 : i32
    %c0_i32_1 = arith.constant 0 : i32
    return %arg0, %c0_i32, %c0_i32_0 : i32, i32, i32
  }
}

</mosaic_0001>

<llo_original>
// kernel: up_block_forward.3
$region0: #{up_block_forward.3}
  #allocation0 [shape = 'u32[]', space=smem, size = 0x4, offset = 0x4, fixed_abs, tag = 'smem constant byte address 0x4 - core index']
  #allocation1 [shape = 'u32[144,128]{1,0:T(1,128)}', space=vmem, size = 0x12000, scoped, tag = 'internal scratch']
  %s0 = inlined_call_operand.vmem [shape: bf16[2,64,128], index: 0, kind: input, shape index: {}]
  %s1 = inlined_call_operand.vmem [shape: bf16[128,384], index: 1, kind: input, shape index: {}]
  %s2 = inlined_call_operand.vmem [shape: f32[1,384], index: 2, kind: input, shape index: {}]
  %s3 = inlined_call_operand.vmem [shape: bf16[128,128], index: 3, kind: input, shape index: {}]
  %s4 = inlined_call_operand.vmem [shape: f32[1,128], index: 4, kind: input, shape index: {}]
  %s5 = inlined_call_operand.hbm [shape: f32[2,64,128], index: 5, kind: output, shape index: {}]
  %s6 = sld [smem:[#allocation0]]
  $region53: #{up_block_forward.3} parent=0
    _
  %s8 = ssub.s32 1, %s6
  %s9 = scalar_select 0, %s8, %s6
  $region1: #{up_block_forward.3} parent=0
    #allocation2 [shape = 'u8[65536]{0}', space=vmem, size = 0x10000, scoped, tag = 'output window, operand 0']
    #allocation3 [shape = 's32[2]{0}', space=sflag, size = 0x8, scoped, tag = 'scoped memory for up_block_forward.3']
    %10 = vsyncpa [#allocation3], 0
    %s11 = scalar_lea.sflag [#allocation3], 1
    %12 = vsyncpa %s11, 0
    loop: start=0, step=1, limit=4
    $region2: #{up_block_forward.3} parent=1 // loop_pre_header
      _
    $region3: #{up_block_forward.3} parent=1 // loop_header
      %s14 = sphi 0, %s18
      %p15 = scmp.ge.s32.totalorder %s14, 4
      %s24 = sphi 0, %s26
      %s27 = sphi 0, %s24
      %s28 = sphi 0, %s27
      %s44 = sphi 0, %s28
      %s48 = sphi 0, %s48
      %s50 = sphi 0, %s48
      %s51 = sphi 0, %s50
      %s65 = sphi 0, %s51
      %s69 = sphi 0, %s69
      %s71 = sphi 0, %s69
      %s72 = sphi 0, %s71
      %s86 = sphi 0, %s72
      %s90 = sphi 0, %s90
      %s92 = sphi 0, %s90
      %s93 = sphi 0, %s92
      %s107 = sphi 0, %s93
      %s111 = sphi 0, %s111
      %s113 = sphi 0, %s111
      %s114 = sphi 0, %s113
      %s128 = sphi 0, %s114
      %s134 = sphi 0, %s136
      %s137 = sphi 0, %s134
      %s138 = sphi 0, %s137
      %s154 = sphi 0, %s138
    $region4: #{up_block_forward.3} parent=1 // loop_header_branch
      %17 = sbr.rel (%p15) target = $region8
    $region5: #{up_block_forward.3} parent=1 // loop_body
      %s19 = ssub.s32 %s14, 1
      %s20 = ssub.s32 %s14, 2
      %s21 = sadd.s32 %s14, 1
      %s22 = ssub.s32 %s14, %s21
      %p23 = scmp.eq.s32.totalorder %s22, 0
      %s25 = sadd.s32 %s24, 1
      %s26 = scalar_select %p23, %s24, %s25
      %p29 = pneg %p23
      %p30 = scmp.eq.s32.totalorder %s14, 1
      %p31 = por %p29, %p30
      %p32 = scmp.ne.s32.totalorder %s24, %s27
      %p33 = scmp.eq.s32.totalorder %s14, 0
      %p34 = por %p32, %p33
      %p35 = scmp.ne.s32.totalorder %s24, %s27
      %p36 = scmp.eq.s32.totalorder %s19, 1
      %p37 = por %p35, %p36
      %p38 = scmp.ne.s32.totalorder %s27, %s28
      %p39 = scmp.eq.s32.totalorder %s19, 0
      %p40 = por %p38, %p39
      %p41 = scmp.ne.s32.totalorder %s27, %s28
      %p42 = scmp.eq.s32.totalorder %s20, 1
      %p43 = por %p41, %p42
      %p45 = scmp.ne.s32.totalorder %s28, %s44
      %p46 = scmp.eq.s32.totalorder %s20, 0
      %p47 = por %p45, %p46
      %s49 = sadd.s32 %s48, 1
      %p52 = scmp.eq.s32.totalorder %s14, 1
      %p53 = scmp.ne.s32.totalorder %s48, %s50
      %p54 = scmp.eq.s32.totalorder %s14, 0
      %p55 = por %p53, %p54
      %p56 = scmp.ne.s32.totalorder %s48, %s50
      %p57 = scmp.eq.s32.totalorder %s19, 1
      %p58 = por %p56, %p57
      %p59 = scmp.ne.s32.totalorder %s50, %s51
      %p60 = scmp.eq.s32.totalorder %s19, 0
      %p61 = por %p59, %p60
      %p62 = scmp.ne.s32.totalorder %s50, %s51
      %p63 = scmp.eq.s32.totalorder %s20, 1
      %p64 = por %p62, %p63
      %p66 = scmp.ne.s32.totalorder %s51, %s65
      %p67 = scmp.eq.s32.totalorder %s20, 0
      %p68 = por %p66, %p67
      %s70 = sadd.s32 %s69, 1
      %p73 = scmp.eq.s32.totalorder %s14, 1
      %p74 = scmp.ne.s32.totalorder %s69, %s71
      %p75 = scmp.eq.s32.totalorder %s14, 0
      %p76 = por %p74, %p75
      %p77 = scmp.ne.s32.totalorder %s69, %s71
      %p78 = scmp.eq.s32.totalorder %s19, 1
      %p79 = por %p77, %p78
      %p80 = scmp.ne.s32.totalorder %s71, %s72
      %p81 = scmp.eq.s32.totalorder %s19, 0
      %p82 = por %p80, %p81
      %p83 = scmp.ne.s32.totalorder %s71, %s72
      %p84 = scmp.eq.s32.totalorder %s20, 1
      %p85 = por %p83, %p84
      %p87 = scmp.ne.s32.totalorder %s72, %s86
      %p88 = scmp.eq.s32.totalorder %s20, 0
      %p89 = por %p87, %p88
      %s91 = sadd.s32 %s90, 1
      %p94 = scmp.eq.s32.totalorder %s14, 1
      %p95 = scmp.ne.s32.totalorder %s90, %s92
      %p96 = scmp.eq.s32.totalorder %s14, 0
      %p97 = por %p95, %p96
      %p98 = scmp.ne.s32.totalorder %s90, %s92
      %p99 = scmp.eq.s32.totalorder %s19, 1
      %p100 = por %p98, %p99
      %p101 = scmp.ne.s32.totalorder %s92, %s93
      %p102 = scmp.eq.s32.totalorder %s19, 0
      %p103 = por %p101, %p102
      %p104 = scmp.ne.s32.totalorder %s92, %s93
      %p105 = scmp.eq.s32.totalorder %s20, 1
      %p106 = por %p104, %p105
      %p108 = scmp.ne.s32.totalorder %s93, %s107
      %p109 = scmp.eq.s32.totalorder %s20, 0
      %p110 = por %p108, %p109
      %s112 = sadd.s32 %s111, 1
      %p115 = scmp.eq.s32.totalorder %s14, 1
      %p116 = scmp.ne.s32.totalorder %s111, %s113
      %p117 = scmp.eq.s32.totalorder %s14, 0
      %p118 = por %p116, %p117
      %p119 = scmp.ne.s32.totalorder %s111, %s113
      %p120 = scmp.eq.s32.totalorder %s19, 1
      %p121 = por %p119, %p120
      %p122 = scmp.ne.s32.totalorder %s113, %s114
      %p123 = scmp.eq.s32.totalorder %s19, 0
      %p124 = por %p122, %p123
      %p125 = scmp.ne.s32.totalorder %s113, %s114
      %p126 = scmp.eq.s32.totalorder %s20, 1
      %p127 = por %p125, %p126
      %p129 = scmp.ne.s32.totalorder %s114, %s128
      %p130 = scmp.eq.s32.totalorder %s20, 0
      %p131 = por %p129, %p130
      %s132 = ssub.s32 %s14, %s21
      %p133 = scmp.eq.s32.totalorder %s132, 0
      %s135 = sadd.s32 %s134, 1
      %s136 = scalar_select %p133, %s134, %s135
      %p139 = pneg %p133
      %p140 = scmp.eq.s32.totalorder %s14, 1
      %p141 = por %p139, %p140
      %p142 = scmp.ne.s32.totalorder %s134, %s137
      %p143 = scmp.eq.s32.totalorder %s14, 0
      %p144 = por %p142, %p143
      %p145 = scmp.ne.s32.totalorder %s134, %s137
      %p146 = scmp.eq.s32.totalorder %s19, 1
      %p147 = por %p145, %p146
      %p148 = scmp.ne.s32.totalorder %s137, %s138
      %p149 = scmp.eq.s32.totalorder %s19, 0
      %p150 = por %p148, %p149
      %p151 = scmp.ne.s32.totalorder %s137, %s138
      %p152 = scmp.eq.s32.totalorder %s20, 1
      %p153 = por %p151, %p152
      %p155 = scmp.ne.s32.totalorder %s138, %s154
      %p156 = scmp.eq.s32.totalorder %s20, 0
      %p157 = por %p155, %p156
      %p158 = scmp.le.s32.totalorder 1, %s14
      %p159 = scmp.lt.s32.totalorder %s14, 3
      %p160 = pnand %p158, %p159
      %p161 = pneg %p160
      // Predicated region
      $region9: #{up_block_forward.3} parent=5 // pred_check
        _
      $region10: #{up_block_forward.3} parent=5 // pred_check_branch
        %163 = sbr.rel (%p160) target = $region12
      $region11: #{up_block_forward.3} parent=5 // pred_region
        %s164 = ssub.s32 %s14, 1
        // Predicated region
        $region13: #{up_block_forward.3} parent=11 // pred_check
          %p165 = pneg %p61
        $region14: #{up_block_forward.3} parent=11 // pred_check_branch
          %167 = sbr.rel (%p165) target = $region16
        $region15: #{up_block_forward.3} parent=11 // pred_region
          _
        $region16: #{up_block_forward.3} parent=11 // pred_fallthru
          _
        // Predicated region
        $region17: #{up_block_forward.3} parent=11 // pred_check
          %p168 = pneg %p82
        $region18: #{up_block_forward.3} parent=11 // pred_check_branch
          %170 = sbr.rel (%p168) target = $region20
        $region19: #{up_block_forward.3} parent=11 // pred_region
          _
        $region20: #{up_block_forward.3} parent=11 // pred_fallthru
          _
        // Predicated region
        $region21: #{up_block_forward.3} parent=11 // pred_check
          %p171 = pneg %p103
        $region22: #{up_block_forward.3} parent=11 // pred_check_branch
          %173 = sbr.rel (%p171) target = $region24
        $region23: #{up_block_forward.3} parent=11 // pred_region
          _
        $region24: #{up_block_forward.3} parent=11 // pred_fallthru
          _
        // Predicated region
        $region25: #{up_block_forward.3} parent=11 // pred_check
          %p174 = pneg %p124
        $region26: #{up_block_forward.3} parent=11 // pred_check_branch
          %176 = sbr.rel (%p174) target = $region28
        $region27: #{up_block_forward.3} parent=11 // pred_region
          _
        $region28: #{up_block_forward.3} parent=11 // pred_fallthru
          _
      $region12: #{up_block_forward.3} parent=5 // pred_fallthru
        _
      %p177 = scmp.lt.s32.totalorder %s14, 2
      // Predicated region
      $region29: #{up_block_forward.3} parent=5 // pred_check
        %p178 = pneg %p177
      $region30: #{up_block_forward.3} parent=5 // pred_check_branch
        %180 = sbr.rel (%p178) target = $region32
      $region31: #{up_block_forward.3} parent=5 // pred_region
        // Predicated region
        $region33: #{up_block_forward.3} parent=31 // pred_check
          %p181 = pneg %p34
        $region34: #{up_block_forward.3} parent=31 // pred_check_branch
          %183 = sbr.rel (%p181) target = $region36
        $region35: #{up_block_forward.3} parent=31 // pred_region
          %p184 = scmp.lt.s32.totalorder %s14, 1
          %s185 = scalar_select %p184, %s14, 1
          %s186 = smul.addr %s185, 8
          %s187 = smul.addr %s186, 4
          %s188 = scalar_lea.vmem %s0, %s187
        $region36: #{up_block_forward.3} parent=31 // pred_fallthru
          _
      $region32: #{up_block_forward.3} parent=5 // pred_fallthru
        _
      %p189 = scmp.le.s32.totalorder 1, %s14
      %p190 = scmp.lt.s32.totalorder %s14, 3
      %p191 = pnand %p189, %p190
      %p192 = pneg %p191
      // Predicated region
      $region37: #{up_block_forward.3} parent=5 // pred_check
        _
      $region38: #{up_block_forward.3} parent=5 // pred_check_branch
        %194 = sbr.rel (%p191) target = $region40
      $region39: #{up_block_forward.3} parent=5 // pred_region
        %s195 = ssub.s32 %s14, 1
        %p196 = scmp.lt.s32.totalorder %s19, 1
        %s197 = scalar_select %p196, %s19, 1
        %s198 = smul.addr %s197, 8
        %s199 = smul.addr %s198, 4
        %s200 = scalar_lea.vmem %s0, %s199
        %p201 = pneg %p40
        %p202 = pneg %p37
        %p203 = pneg %p61
        %p204 = pneg %p58
        %p205 = pneg %p82
        %p206 = pneg %p79
        %p207 = pneg %p103
        %p208 = pneg %p100
        %p209 = pneg %p124
        %p210 = pneg %p121
        %p211 = pneg %p150
        %p212 = pneg %p147
        %s213 = sand.u32 %s137, 1
        %s214 = scalar_lea.sflag [#allocation3], %s213
        %s215 = sand.u32 %s137, 1
        %s216 = smul.addr %s215, 64
        %s217 = scalar_lea.vmem [#allocation2], %s216
        %p218 = scmp.lt.s32.totalorder %s19, 1
        %s219 = scalar_select %p218, %s19, 1
        %s220 = smul.addr %s219, 8
        %s221 = smul.addr %s220, 4
        %s222 = scalar_lea.vmem %s0, %s221
        %v224 = vld [vmem:[%s222] sm:$0xf]
        %v225 = vld [vmem:[%s222 + $0x4] sm:$0xf]
        %v226 = vld [vmem:[%s222 + $0x8] sm:$0xf]
        %v227 = vld [vmem:[%s222 + $0xc] sm:$0xf]
        %v228 = vld [vmem:[%s222 + $0x10] sm:$0xf]
        %v229 = vld [vmem:[%s222 + $0x14] sm:$0xf]
        %v230 = vld [vmem:[%s222 + $0x18] sm:$0xf]
        %v231 = vld [vmem:[%s222 + $0x1c] sm:$0xf]
        %v232 = vunpack.c.l.bf16 %v224
        %v233 = vunpack.c.l.bf16 %v225
        %v234 = vunpack.c.l.bf16 %v226
        %v235 = vunpack.c.l.bf16 %v227
        %v236 = vunpack.c.l.bf16 %v228
        %v237 = vunpack.c.l.bf16 %v229
        %v238 = vunpack.c.l.bf16 %v230
        %v239 = vunpack.c.l.bf16 %v231
        %v240 = vld [vmem:[%s1] sm:$0xff]
        %v241 = vld [vmem:[%s1 + $0x8] sm:$0xf]
        %v242 = vld [vmem:[%s1 + $0xc] sm:$0xff]
        %v243 = vld [vmem:[%s1 + $0x14] sm:$0xf]
        %v244 = vld [vmem:[%s1 + $0x18] sm:$0xff]
        %v245 = vld [vmem:[%s1 + $0x20] sm:$0xf]
        %v246 = vld [vmem:[%s1 + $0x24] sm:$0xff]
        %v247 = vld [vmem:[%s1 + $0x2c] sm:$0xf]
        %v248 = vld [vmem:[%s1 + $0x30] sm:$0xff]
        %v249 = vld [vmem:[%s1 + $0x38] sm:$0xf]
        %v250 = vld [vmem:[%s1 + $0x3c] sm:$0xff]
        %v251 = vld [vmem:[%s1 + $0x44] sm:$0xf]
        %v252 = vld [vmem:[%s1 + $0x48] sm:$0xff]
        %v253 = vld [vmem:[%s1 + $0x50] sm:$0xf]
        %v254 = vld [vmem:[%s1 + $0x54] sm:$0xff]
        %v255 = vld [vmem:[%s1 + $0x5c] sm:$0xf]
        %v256 = vld [vmem:[%s1 + $0x60] sm:$0xff]
        %v257 = vld [vmem:[%s1 + $0x68] sm:$0xf]
        %v258 = vld [vmem:[%s1 + $0x6c] sm:$0xff]
        %v259 = vld [vmem:[%s1 + $0x74] sm:$0xf]
        %v260 = vld [vmem:[%s1 + $0x78] sm:$0xff]
        %v261 = vld [vmem:[%s1 + $0x80] sm:$0xf]
        %v262 = vld [vmem:[%s1 + $0x84] sm:$0xff]
        %v263 = vld [vmem:[%s1 + $0x8c] sm:$0xf]
        %v264 = vld [vmem:[%s1 + $0x90] sm:$0xff]
        %v265 = vld [vmem:[%s1 + $0x98] sm:$0xf]
        %v266 = vld [vmem:[%s1 + $0x9c] sm:$0xff]
        %v267 = vld [vmem:[%s1 + $0xa4] sm:$0xf]
        %v268 = vld [vmem:[%s1 + $0xa8] sm:$0xff]
        %v269 = vld [vmem:[%s1 + $0xb0] sm:$0xf]
        %v270 = vld [vmem:[%s1 + $0xb4] sm:$0xff]
        %v271 = vld [vmem:[%s1 + $0xbc] sm:$0xf]
        %v272 = vld [vmem:[%s2] sm:$0x7]
        %v274 = vlaneseq
        %v275 = vshrl.u32 %v274, 7
        %v276 = vsub.s32 0, %v275
        %v277 = vrot.slane %v272, %v276
        %v278 = vlaneseq
        %v279 = vshrl.u32 %v278, 7
        %v280 = vsub.s32 1, %v279
        %v281 = vrot.slane %v272, %v280
        %v282 = vlaneseq
        %v283 = vshrl.u32 %v282, 7
        %v284 = vsub.s32 2, %v283
        %v285 = vrot.slane %v272, %v284
        %v297 = vunpack.c.l.b16 %v224
        %v298 = vunpack.c.l.b16 %v225
        %v299 = vunpack.c.l.b16 %v226
        %v300 = vunpack.c.l.b16 %v227
        %v301 = vunpack.c.l.b16 %v228
        %v302 = vunpack.c.l.b16 %v229
        %v303 = vunpack.c.l.b16 %v230
        %v304 = vunpack.c.l.b16 %v231
        %v305 = vpack.c.b16 %v298, %v297
        %v306 = vpack.c.b16 %v300, %v299
        %v307 = vpack.c.b16 %v302, %v301
        %v308 = vpack.c.b16 %v304, %v303
        %v345 = vunpack.c.l.b16 %v240
        %v346 = vunpack.c.h.b16 %v240
        %v347 = vunpack.c.l.b16 %v241
        %v348 = vunpack.c.l.b16 %v242
        %v349 = vunpack.c.h.b16 %v242
        %v350 = vunpack.c.l.b16 %v243
        %v351 = vunpack.c.l.b16 %v244
        %v352 = vunpack.c.h.b16 %v244
        %v353 = vunpack.c.l.b16 %v245
        %v354 = vunpack.c.l.b16 %v246
        %v355 = vunpack.c.h.b16 %v246
        %v356 = vunpack.c.l.b16 %v247
        %v357 = vunpack.c.l.b16 %v248
        %v358 = vunpack.c.h.b16 %v248
        %v359 = vunpack.c.l.b16 %v249
        %v360 = vunpack.c.l.b16 %v250
        %v361 = vunpack.c.h.b16 %v250
        %v362 = vunpack.c.l.b16 %v251
        %v363 = vunpack.c.l.b16 %v252
        %v364 = vunpack.c.h.b16 %v252
        %v365 = vunpack.c.l.b16 %v253
        %v366 = vunpack.c.l.b16 %v254
        %v367 = vunpack.c.h.b16 %v254
        %v368 = vunpack.c.l.b16 %v255
        %v369 = vunpack.c.l.b16 %v256
        %v370 = vunpack.c.h.b16 %v256
        %v371 = vunpack.c.l.b16 %v257
        %v372 = vunpack.c.l.b16 %v258
        %v373 = vunpack.c.h.b16 %v258
        %v374 = vunpack.c.l.b16 %v259
        %v375 = vunpack.c.l.b16 %v260
        %v376 = vunpack.c.h.b16 %v260
        %v377 = vunpack.c.l.b16 %v261
        %v378 = vunpack.c.l.b16 %v262
        %v379 = vunpack.c.h.b16 %v262
        %v380 = vunpack.c.l.b16 %v263
        %v381 = vunpack.c.l.b16 %v264
        %v382 = vunpack.c.h.b16 %v264
        %v383 = vunpack.c.l.b16 %v265
        %v384 = vunpack.c.l.b16 %v266
        %v385 = vunpack.c.h.b16 %v266
        %v386 = vunpack.c.l.b16 %v267
        %v387 = vunpack.c.l.b16 %v268
        %v388 = vunpack.c.h.b16 %v268
        %v389 = vunpack.c.l.b16 %v269
        %v390 = vunpack.c.l.b16 %v270
        %v391 = vunpack.c.h.b16 %v270
        %v392 = vunpack.c.l.b16 %v271
        %v393 = vpack.c.b16 %v348, %v345
        %v394 = vpack.c.b16 %v349, %v346
        %v395 = vpack.c.b16 %v350, %v347
        %v396 = vpack.c.b16 %v354, %v351
        %v397 = vpack.c.b16 %v355, %v352
        %v398 = vpack.c.b16 %v356, %v353
        %v399 = vpack.c.b16 %v360, %v357
        %v400 = vpack.c.b16 %v361, %v358
        %v401 = vpack.c.b16 %v362, %v359
        %v402 = vpack.c.b16 %v366, %v363
        %v403 = vpack.c.b16 %v367, %v364
        %v404 = vpack.c.b16 %v368, %v365
        %v405 = vpack.c.b16 %v372, %v369
        %v406 = vpack.c.b16 %v373, %v370
        %v407 = vpack.c.b16 %v374, %v371
        %v408 = vpack.c.b16 %v378, %v375
        %v409 = vpack.c.b16 %v379, %v376
        %v410 = vpack.c.b16 %v380, %v377
        %v411 = vpack.c.b16 %v384, %v381
        %v412 = vpack.c.b16 %v385, %v382
        %v413 = vpack.c.b16 %v386, %v383
        %v414 = vpack.c.b16 %v390, %v387
        %v415 = vpack.c.b16 %v391, %v388
        %v416 = vpack.c.b16 %v392, %v389
        %441 = vmatprep.subr.bf16.mxu0 %v394
        %442 = vmatpush1.bf16.msra.mxu0 %v393
        %443 = vmatprep.subr.bf16.mxu0 %v397
        %444 = vmatpush1.bf16.msra.mxu0 %v396
        %445 = vmatprep.subr.bf16.mxu0 %v400
        %446 = vmatpush1.bf16.msra.mxu0 %v399
        %447 = vmatprep.subr.bf16.mxu0 %v403
        %448 = vmatpush1.bf16.msra.mxu0 %v402
        %449 = vmatprep.subr.bf16.mxu0 %v406
        %450 = vmatpush1.bf16.msra.mxu0 %v405
        %451 = vmatprep.subr.bf16.mxu0 %v409
        %452 = vmatpush1.bf16.msra.mxu0 %v408
        %453 = vmatprep.subr.bf16.mxu0 %v412
        %454 = vmatpush1.bf16.msra.mxu0 %v411
        %455 = vmatprep.subr.bf16.mxu0 %v415
        %456 = vmatpush1.bf16.msra.mxu0 %v414
        %457 = vmatprep.subr.bf16.mxu0 0
        %458 = vmatpush1.bf16.msra.mxu0 0
        %459 = vmatprep.subr.bf16.mxu0 0
        %460 = vmatpush1.bf16.msra.mxu0 0
        %461 = vmatprep.subr.bf16.mxu0 0
        %462 = vmatpush1.bf16.msra.mxu0 0
        %463 = vmatprep.subr.bf16.mxu0 0
        %464 = vmatpush1.bf16.msra.mxu0 0
        %465 = vmatprep.subr.bf16.mxu0 0
        %466 = vmatpush1.bf16.msra.mxu0 0
        %467 = vmatprep.subr.bf16.mxu0 0
        %468 = vmatpush1.bf16.msra.mxu0 0
        %469 = vmatprep.subr.bf16.mxu0 0
        %470 = vmatpush1.bf16.msra.mxu0 0
        %471 = vmatprep.subr.bf16.mxu0 0
        %472 = vmatpush1.bf16.msra.mxu0 0
        %473 = vmatprep.mubr.bf16.mxu0 0
        %474 = vmatmul.mubr.bf16.gmra.mrb[0].mxu0 %v305
        %v475 = vpop.f32.mrb[0].mxu0
        %v476 = vadd.f32 %v277, %v475
        %v477 = vpop.f32.mrb[0].mxu0
        %v478 = vadd.f32 %v281, %v477
        %v479 = vpop.f32.mrb[0].mxu0
        %v480 = vadd.f32 %v277, %v479
        %v481 = vpop.f32.mrb[0].mxu0
        %v482 = vadd.f32 %v281, %v481
        %483 = vmatprep.mubr.bf16.mxu0 0
        %484 = vmatmul.mubr.bf16.gmra.mrb[0].mxu0 %v306
        %v485 = vpop.f32.mrb[0].mxu0
        %v486 = vadd.f32 %v277, %v485
        %v487 = vpop.f32.mrb[0].mxu0
        %v488 = vadd.f32 %v281, %v487
        %v489 = vpop.f32.mrb[0].mxu0
        %v490 = vadd.f32 %v277, %v489
        %v491 = vpop.f32.mrb[0].mxu0
        %v492 = vadd.f32 %v281, %v491
        %493 = vmatprep.mubr.bf16.mxu0 0
        %494 = vmatmul.mubr.bf16.gmra.mrb[0].mxu0 %v307
        %v495 = vpop.f32.mrb[0].mxu0
        %v496 = vadd.f32 %v277, %v495
        %v497 = vpop.f32.mrb[0].mxu0
        %v498 = vadd.f32 %v281, %v497
        %v499 = vpop.f32.mrb[0].mxu0
        %v500 = vadd.f32 %v277, %v499
        %v501 = vpop.f32.mrb[0].mxu0
        %v502 = vadd.f32 %v281, %v501
        %503 = vmatprep.mubr.bf16.mxu0 0
        %504 = vmatmul.mubr.bf16.gmra.mrb[0].mxu0 %v308
        %v505 = vpop.f32.mrb[0].mxu0
        %v506 = vadd.f32 %v277, %v505
        %v507 = vpop.f32.mrb[0].mxu0
        %v508 = vadd.f32 %v281, %v507
        %v509 = vpop.f32.mrb[0].mxu0
        %v510 = vadd.f32 %v277, %v509
        %v511 = vpop.f32.mrb[0].mxu0
        %v512 = vadd.f32 %v281, %v511
        %513 = vdwg.mxu0
        %514 = vmatprep.subr.bf16.mxu0 0
        %515 = vmatpush1.bf16.msra.mxu0 %v395
        %516 = vmatprep.subr.bf16.mxu0 0
        %517 = vmatpush1.bf16.msra.mxu0 %v398
        %518 = vmatprep.subr.bf16.mxu0 0
        %519 = vmatpush1.bf16.msra.mxu0 %v401
        %520 = vmatprep.subr.bf16.mxu0 0
        %521 = vmatpush1.bf16.msra.mxu0 %v404
        %522 = vmatprep.subr.bf16.mxu0 0
        %523 = vmatpush1.bf16.msra.mxu0 %v407
        %524 = vmatprep.subr.bf16.mxu0 0
        %525 = vmatpush1.bf16.msra.mxu0 %v410
        %526 = vmatprep.subr.bf16.mxu0 0
        %527 = vmatpush1.bf16.msra.mxu0 %v413
        %528 = vmatprep.subr.bf16.mxu0 0
        %529 = vmatpush1.bf16.msra.mxu0 %v416
        %530 = vmatprep.subr.bf16.mxu0 0
        %531 = vmatpush1.bf16.msra.mxu0 0
        %532 = vmatprep.subr.bf16.mxu0 0
        %533 = vmatpush1.bf16.msra.mxu0 0
        %534 = vmatprep.subr.bf16.mxu0 0
        %535 = vmatpush1.bf16.msra.mxu0 0
        %536 = vmatprep.subr.bf16.mxu0 0
        %537 = vmatpush1.bf16.msra.mxu0 0
        %538 = vmatprep.subr.bf16.mxu0 0
        %539 = vmatpush1.bf16.msra.mxu0 0
        %540 = vmatprep.subr.bf16.mxu0 0
        %541 = vmatpush1.bf16.msra.mxu0 0
        %542 = vmatprep.subr.bf16.mxu0 0
        %543 = vmatpush1.bf16.msra.mxu0 0
        %544 = vmatprep.subr.bf16.mxu0 0
        %545 = vmatpush1.bf16.msra.mxu0 0
        %546 = vmatprep.mubr.bf16.mxu0 0
        %547 = vmatmul.mubr.bf16.gmra.mrb[0].mxu0 %v305
        %v548 = vpop.f32.mrb[0].mxu0
        %v549 = vadd.f32 %v285, %v548
        %v550 = vpop.f32.mrb[0].mxu0
        %v551 = vpop.f32.mrb[0].mxu0
        %v552 = vadd.f32 %v285, %v551
        %v553 = vpop.f32.mrb[0].mxu0
        %554 = vmatprep.mubr.bf16.mxu0 0
        %555 = vmatmul.mubr.bf16.gmra.mrb[0].mxu0 %v306
        %v556 = vpop.f32.mrb[0].mxu0
        %v557 = vadd.f32 %v285, %v556
        %v558 = vpop.f32.mrb[0].mxu0
        %v559 = vpop.f32.mrb[0].mxu0
        %v560 = vadd.f32 %v285, %v559
        %v561 = vpop.f32.mrb[0].mxu0
        %562 = vmatprep.mubr.bf16.mxu0 0
        %563 = vmatmul.mubr.bf16.gmra.mrb[0].mxu0 %v307
        %v564 = vpop.f32.mrb[0].mxu0
        %v565 = vadd.f32 %v285, %v564
        %v566 = vpop.f32.mrb[0].mxu0
        %v567 = vpop.f32.mrb[0].mxu0
        %v568 = vadd.f32 %v285, %v567
        %v569 = vpop.f32.mrb[0].mxu0
        %570 = vmatprep.mubr.bf16.mxu0 0
        %571 = vmatmul.mubr.bf16.gmra.mrb[0].mxu0 %v308
        %v572 = vpop.f32.mrb[0].mxu0
        %v573 = vadd.f32 %v285, %v572
        %v574 = vpop.f32.mrb[0].mxu0
        %v575 = vpop.f32.mrb[0].mxu0
        %v576 = vadd.f32 %v285, %v575
        %v577 = vpop.f32.mrb[0].mxu0
        %578 = vdwg.mxu0
        %v579 = vmul.f32 %v476, 0.088388346
        %v580 = vmul.f32 %v480, 0.088388346
        %v581 = vmul.f32 %v486, 0.088388346
        %v582 = vmul.f32 %v490, 0.088388346
        %v583 = vmul.f32 %v496, 0.088388346
        %v584 = vmul.f32 %v500, 0.088388346
        %v585 = vmul.f32 %v506, 0.088388346
        %v586 = vmul.f32 %v510, 0.088388346
        %v587 = vpack.c.bf16 %v580, %v579
        %v588 = vpack.c.bf16 %v582, %v581
        %v589 = vpack.c.bf16 %v584, %v583
        %v590 = vpack.c.bf16 %v586, %v585
        %v591 = vpack.c.bf16 %v482, %v478
        %v592 = vpack.c.bf16 %v492, %v488
        %v593 = vpack.c.bf16 %v502, %v498
        %v594 = vpack.c.bf16 %v512, %v508
        %v595 = vpack.c.bf16 %v552, %v549
        %v596 = vpack.c.bf16 %v560, %v557
        %v597 = vpack.c.bf16 %v568, %v565
        %v598 = vpack.c.bf16 %v576, %v573
        %599 = vmatprep.subr.bf16.mxu0 0
        %600 = vmatpush1.bf16.xpose.msra.mxu0 %v591
        %601 = vmatprep.subr.bf16.mxu0 0
        %602 = vmatpush1.bf16.xpose.msra.mxu0 %v592
        %603 = vmatprep.subr.bf16.mxu0 0
        %604 = vmatpush1.bf16.xpose.msra.mxu0 %v593
        %605 = vmatprep.subr.bf16.mxu0 0
        %606 = vmatpush1.bf16.xpose.msra.mxu0 %v594
        %607 = vmatprep.subr.bf16.mxu0 0
        %608 = vmatpush1.bf16.xpose.msra.mxu0 0
        %609 = vmatprep.subr.bf16.mxu0 0
        %610 = vmatpush1.bf16.xpose.msra.mxu0 0
        %611 = vmatprep.subr.bf16.mxu0 0
        %612 = vmatpush1.bf16.xpose.msra.mxu0 0
        %613 = vmatprep.subr.bf16.mxu0 0
        %614 = vmatpush1.bf16.xpose.msra.mxu0 0
        %615 = vmatprep.subr.bf16.mxu0 0
        %616 = vmatpush1.bf16.xpose.msra.mxu0 0
        %617 = vmatprep.subr.bf16.mxu0 0
        %618 = vmatpush1.bf16.xpose.msra.mxu0 0
        %619 = vmatprep.subr.bf16.mxu0 0
        %620 = vmatpush1.bf16.xpose.msra.mxu0 0
        %621 = vmatprep.subr.bf16.mxu0 0
        %622 = vmatpush1.bf16.xpose.msra.mxu0 0
        %623 = vmatprep.subr.bf16.mxu0 0
        %624 = vmatpush1.bf16.xpose.msra.mxu0 0
        %625 = vmatprep.subr.bf16.mxu0 0
        %626 = vmatpush1.bf16.xpose.msra.mxu0 0
        %627 = vmatprep.subr.bf16.mxu0 0
        %628 = vmatpush1.bf16.xpose.msra.mxu0 0
        %629 = vmatprep.subr.bf16.mxu0 0
        %630 = vmatpush1.bf16.xpose.msra.mxu0 0
        %631 = vmatprep.mubr.bf16.mxu0 0
        %632 = vmatmul.mubr.bf16.gmra.mrb[0].mxu0 %v587
        %v633 = vpop.f32.mrb[0].mxu0
        %v634 = vadd.f32 0.0, %v633
        %v635 = vpop.f32.mrb[0].mxu0
        %v636 = vpop.f32.mrb[0].mxu0
        %v637 = vadd.f32 0.0, %v636
        %v638 = vpop.f32.mrb[0].mxu0
        %639 = vmatprep.mubr.bf16.mxu0 0
        %640 = vmatmul.mubr.bf16.gmra.mrb[0].mxu0 %v588
        %v641 = vpop.f32.mrb[0].mxu0
        %v642 = vadd.f32 0.0, %v641
        %v643 = vpop.f32.mrb[0].mxu0
        %v644 = vpop.f32.mrb[0].mxu0
        %v645 = vadd.f32 0.0, %v644
        %v646 = vpop.f32.mrb[0].mxu0
        %647 = vmatprep.mubr.bf16.mxu0 0
        %648 = vmatmul.mubr.bf16.gmra.mrb[0].mxu0 %v589
        %v649 = vpop.f32.mrb[0].mxu0
        %v650 = vadd.f32 0.0, %v649
        %v651 = vpop.f32.mrb[0].mxu0
        %v652 = vpop.f32.mrb[0].mxu0
        %v653 = vadd.f32 0.0, %v652
        %v654 = vpop.f32.mrb[0].mxu0
        %655 = vmatprep.mubr.bf16.mxu0 0
        %656 = vmatmul.mubr.bf16.gmra.mrb[0].mxu0 %v590
        %v657 = vpop.f32.mrb[0].mxu0
        %v658 = vadd.f32 0.0, %v657
        %v659 = vpop.f32.mrb[0].mxu0
        %v660 = vpop.f32.mrb[0].mxu0
        %v661 = vadd.f32 0.0, %v660
        %v662 = vpop.f32.mrb[0].mxu0
        %663 = vdwg.mxu0
        %vm664 = vcmask 523264
        %v665 = vsel %vm664, %v634, -inf
        %666 = vmax.xlane.f32.xlu0 %v665
        %v667 = vpop.xlane.xlu0 %666
        %v668 = vsel %vm664, %v637, -inf
        %669 = vmax.xlane.f32.xlu0 %v668
        %v670 = vpop.xlane.xlu0 %669
        %v671 = vsel %vm664, %v642, -inf
        %672 = vmax.xlane.f32.xlu0 %v671
        %v673 = vpop.xlane.xlu0 %672
        %v674 = vsel %vm664, %v645, -inf
        %675 = vmax.xlane.f32.xlu0 %v674
        %v676 = vpop.xlane.xlu0 %675
        %v677 = vsel %vm664, %v650, -inf
        %678 = vmax.xlane.f32.xlu0 %v677
        %v679 = vpop.xlane.xlu0 %678
        %v680 = vsel %vm664, %v653, -inf
        %681 = vmax.xlane.f32.xlu0 %v680
        %v682 = vpop.xlane.xlu0 %681
        %v683 = vsel %vm664, %v658, -inf
        %684 = vmax.xlane.f32.xlu0 %v683
        %v685 = vpop.xlane.xlu0 %684
        %v686 = vsel %vm664, %v661, -inf
        %687 = vmax.xlane.f32.xlu0 %v686
        %v688 = vpop.xlane.xlu0 %687
        %v689 = vsub.f32 %v634, %v667
        %v690 = vsub.f32 %v637, %v670
        %v691 = vsub.f32 %v642, %v673
        %v692 = vsub.f32 %v645, %v676
        %v693 = vsub.f32 %v650, %v679
        %v694 = vsub.f32 %v653, %v682
        %v695 = vsub.f32 %v658, %v685
        %v696 = vsub.f32 %v661, %v688
        %v697 = vmul.f32 %v689, 1.442695
        %v698 = vpow.pop %v697
        %v699 = vmul.f32 %v690, 1.442695
        %v700 = vpow.pop %v699
        %v701 = vmul.f32 %v691, 1.442695
        %v702 = vpow.pop %v701
        %v703 = vmul.f32 %v692, 1.442695
        %v704 = vpow.pop %v703
        %v705 = vmul.f32 %v693, 1.442695
        %v706 = vpow.pop %v705
        %v707 = vmul.f32 %v694, 1.442695
        %v708 = vpow.pop %v707
        %v709 = vmul.f32 %v695, 1.442695
        %v710 = vpow.pop %v709
        %v711 = vmul.f32 %v696, 1.442695
        %v712 = vpow.pop %v711
        %v713 = vsel %vm664, %v698, 0.0
        %714 = vadd.xlane.f32.xlu0 %v713
        %v715 = vpop.xlane.xlu0 %714
        %v716 = vsel %vm664, %v700, 0.0
        %717 = vadd.xlane.f32.xlu0 %v716
        %v718 = vpop.xlane.xlu0 %717
        %v719 = vsel %vm664, %v702, 0.0
        %720 = vadd.xlane.f32.xlu0 %v719
        %v721 = vpop.xlane.xlu0 %720
        %v722 = vsel %vm664, %v704, 0.0
        %723 = vadd.xlane.f32.xlu0 %v722
        %v724 = vpop.xlane.xlu0 %723
        %v725 = vsel %vm664, %v706, 0.0
        %726 = vadd.xlane.f32.xlu0 %v725
        %v727 = vpop.xlane.xlu0 %726
        %v728 = vsel %vm664, %v708, 0.0
        %729 = vadd.xlane.f32.xlu0 %v728
        %v730 = vpop.xlane.xlu0 %729
        %v731 = vsel %vm664, %v710, 0.0
        %732 = vadd.xlane.f32.xlu0 %v731
        %v733 = vpop.xlane.xlu0 %732
        %v734 = vsel %vm664, %v712, 0.0
        %735 = vadd.xlane.f32.xlu0 %v734
        %v736 = vpop.xlane.xlu0 %735
        %v737 = vrcp.pop %v715
        %v738 = vrcp.pop %v718
        %v739 = vrcp.pop %v721
        %v740 = vrcp.pop %v724
        %v741 = vrcp.pop %v727
        %v742 = vrcp.pop %v730
        %v743 = vrcp.pop %v733
        %v744 = vrcp.pop %v736
        %v745 = vmul.f32 %v698, %v737
        %v746 = vmul.f32 %v700, %v738
        %v747 = vmul.f32 %v702, %v739
        %v748 = vmul.f32 %v704, %v740
        %v749 = vmul.f32 %v706, %v741
        %v750 = vmul.f32 %v708, %v742
        %v751 = vmul.f32 %v710, %v743
        %v752 = vmul.f32 %v712, %v744
        %v753 = vpack.c.bf16 %v746, %v745
        %v754 = vpack.c.bf16 %v748, %v747
        %v755 = vpack.c.bf16 %v750, %v749
        %v756 = vpack.c.bf16 %v752, %v751
        %v758 = vsel %vm664, %v753, 0
        %v761 = vsel %vm664, %v754, 0
        %v764 = vsel %vm664, %v755, 0
        %v767 = vsel %vm664, %v756, 0
        %769 = vmatprep.subr.bf16.mxu0 0
        %770 = vmatpush1.bf16.msra.mxu0 %v595
        %771 = vmatprep.subr.bf16.mxu0 0
        %772 = vmatpush1.bf16.msra.mxu0 %v596
        %773 = vmatprep.subr.bf16.mxu0 0
        %774 = vmatpush1.bf16.msra.mxu0 %v597
        %775 = vmatprep.subr.bf16.mxu0 0
        %776 = vmatpush1.bf16.msra.mxu0 %v598
        %777 = vmatprep.subr.bf16.mxu0 0
        %778 = vmatpush1.bf16.msra.mxu0 0
        %779 = vmatprep.subr.bf16.mxu0 0
        %780 = vmatpush1.bf16.msra.mxu0 0
        %781 = vmatprep.subr.bf16.mxu0 0
        %782 = vmatpush1.bf16.msra.mxu0 0
        %783 = vmatprep.subr.bf16.mxu0 0
        %784 = vmatpush1.bf16.msra.mxu0 0
        %785 = vmatprep.subr.bf16.mxu0 0
        %786 = vmatpush1.bf16.msra.mxu0 0
        %787 = vmatprep.subr.bf16.mxu0 0
        %788 = vmatpush1.bf16.msra.mxu0 0
        %789 = vmatprep.subr.bf16.mxu0 0
        %790 = vmatpush1.bf16.msra.mxu0 0
        %791 = vmatprep.subr.bf16.mxu0 0
        %792 = vmatpush1.bf16.msra.mxu0 0
        %793 = vmatprep.subr.bf16.mxu0 0
        %794 = vmatpush1.bf16.msra.mxu0 0
        %795 = vmatprep.subr.bf16.mxu0 0
        %796 = vmatpush1.bf16.msra.mxu0 0
        %797 = vmatprep.subr.bf16.mxu0 0
        %798 = vmatpush1.bf16.msra.mxu0 0
        %799 = vmatprep.subr.bf16.mxu0 0
        %800 = vmatpush1.bf16.msra.mxu0 0
        %801 = vmatprep.mubr.bf16.mxu0 0
        %802 = vmatmul.mubr.bf16.gmra.mrb[0].mxu0 %v758
        %v803 = vpop.f32.mrb[0].mxu0
        %v804 = vadd.f32 0.0, %v803
        %v805 = vpop.f32.mrb[0].mxu0
        %v806 = vpop.f32.mrb[0].mxu0
        %v807 = vadd.f32 0.0, %v806
        %v808 = vpop.f32.mrb[0].mxu0
        %809 = vmatprep.mubr.bf16.mxu0 0
        %810 = vmatmul.mubr.bf16.gmra.mrb[0].mxu0 %v761
        %v811 = vpop.f32.mrb[0].mxu0
        %v812 = vadd.f32 0.0, %v811
        %v813 = vpop.f32.mrb[0].mxu0
        %v814 = vpop.f32.mrb[0].mxu0
        %v815 = vadd.f32 0.0, %v814
        %v816 = vpop.f32.mrb[0].mxu0
        %817 = vmatprep.mubr.bf16.mxu0 0
        %818 = vmatmul.mubr.bf16.gmra.mrb[0].mxu0 %v764
        %v819 = vpop.f32.mrb[0].mxu0
        %v820 = vadd.f32 0.0, %v819
        %v821 = vpop.f32.mrb[0].mxu0
        %v822 = vpop.f32.mrb[0].mxu0
        %v823 = vadd.f32 0.0, %v822
        %v824 = vpop.f32.mrb[0].mxu0
        %825 = vmatprep.mubr.bf16.mxu0 0
        %826 = vmatmul.mubr.bf16.gmra.mrb[0].mxu0 %v767
        %v827 = vpop.f32.mrb[0].mxu0
        %v828 = vadd.f32 0.0, %v827
        %v829 = vpop.f32.mrb[0].mxu0
        %v830 = vpop.f32.mrb[0].mxu0
        %v831 = vadd.f32 0.0, %v830
        %v832 = vpop.f32.mrb[0].mxu0
        %833 = vdwg.mxu0
        %v834 = vpack.c.bf16 %v807, %v804
        %v835 = vpack.c.bf16 %v815, %v812
        %v836 = vpack.c.bf16 %v823, %v820
        %v837 = vpack.c.bf16 %v831, %v828
        %v838 = vld [vmem:[%s3] sm:$0xf]
        %v839 = vld [vmem:[%s3 + $0x4] sm:$0xf]
        %v840 = vld [vmem:[%s3 + $0x8] sm:$0xf]
        %v841 = vld [vmem:[%s3 + $0xc] sm:$0xf]
        %v842 = vld [vmem:[%s3 + $0x10] sm:$0xf]
        %v843 = vld [vmem:[%s3 + $0x14] sm:$0xf]
        %v844 = vld [vmem:[%s3 + $0x18] sm:$0xf]
        %v845 = vld [vmem:[%s3 + $0x1c] sm:$0xf]
        %v846 = vld [vmem:[%s3 + $0x20] sm:$0xf]
        %v847 = vld [vmem:[%s3 + $0x24] sm:$0xf]
        %v848 = vld [vmem:[%s3 + $0x28] sm:$0xf]
        %v849 = vld [vmem:[%s3 + $0x2c] sm:$0xf]
        %v850 = vld [vmem:[%s3 + $0x30] sm:$0xf]
        %v851 = vld [vmem:[%s3 + $0x34] sm:$0xf]
        %v852 = vld [vmem:[%s3 + $0x38] sm:$0xf]
        %v853 = vld [vmem:[%s3 + $0x3c] sm:$0xf]
        %v854 = vld [vmem:[%s4] sm:$0x1]
        %v856 = vlaneseq
        %v857 = vshrl.u32 %v856, 7
        %v858 = vsub.s32 0, %v857
        %v859 = vrot.slane %v854, %v858
        %v877 = vunpack.c.l.b16 %v838
        %v878 = vunpack.c.l.b16 %v839
        %v879 = vunpack.c.l.b16 %v840
        %v880 = vunpack.c.l.b16 %v841
        %v881 = vunpack.c.l.b16 %v842
        %v882 = vunpack.c.l.b16 %v843
        %v883 = vunpack.c.l.b16 %v844
        %v884 = vunpack.c.l.b16 %v845
        %v885 = vunpack.c.l.b16 %v846
        %v886 = vunpack.c.l.b16 %v847
        %v887 = vunpack.c.l.b16 %v848
        %v888 = vunpack.c.l.b16 %v849
        %v889 = vunpack.c.l.b16 %v850
        %v890 = vunpack.c.l.b16 %v851
        %v891 = vunpack.c.l.b16 %v852
        %v892 = vunpack.c.l.b16 %v853
        %v893 = vpack.c.b16 %v878, %v877
        %v894 = vpack.c.b16 %v880, %v879
        %v895 = vpack.c.b16 %v882, %v881
        %v896 = vpack.c.b16 %v884, %v883
        %v897 = vpack.c.b16 %v886, %v885
        %v898 = vpack.c.b16 %v888, %v887
        %v899 = vpack.c.b16 %v890, %v889
        %v900 = vpack.c.b16 %v892, %v891
        %909 = vmatprep.subr.bf16.mxu0 0
        %910 = vmatpush1.bf16.msra.mxu0 %v893
        %911 = vmatprep.subr.bf16.mxu0 0
        %912 = vmatpush1.bf16.msra.mxu0 %v894
        %913 = vmatprep.subr.bf16.mxu0 0
        %914 = vmatpush1.bf16.msra.mxu0 %v895
        %915 = vmatprep.subr.bf16.mxu0 0
        %916 = vmatpush1.bf16.msra.mxu0 %v896
        %917 = vmatprep.subr.bf16.mxu0 0
        %918 = vmatpush1.bf16.msra.mxu0 %v897
        %919 = vmatprep.subr.bf16.mxu0 0
        %920 = vmatpush1.bf16.msra.mxu0 %v898
        %921 = vmatprep.subr.bf16.mxu0 0
        %922 = vmatpush1.bf16.msra.mxu0 %v899
        %923 = vmatprep.subr.bf16.mxu0 0
        %924 = vmatpush1.bf16.msra.mxu0 %v900
        %925 = vmatprep.subr.bf16.mxu0 0
        %926 = vmatpush1.bf16.msra.mxu0 0
        %927 = vmatprep.subr.bf16.mxu0 0
        %928 = vmatpush1.bf16.msra.mxu0 0
        %929 = vmatprep.subr.bf16.mxu0 0
        %930 = vmatpush1.bf16.msra.mxu0 0
        %931 = vmatprep.subr.bf16.mxu0 0
        %932 = vmatpush1.bf16.msra.mxu0 0
        %933 = vmatprep.subr.bf16.mxu0 0
        %934 = vmatpush1.bf16.msra.mxu0 0
        %935 = vmatprep.subr.bf16.mxu0 0
        %936 = vmatpush1.bf16.msra.mxu0 0
        %937 = vmatprep.subr.bf16.mxu0 0
        %938 = vmatpush1.bf16.msra.mxu0 0
        %939 = vmatprep.subr.bf16.mxu0 0
        %940 = vmatpush1.bf16.msra.mxu0 0
        %941 = vmatprep.mubr.bf16.mxu0 0
        %942 = vmatmul.mubr.bf16.gmra.mrb[0].mxu0 %v834
        %v943 = vpop.f32.mrb[0].mxu0
        %v944 = vadd.f32 %v859, %v943
        %v945 = vpop.f32.mrb[0].mxu0
        %v946 = vpop.f32.mrb[0].mxu0
        %v947 = vadd.f32 %v859, %v946
        %v948 = vpop.f32.mrb[0].mxu0
        %949 = vmatprep.mubr.bf16.mxu0 0
        %950 = vmatmul.mubr.bf16.gmra.mrb[0].mxu0 %v835
        %v951 = vpop.f32.mrb[0].mxu0
        %v952 = vadd.f32 %v859, %v951
        %v953 = vpop.f32.mrb[0].mxu0
        %v954 = vpop.f32.mrb[0].mxu0
        %v955 = vadd.f32 %v859, %v954
        %v956 = vpop.f32.mrb[0].mxu0
        %957 = vmatprep.mubr.bf16.mxu0 0
        %958 = vmatmul.mubr.bf16.gmra.mrb[0].mxu0 %v836
        %v959 = vpop.f32.mrb[0].mxu0
        %v960 = vadd.f32 %v859, %v959
        %v961 = vpop.f32.mrb[0].mxu0
        %v962 = vpop.f32.mrb[0].mxu0
        %v963 = vadd.f32 %v859, %v962
        %v964 = vpop.f32.mrb[0].mxu0
        %965 = vmatprep.mubr.bf16.mxu0 0
        %966 = vmatmul.mubr.bf16.gmra.mrb[0].mxu0 %v837
        %v967 = vpop.f32.mrb[0].mxu0
        %v968 = vadd.f32 %v859, %v967
        %v969 = vpop.f32.mrb[0].mxu0
        %v970 = vpop.f32.mrb[0].mxu0
        %v971 = vadd.f32 %v859, %v970
        %v972 = vpop.f32.mrb[0].mxu0
        %973 = vdwg.mxu0
        %v974 = vadd.f32 %v944, %v232
        %v975 = vadd.f32 %v947, %v233
        %v976 = vadd.f32 %v952, %v234
        %v977 = vadd.f32 %v955, %v235
        %v978 = vadd.f32 %v960, %v236
        %v979 = vadd.f32 %v963, %v237
        %v980 = vadd.f32 %v968, %v238
        %v981 = vadd.f32 %v971, %v239
        %982 = vst [vmem:[%s217] sm:$0xff] %v974
        %983 = vst [vmem:[%s217 + $0x8] sm:$0xff] %v975
        %984 = vst [vmem:[%s217 + $0x10] sm:$0xff] %v976
        %985 = vst [vmem:[%s217 + $0x18] sm:$0xff] %v977
        %986 = vst [vmem:[%s217 + $0x20] sm:$0xff] %v978
        %987 = vst [vmem:[%s217 + $0x28] sm:$0xff] %v979
        %988 = vst [vmem:[%s217 + $0x30] sm:$0xff] %v980
        %989 = vst [vmem:[%s217 + $0x38] sm:$0xff] %v981
        %s990 = sand.u32 %s137, 1
        %s991 = scalar_lea.sflag [#allocation3], %s990
        %s992 = sand.u32 %s137, 1
        %s993 = smul.addr %s992, 64
        %s994 = scalar_lea.vmem [#allocation2], %s993
        // Predicated region
        $region41: #{up_block_forward.3} parent=39 // pred_check
          %p995 = pneg %p147
        $region42: #{up_block_forward.3} parent=39 // pred_check_branch
          %997 = sbr.rel (%p995) target = $region44
        $region43: #{up_block_forward.3} parent=39 // pred_region
          %s999 = ssub.s32 1024, 1024
          %1000 = vsyncadd %s991, %s999
          %s1001 = smul.addr %s19, 8
          %s1002 = smul.addr %s1001, 128
          %s1003 = scalar_lea.hbm %s5, %s1002
          %s1004 = sshll.u32 %s994, 4
          %s1005 = int_to_ptr.vmem [resolvable:$true] %s1004
          %1010 = dma.vmem_to_hbm [thread:$0]  %s1005, 1024, %s1003, %s991, 128, 128, 8
        $region44: #{up_block_forward.3} parent=39 // pred_fallthru
          _
      $region40: #{up_block_forward.3} parent=5 // pred_fallthru
        _
      %p1011 = scmp.le.s32.totalorder 2, %s14
      // Predicated region
      $region45: #{up_block_forward.3} parent=5 // pred_check
        %p1012 = pneg %p1011
      $region46: #{up_block_forward.3} parent=5 // pred_check_branch
        %1014 = sbr.rel (%p1012) target = $region48
      $region47: #{up_block_forward.3} parent=5 // pred_region
        %s1015 = ssub.s32 %s14, 2
        // Predicated region
        $region49: #{up_block_forward.3} parent=47 // pred_check
          %p1016 = pneg %p153
        $region50: #{up_block_forward.3} parent=47 // pred_check_branch
          %1018 = sbr.rel (%p1016) target = $region52
        $region51: #{up_block_forward.3} parent=47 // pred_region
          %s1019 = sand.u32 %s138, 1
          %s1020 = scalar_lea.sflag [#allocation3], %s1019
          %s1021 = sand.u32 %s138, 1
          %s1022 = smul.addr %s1021, 64
          %s1023 = scalar_lea.vmem [#allocation2], %s1022
          %1024 = dma.done %s1020, 1024
        $region52: #{up_block_forward.3} parent=47 // pred_fallthru
          _
      $region48: #{up_block_forward.3} parent=5 // pred_fallthru
        _
    $region6: #{up_block_forward.3} parent=1 // loop_footer
      %s18 = sadd.s32 1, %s14
    $region7: #{up_block_forward.3} parent=1 // loop_footer_branch
      %13 = sbr.rel target = $region3
    $region8: #{up_block_forward.3} parent=1 // loop_exit
      _
    %1025 = vsyncpa [#allocation3], 1
    %s1026 = scalar_lea.sflag [#allocation3], 1
    %1027 = vsyncpa %s1026, 1

// kernel: up_block_forward.2
$region0: #{up_block_forward.2}
  #allocation0 [shape = 'u32[]', space=smem, size = 0x4, offset = 0x4, fixed_abs, tag = 'smem constant byte address 0x4 - core index']
  #allocation1 [shape = 'u32[144,128]{1,0:T(1,128)}', space=vmem, size = 0x12000, scoped, tag = 'internal scratch']
  #allocation2 [shape = 'f32[115,128]{1,0:T(8,128)}', space=vmem, size = 0xf000, scoped, tag = 'scratch operand']
  %s0 = inlined_call_operand.vmem [shape: bf16[2,115,192], index: 0, kind: input, shape index: {}]
  %s1 = inlined_call_operand.vmem [shape: f32[2,1,128], index: 1, kind: input, shape index: {}]
  %s2 = inlined_call_operand.vmem [shape: f32[115,1], index: 2, kind: input, shape index: {}]
  %s3 = inlined_call_operand.vmem [shape: f32[1,192], index: 3, kind: input, shape index: {}]
  %s4 = inlined_call_operand.vmem [shape: f32[1,192], index: 4, kind: input, shape index: {}]
  %s5 = inlined_call_operand.vmem [shape: f32[192,192], index: 5, kind: input, shape index: {}]
  %s6 = inlined_call_operand.vmem [shape: bf16[3,192,384], index: 6, kind: input, shape index: {}]
  %s7 = inlined_call_operand.vmem [shape: f32[1,128], index: 7, kind: input, shape index: {}]
  %s8 = inlined_call_operand.vmem [shape: f32[1,128], index: 8, kind: input, shape index: {}]
  %s9 = inlined_call_operand.vmem [shape: f32[1,128], index: 9, kind: input, shape index: {}]
  %s10 = inlined_call_operand.vmem [shape: f32[128,128], index: 10, kind: input, shape index: {}]
  %s11 = inlined_call_operand.vmem [shape: bf16[3,128,384], index: 11, kind: input, shape index: {}]
  %s12 = inlined_call_operand.vmem [shape: f32[1,128], index: 12, kind: input, shape index: {}]
  %s13 = inlined_call_operand.vmem [shape: bf16[192,128], index: 13, kind: input, shape index: {}]
  %s14 = inlined_call_operand.vmem [shape: f32[1,128], index: 14, kind: input, shape index: {}]
  %s15 = inlined_call_operand.vmem [shape: bf16[2,64,128], index: 15, kind: output, shape index: {}]
  %s16 = sld [smem:[#allocation0]]
  $region93: #{up_block_forward.2} parent=0
    _
  %s18 = ssub.s32 1, %s16
  %s19 = scalar_select 0, %s18, %s16
  loop: start=0, step=1, limit=4
  $region2: #{up_block_forward.2} parent=0 // loop_pre_header
    _
  $region3: #{up_block_forward.2} parent=0 // loop_header
    %s21 = sphi 0, %s25
    %p22 = scmp.ge.s32.totalorder %s21, 4
    %s31 = sphi 0, %s33
    %s34 = sphi 0, %s31
    %s35 = sphi 0, %s34
    %s51 = sphi 0, %s35
    %s57 = sphi 0, %s59
    %s60 = sphi 0, %s57
    %s61 = sphi 0, %s60
    %s77 = sphi 0, %s61
    %s81 = sphi 0, %s81
    %s83 = sphi 0, %s81
    %s84 = sphi 0, %s83
    %s98 = sphi 0, %s84
    %s102 = sphi 0, %s102
    %s104 = sphi 0, %s102
    %s105 = sphi 0, %s104
    %s119 = sphi 0, %s105
    %s123 = sphi 0, %s123
    %s125 = sphi 0, %s123
    %s126 = sphi 0, %s125
    %s140 = sphi 0, %s126
    %s144 = sphi 0, %s144
    %s146 = sphi 0, %s144
    %s147 = sphi 0, %s146
    %s161 = sphi 0, %s147
    %s165 = sphi 0, %s165
    %s167 = sphi 0, %s165
    %s168 = sphi 0, %s167
    %s182 = sphi 0, %s168
    %s186 = sphi 0, %s186
    %s188 = sphi 0, %s186
    %s189 = sphi 0, %s188
    %s203 = sphi 0, %s189
    %s207 = sphi 0, %s207
    %s209 = sphi 0, %s207
    %s210 = sphi 0, %s209
    %s224 = sphi 0, %s210
    %s228 = sphi 0, %s228
    %s230 = sphi 0, %s228
    %s231 = sphi 0, %s230
    %s245 = sphi 0, %s231
    %s249 = sphi 0, %s249
    %s251 = sphi 0, %s249
    %s252 = sphi 0, %s251
    %s266 = sphi 0, %s252
    %s270 = sphi 0, %s270
    %s272 = sphi 0, %s270
    %s273 = sphi 0, %s272
    %s287 = sphi 0, %s273
    %s291 = sphi 0, %s291
    %s293 = sphi 0, %s291
    %s294 = sphi 0, %s293
    %s308 = sphi 0, %s294
    %s312 = sphi 0, %s312
    %s314 = sphi 0, %s312
    %s315 = sphi 0, %s314
    %s329 = sphi 0, %s315
    %s333 = sphi 0, %s333
    %s335 = sphi 0, %s333
    %s336 = sphi 0, %s335
    %s350 = sphi 0, %s336
    %s356 = sphi 0, %s358
    %s359 = sphi 0, %s356
    %s360 = sphi 0, %s359
    %s376 = sphi 0, %s360
  $region4: #{up_block_forward.2} parent=0 // loop_header_branch
    %24 = sbr.rel (%p22) target = $region8
  $region5: #{up_block_forward.2} parent=0 // loop_body
    %s26 = ssub.s32 %s21, 1
    %s27 = ssub.s32 %s21, 2
    %s28 = sadd.s32 %s21, 1
    %s29 = ssub.s32 %s21, %s28
    %p30 = scmp.eq.s32.totalorder %s29, 0
    %s32 = sadd.s32 %s31, 1
    %s33 = scalar_select %p30, %s31, %s32
    %p36 = pneg %p30
    %p37 = scmp.eq.s32.totalorder %s21, 1
    %p38 = por %p36, %p37
    %p39 = scmp.ne.s32.totalorder %s31, %s34
    %p40 = scmp.eq.s32.totalorder %s21, 0
    %p41 = por %p39, %p40
    %p42 = scmp.ne.s32.totalorder %s31, %s34
    %p43 = scmp.eq.s32.totalorder %s26, 1
    %p44 = por %p42, %p43
    %p45 = scmp.ne.s32.totalorder %s34, %s35
    %p46 = scmp.eq.s32.totalorder %s26, 0
    %p47 = por %p45, %p46
    %p48 = scmp.ne.s32.totalorder %s34, %s35
    %p49 = scmp.eq.s32.totalorder %s27, 1
    %p50 = por %p48, %p49
    %p52 = scmp.ne.s32.totalorder %s35, %s51
    %p53 = scmp.eq.s32.totalorder %s27, 0
    %p54 = por %p52, %p53
    %s55 = ssub.s32 %s21, %s28
    %p56 = scmp.eq.s32.totalorder %s55, 0
    %s58 = sadd.s32 %s57, 1
    %s59 = scalar_select %p56, %s57, %s58
    %p62 = pneg %p56
    %p63 = scmp.eq.s32.totalorder %s21, 1
    %p64 = por %p62, %p63
    %p65 = scmp.ne.s32.totalorder %s57, %s60
    %p66 = scmp.eq.s32.totalorder %s21, 0
    %p67 = por %p65, %p66
    %p68 = scmp.ne.s32.totalorder %s57, %s60
    %p69 = scmp.eq.s32.totalorder %s26, 1
    %p70 = por %p68, %p69
    %p71 = scmp.ne.s32.totalorder %s60, %s61
    %p72 = scmp.eq.s32.totalorder %s26, 0
    %p73 = por %p71, %p72
    %p74 = scmp.ne.s32.totalorder %s60, %s61
    %p75 = scmp.eq.s32.totalorder %s27, 1
    %p76 = por %p74, %p75
    %p78 = scmp.ne.s32.totalorder %s61, %s77
    %p79 = scmp.eq.s32.totalorder %s27, 0
    %p80 = por %p78, %p79
    %s82 = sadd.s32 %s81, 1
    %p85 = scmp.eq.s32.totalorder %s21, 1
    %p86 = scmp.ne.s32.totalorder %s81, %s83
    %p87 = scmp.eq.s32.totalorder %s21, 0
    %p88 = por %p86, %p87
    %p89 = scmp.ne.s32.totalorder %s81, %s83
    %p90 = scmp.eq.s32.totalorder %s26, 1
    %p91 = por %p89, %p90
    %p92 = scmp.ne.s32.totalorder %s83, %s84
    %p93 = scmp.eq.s32.totalorder %s26, 0
    %p94 = por %p92, %p93
    %p95 = scmp.ne.s32.totalorder %s83, %s84
    %p96 = scmp.eq.s32.totalorder %s27, 1
    %p97 = por %p95, %p96
    %p99 = scmp.ne.s32.totalorder %s84, %s98
    %p100 = scmp.eq.s32.totalorder %s27, 0
    %p101 = por %p99, %p100
    %s103 = sadd.s32 %s102, 1
    %p106 = scmp.eq.s32.totalorder %s21, 1
    %p107 = scmp.ne.s32.totalorder %s102, %s104
    %p108 = scmp.eq.s32.totalorder %s21, 0
    %p109 = por %p107, %p108
    %p110 = scmp.ne.s32.totalorder %s102, %s104
    %p111 = scmp.eq.s32.totalorder %s26, 1
    %p112 = por %p110, %p111
    %p113 = scmp.ne.s32.totalorder %s104, %s105
    %p114 = scmp.eq.s32.totalorder %s26, 0
    %p115 = por %p113, %p114
    %p116 = scmp.ne.s32.totalorder %s104, %s105
    %p117 = scmp.eq.s32.totalorder %s27, 1
    %p118 = por %p116, %p117
    %p120 = scmp.ne.s32.totalorder %s105, %s119
    %p121 = scmp.eq.s32.totalorder %s27, 0
    %p122 = por %p120, %p121
    %s124 = sadd.s32 %s123, 1
    %p127 = scmp.eq.s32.totalorder %s21, 1
    %p128 = scmp.ne.s32.totalorder %s123, %s125
    %p129 = scmp.eq.s32.totalorder %s21, 0
    %p130 = por %p128, %p129
    %p131 = scmp.ne.s32.totalorder %s123, %s125
    %p132 = scmp.eq.s32.totalorder %s26, 1
    %p133 = por %p131, %p132
    %p134 = scmp.ne.s32.totalorder %s125, %s126
    %p135 = scmp.eq.s32.totalorder %s26, 0
    %p136 = por %p134, %p135
    %p137 = scmp.ne.s32.totalorder %s125, %s126
    %p138 = scmp.eq.s32.totalorder %s27, 1
    %p139 = por %p137, %p138
    %p141 = scmp.ne.s32.totalorder %s126, %s140
    %p142 = scmp.eq.s32.totalorder %s27, 0
    %p143 = por %p141, %p142
    %s145 = sadd.s32 %s144, 1
    %p148 = scmp.eq.s32.totalorder %s21, 1
    %p149 = scmp.ne.s32.totalorder %s144, %s146
    %p150 = scmp.eq.s32.totalorder %s21, 0
    %p151 = por %p149, %p150
    %p152 = scmp.ne.s32.totalorder %s144, %s146
    %p153 = scmp.eq.s32.totalorder %s26, 1
    %p154 = por %p152, %p153
    %p155 = scmp.ne.s32.totalorder %s146, %s147
    %p156 = scmp.eq.s32.totalorder %s26, 0
    %p157 = por %p155, %p156
    %p158 = scmp.ne.s32.totalorder %s146, %s147
    %p159 = scmp.eq.s32.totalorder %s27, 1
    %p160 = por %p158, %p159
    %p162 = scmp.ne.s32.totalorder %s147, %s161
    %p163 = scmp.eq.s32.totalorder %s27, 0
    %p164 = por %p162, %p163
    %s166 = sadd.s32 %s165, 1
    %p169 = scmp.eq.s32.totalorder %s21, 1
    %p170 = scmp.ne.s32.totalorder %s165, %s167
    %p171 = scmp.eq.s32.totalorder %s21, 0
    %p172 = por %p170, %p171
    %p173 = scmp.ne.s32.totalorder %s165, %s167
    %p174 = scmp.eq.s32.totalorder %s26, 1
    %p175 = por %p173, %p174
    %p176 = scmp.ne.s32.totalorder %s167, %s168
    %p177 = scmp.eq.s32.totalorder %s26, 0
    %p178 = por %p176, %p177
    %p179 = scmp.ne.s32.totalorder %s167, %s168
    %p180 = scmp.eq.s32.totalorder %s27, 1
    %p181 = por %p179, %p180
    %p183 = scmp.ne.s32.totalorder %s168, %s182
    %p184 = scmp.eq.s32.totalorder %s27, 0
    %p185 = por %p183, %p184
    %s187 = sadd.s32 %s186, 1
    %p190 = scmp.eq.s32.totalorder %s21, 1
    %p191 = scmp.ne.s32.totalorder %s186, %s188
    %p192 = scmp.eq.s32.totalorder %s21, 0
    %p193 = por %p191, %p192
    %p194 = scmp.ne.s32.totalorder %s186, %s188
    %p195 = scmp.eq.s32.totalorder %s26, 1
    %p196 = por %p194, %p195
    %p197 = scmp.ne.s32.totalorder %s188, %s189
    %p198 = scmp.eq.s32.totalorder %s26, 0
    %p199 = por %p197, %p198
    %p200 = scmp.ne.s32.totalorder %s188, %s189
    %p201 = scmp.eq.s32.totalorder %s27, 1
    %p202 = por %p200, %p201
    %p204 = scmp.ne.s32.totalorder %s189, %s203
    %p205 = scmp.eq.s32.totalorder %s27, 0
    %p206 = por %p204, %p205
    %s208 = sadd.s32 %s207, 1
    %p211 = scmp.eq.s32.totalorder %s21, 1
    %p212 = scmp.ne.s32.totalorder %s207, %s209
    %p213 = scmp.eq.s32.totalorder %s21, 0
    %p214 = por %p212, %p213
    %p215 = scmp.ne.s32.totalorder %s207, %s209
    %p216 = scmp.eq.s32.totalorder %s26, 1
    %p217 = por %p215, %p216
    %p218 = scmp.ne.s32.totalorder %s209, %s210
    %p219 = scmp.eq.s32.totalorder %s26, 0
    %p220 = por %p218, %p219
    %p221 = scmp.ne.s32.totalorder %s209, %s210
    %p222 = scmp.eq.s32.totalorder %s27, 1
    %p223 = por %p221, %p222
    %p225 = scmp.ne.s32.totalorder %s210, %s224
    %p226 = scmp.eq.s32.totalorder %s27, 0
    %p227 = por %p225, %p226
    %s229 = sadd.s32 %s228, 1
    %p232 = scmp.eq.s32.totalorder %s21, 1
    %p233 = scmp.ne.s32.totalorder %s228, %s230
    %p234 = scmp.eq.s32.totalorder %s21, 0
    %p235 = por %p233, %p234
    %p236 = scmp.ne.s32.totalorder %s228, %s230
    %p237 = scmp.eq.s32.totalorder %s26, 1
    %p238 = por %p236, %p237
    %p239 = scmp.ne.s32.totalorder %s230, %s231
    %p240 = scmp.eq.s32.totalorder %s26, 0
    %p241 = por %p239, %p240
    %p242 = scmp.ne.s32.totalorder %s230, %s231
    %p243 = scmp.eq.s32.totalorder %s27, 1
    %p244 = por %p242, %p243
    %p246 = scmp.ne.s32.totalorder %s231, %s245
    %p247 = scmp.eq.s32.totalorder %s27, 0
    %p248 = por %p246, %p247
    %s250 = sadd.s32 %s249, 1
    %p253 = scmp.eq.s32.totalorder %s21, 1
    %p254 = scmp.ne.s32.totalorder %s249, %s251
    %p255 = scmp.eq.s32.totalorder %s21, 0
    %p256 = por %p254, %p255
    %p257 = scmp.ne.s32.totalorder %s249, %s251
    %p258 = scmp.eq.s32.totalorder %s26, 1
    %p259 = por %p257, %p258
    %p260 = scmp.ne.s32.totalorder %s251, %s252
    %p261 = scmp.eq.s32.totalorder %s26, 0
    %p262 = por %p260, %p261
    %p263 = scmp.ne.s32.totalorder %s251, %s252
    %p264 = scmp.eq.s32.totalorder %s27, 1
    %p265 = por %p263, %p264
    %p267 = scmp.ne.s32.totalorder %s252, %s266
    %p268 = scmp.eq.s32.totalorder %s27, 0
    %p269 = por %p267, %p268
    %s271 = sadd.s32 %s270, 1
    %p274 = scmp.eq.s32.totalorder %s21, 1
    %p275 = scmp.ne.s32.totalorder %s270, %s272
    %p276 = scmp.eq.s32.totalorder %s21, 0
    %p277 = por %p275, %p276
    %p278 = scmp.ne.s32.totalorder %s270, %s272
    %p279 = scmp.eq.s32.totalorder %s26, 1
    %p280 = por %p278, %p279
    %p281 = scmp.ne.s32.totalorder %s272, %s273
    %p282 = scmp.eq.s32.totalorder %s26, 0
    %p283 = por %p281, %p282
    %p284 = scmp.ne.s32.totalorder %s272, %s273
    %p285 = scmp.eq.s32.totalorder %s27, 1
    %p286 = por %p284, %p285
    %p288 = scmp.ne.s32.totalorder %s273, %s287
    %p289 = scmp.eq.s32.totalorder %s27, 0
    %p290 = por %p288, %p289
    %s292 = sadd.s32 %s291, 1
    %p295 = scmp.eq.s32.totalorder %s21, 1
    %p296 = scmp.ne.s32.totalorder %s291, %s293
    %p297 = scmp.eq.s32.totalorder %s21, 0
    %p298 = por %p296, %p297
    %p299 = scmp.ne.s32.totalorder %s291, %s293
    %p300 = scmp.eq.s32.totalorder %s26, 1
    %p301 = por %p299, %p300
    %p302 = scmp.ne.s32.totalorder %s293, %s294
    %p303 = scmp.eq.s32.totalorder %s26, 0
    %p304 = por %p302, %p303
    %p305 = scmp.ne.s32.totalorder %s293, %s294
    %p306 = scmp.eq.s32.totalorder %s27, 1
    %p307 = por %p305, %p306
    %p309 = scmp.ne.s32.totalorder %s294, %s308
    %p310 = scmp.eq.s32.totalorder %s27, 0
    %p311 = por %p309, %p310
    %s313 = sadd.s32 %s312, 1
    %p316 = scmp.eq.s32.totalorder %s21, 1
    %p317 = scmp.ne.s32.totalorder %s312, %s314
    %p318 = scmp.eq.s32.totalorder %s21, 0
    %p319 = por %p317, %p318
    %p320 = scmp.ne.s32.totalorder %s312, %s314
    %p321 = scmp.eq.s32.totalorder %s26, 1
    %p322 = por %p320, %p321
    %p323 = scmp.ne.s32.totalorder %s314, %s315
    %p324 = scmp.eq.s32.totalorder %s26, 0
    %p325 = por %p323, %p324
    %p326 = scmp.ne.s32.totalorder %s314, %s315
    %p327 = scmp.eq.s32.totalorder %s27, 1
    %p328 = por %p326, %p327
    %p330 = scmp.ne.s32.totalorder %s315, %s329
    %p331 = scmp.eq.s32.totalorder %s27, 0
    %p332 = por %p330, %p331
    %s334 = sadd.s32 %s333, 1
    %p337 = scmp.eq.s32.totalorder %s21, 1
    %p338 = scmp.ne.s32.totalorder %s333, %s335
    %p339 = scmp.eq.s32.totalorder %s21, 0
    %p340 = por %p338, %p339
    %p341 = scmp.ne.s32.totalorder %s333, %s335
    %p342 = scmp.eq.s32.totalorder %s26, 1
    %p343 = por %p341, %p342
    %p344 = scmp.ne.s32.totalorder %s335, %s336
    %p345 = scmp.eq.s32.totalorder %s26, 0
    %p346 = por %p344, %p345
    %p347 = scmp.ne.s32.totalorder %s335, %s336
    %p348 = scmp.eq.s32.totalorder %s27, 1
    %p349 = por %p347, %p348
    %p351 = scmp.ne.s32.totalorder %s336, %s350
    %p352 = scmp.eq.s32.totalorder %s27, 0
    %p353 = por %p351, %p352
    %s354 = ssub.s32 %s21, %s28
    %p355 = scmp.eq.s32.totalorder %s354, 0
    %s357 = sadd.s32 %s356, 1
    %s358 = scalar_select %p355, %s356, %s357
    %p361 = pneg %p355
    %p362 = scmp.eq.s32.totalorder %s21, 1
    %p363 = por %p361, %p362
    %p364 = scmp.ne.s32.totalorder %s356, %s359
    %p365 = scmp.eq.s32.totalorder %s21, 0
    %p366 = por %p364, %p365
    %p367 = scmp.ne.s32.totalorder %s356, %s359
    %p368 = scmp.eq.s32.totalorder %s26, 1
    %p369 = por %p367, %p368
    %p370 = scmp.ne.s32.totalorder %s359, %s360
    %p371 = scmp.eq.s32.totalorder %s26, 0
    %p372 = por %p370, %p371
    %p373 = scmp.ne.s32.totalorder %s359, %s360
    %p374 = scmp.eq.s32.totalorder %s27, 1
    %p375 = por %p373, %p374
    %p377 = scmp.ne.s32.totalorder %s360, %s376
    %p378 = scmp.eq.s32.totalorder %s27, 0
    %p379 = por %p377, %p378
    %p380 = scmp.le.s32.totalorder 1, %s21
    %p381 = scmp.lt.s32.totalorder %s21, 3
    %p382 = pnand %p380, %p381
    %p383 = pneg %p382
    // Predicated region
    $region9: #{up_block_forward.2} parent=5 // pred_check
      _
    $region10: #{up_block_forward.2} parent=5 // pred_check_branch
      %385 = sbr.rel (%p382) target = $region12
    $region11: #{up_block_forward.2} parent=5 // pred_region
      %s386 = ssub.s32 %s21, 1
      // Predicated region
      $region13: #{up_block_forward.2} parent=11 // pred_check
        %p387 = pneg %p94
      $region14: #{up_block_forward.2} parent=11 // pred_check_branch
        %389 = sbr.rel (%p387) target = $region16
      $region15: #{up_block_forward.2} parent=11 // pred_region
        _
      $region16: #{up_block_forward.2} parent=11 // pred_fallthru
        _
      // Predicated region
      $region17: #{up_block_forward.2} parent=11 // pred_check
        %p390 = pneg %p115
      $region18: #{up_block_forward.2} parent=11 // pred_check_branch
        %392 = sbr.rel (%p390) target = $region20
      $region19: #{up_block_forward.2} parent=11 // pred_region
        _
      $region20: #{up_block_forward.2} parent=11 // pred_fallthru
        _
      // Predicated region
      $region21: #{up_block_forward.2} parent=11 // pred_check
        %p393 = pneg %p136
      $region22: #{up_block_forward.2} parent=11 // pred_check_branch
        %395 = sbr.rel (%p393) target = $region24
      $region23: #{up_block_forward.2} parent=11 // pred_region
        _
      $region24: #{up_block_forward.2} parent=11 // pred_fallthru
        _
      // Predicated region
      $region25: #{up_block_forward.2} parent=11 // pred_check
        %p396 = pneg %p157
      $region26: #{up_block_forward.2} parent=11 // pred_check_branch
        %398 = sbr.rel (%p396) target = $region28
      $region27: #{up_block_forward.2} parent=11 // pred_region
        _
      $region28: #{up_block_forward.2} parent=11 // pred_fallthru
        _
      // Predicated region
      $region29: #{up_block_forward.2} parent=11 // pred_check
        %p399 = pneg %p178
      $region30: #{up_block_forward.2} parent=11 // pred_check_branch
        %401 = sbr.rel (%p399) target = $region32
      $region31: #{up_block_forward.2} parent=11 // pred_region
        _
      $region32: #{up_block_forward.2} parent=11 // pred_fallthru
        _
      // Predicated region
      $region33: #{up_block_forward.2} parent=11 // pred_check
        %p402 = pneg %p199
      $region34: #{up_block_forward.2} parent=11 // pred_check_branch
        %404 = sbr.rel (%p402) target = $region36
      $region35: #{up_block_forward.2} parent=11 // pred_region
        _
      $region36: #{up_block_forward.2} parent=11 // pred_fallthru
        _
      // Predicated region
      $region37: #{up_block_forward.2} parent=11 // pred_check
        %p405 = pneg %p220
      $region38: #{up_block_forward.2} parent=11 // pred_check_branch
        %407 = sbr.rel (%p405) target = $region40
      $region39: #{up_block_forward.2} parent=11 // pred_region
        _
      $region40: #{up_block_forward.2} parent=11 // pred_fallthru
        _
      // Predicated region
      $region41: #{up_block_forward.2} parent=11 // pred_check
        %p408 = pneg %p241
      $region42: #{up_block_forward.2} parent=11 // pred_check_branch
        %410 = sbr.rel (%p408) target = $region44
      $region43: #{up_block_forward.2} parent=11 // pred_region
        _
      $region44: #{up_block_forward.2} parent=11 // pred_fallthru
        _
      // Predicated region
      $region45: #{up_block_forward.2} parent=11 // pred_check
        %p411 = pneg %p262
      $region46: #{up_block_forward.2} parent=11 // pred_check_branch
        %413 = sbr.rel (%p411) target = $region48
      $region47: #{up_block_forward.2} parent=11 // pred_region
        _
      $region48: #{up_block_forward.2} parent=11 // pred_fallthru
        _
      // Predicated region
      $region49: #{up_block_forward.2} parent=11 // pred_check
        %p414 = pneg %p283
      $region50: #{up_block_forward.2} parent=11 // pred_check_branch
        %416 = sbr.rel (%p414) target = $region52
      $region51: #{up_block_forward.2} parent=11 // pred_region
        _
      $region52: #{up_block_forward.2} parent=11 // pred_fallthru
        _
      // Predicated region
      $region53: #{up_block_forward.2} parent=11 // pred_check
        %p417 = pneg %p304
      $region54: #{up_block_forward.2} parent=11 // pred_check_branch
        %419 = sbr.rel (%p417) target = $region56
      $region55: #{up_block_forward.2} parent=11 // pred_region
        _
      $region56: #{up_block_forward.2} parent=11 // pred_fallthru
        _
      // Predicated region
      $region57: #{up_block_forward.2} parent=11 // pred_check
        %p420 = pneg %p325
      $region58: #{up_block_forward.2} parent=11 // pred_check_branch
        %422 = sbr.rel (%p420) target = $region60
      $region59: #{up_block_forward.2} parent=11 // pred_region
        _
      $region60: #{up_block_forward.2} parent=11 // pred_fallthru
        _
      // Predicated region
      $region61: #{up_block_forward.2} parent=11 // pred_check
        %p423 = pneg %p346
      $region62: #{up_block_forward.2} parent=11 // pred_check_branch
        %425 = sbr.rel (%p423) target = $region64
      $region63: #{up_block_forward.2} parent=11 // pred_region
        _
      $region64: #{up_block_forward.2} parent=11 // pred_fallthru
        _
    $region12: #{up_block_forward.2} parent=5 // pred_fallthru
      _
    %p426 = scmp.lt.s32.totalorder %s21, 2
    // Predicated region
    $region65: #{up_block_forward.2} parent=5 // pred_check
      %p427 = pneg %p426
    $region66: #{up_block_forward.2} parent=5 // pred_check_branch
      %429 = sbr.rel (%p427) target = $region68
    $region67: #{up_block_forward.2} parent=5 // pred_region
      // Predicated region
      $region69: #{up_block_forward.2} parent=67 // pred_check
        %p430 = pneg %p41
      $region70: #{up_block_forward.2} parent=67 // pred_check_branch
        %432 = sbr.rel (%p430) target = $region72
      $region71: #{up_block_forward.2} parent=67 // pred_region
        %p433 = scmp.lt.s32.totalorder %s21, 1
        %s434 = scalar_select %p433, %s21, 1
        %s435 = smul.addr %s434, 30
        %s436 = smul.addr %s435, 4
        %s437 = scalar_lea.vmem %s0, %s436
      $region72: #{up_block_forward.2} parent=67 // pred_fallthru
        _
      // Predicated region
      $region73: #{up_block_forward.2} parent=67 // pred_check
        %p438 = pneg %p67
      $region74: #{up_block_forward.2} parent=67 // pred_check_branch
        %440 = sbr.rel (%p438) target = $region76
      $region75: #{up_block_forward.2} parent=67 // pred_region
        %p441 = scmp.lt.s32.totalorder %s21, 1
        %s442 = scalar_select %p441, %s21, 1
        %s443 = scalar_lea.vmem %s1, %s442
      $region76: #{up_block_forward.2} parent=67 // pred_fallthru
        _
    $region68: #{up_block_forward.2} parent=5 // pred_fallthru
      _
    %p444 = scmp.le.s32.totalorder 1, %s21
    %p445 = scmp.lt.s32.totalorder %s21, 3
    %p446 = pnand %p444, %p445
    %p447 = pneg %p446
    // Predicated region
    $region77: #{up_block_forward.2} parent=5 // pred_check
      _
    $region78: #{up_block_forward.2} parent=5 // pred_check_branch
      %449 = sbr.rel (%p446) target = $region80
    $region79: #{up_block_forward.2} parent=5 // pred_region
      %s450 = ssub.s32 %s21, 1
      %p451 = scmp.lt.s32.totalorder %s26, 1
      %s452 = scalar_select %p451, %s26, 1
      %s453 = smul.addr %s452, 30
      %s454 = smul.addr %s453, 4
      %s455 = scalar_lea.vmem %s0, %s454
      %p456 = pneg %p47
      %p457 = pneg %p44
      %p458 = scmp.lt.s32.totalorder %s26, 1
      %s459 = scalar_select %p458, %s26, 1
      %s460 = scalar_lea.vmem %s1, %s459
      %p461 = pneg %p73
      %p462 = pneg %p70
      %p463 = pneg %p94
      %p464 = pneg %p91
      %p465 = pneg %p115
      %p466 = pneg %p112
      %p467 = pneg %p136
      %p468 = pneg %p133
      %p469 = pneg %p157
      %p470 = pneg %p154
      %p471 = pneg %p178
      %p472 = pneg %p175
      %p473 = pneg %p199
      %p474 = pneg %p196
      %p475 = pneg %p220
      %p476 = pneg %p217
      %p477 = pneg %p241
      %p478 = pneg %p238
      %p479 = pneg %p262
      %p480 = pneg %p259
      %p481 = pneg %p283
      %p482 = pneg %p280
      %p483 = pneg %p304
      %p484 = pneg %p301
      %p485 = pneg %p325
      %p486 = pneg %p322
      %p487 = pneg %p346
      %p488 = pneg %p343
      %p489 = pneg %p372
      %p490 = pneg %p369
      %p491 = scmp.lt.s32.totalorder %s26, 1
      %s492 = scalar_select %p491, %s26, 1
      %s493 = smul.addr %s492, 8
      %s494 = smul.addr %s493, 4
      %s495 = scalar_lea.vmem %s15, %s494
      %p496 = scmp.lt.s32.totalorder %s26, 1
      %s497 = scalar_select %p496, %s26, 1
      %s498 = smul.addr %s497, 30
      %s499 = smul.addr %s498, 4
      %s500 = scalar_lea.vmem %s0, %s499
      %p501 = scmp.lt.s32.totalorder %s26, 1
      %s502 = scalar_select %p501, %s26, 1
      %s503 = scalar_lea.vmem %s1, %s502
      %p504 = scmp.lt.s32.totalorder %s26, 1
      %s505 = scalar_select %p504, %s26, 1
      %s506 = smul.addr %s505, 8
      %s507 = smul.addr %s506, 4
      %s508 = scalar_lea.vmem %s15, %s507
      %v510 = vld [vmem:[%s2] sm:$0xff]
      %v511 = vld [vmem:[%s2 + $0x8] sm:$0xff]
      %v512 = vld [vmem:[%s2 + $0x10] sm:$0xff]
      %v513 = vld [vmem:[%s2 + $0x18] sm:$0xff]
      %v514 = vld [vmem:[%s2 + $0x20] sm:$0xff]
      %v515 = vld [vmem:[%s2 + $0x28] sm:$0xff]
      %v516 = vld [vmem:[%s2 + $0x30] sm:$0xff]
      %v517 = vld [vmem:[%s2 + $0x38] sm:$0xff]
      %v518 = vld [vmem:[%s2 + $0x40] sm:$0xff]
      %v519 = vld [vmem:[%s2 + $0x48] sm:$0xff]
      %v520 = vld [vmem:[%s2 + $0x50] sm:$0xff]
      %v521 = vld [vmem:[%s2 + $0x58] sm:$0xff]
      %v522 = vld [vmem:[%s2 + $0x60] sm:$0xff]
      %v523 = vld [vmem:[%s2 + $0x68] sm:$0xff]
      %v524 = vld [vmem:[%s500] sm:$0xff]
      %v525 = vld [vmem:[%s500 + $0x8] sm:$0xff]
      %v526 = vld [vmem:[%s500 + $0x10] sm:$0xff]
      %v527 = vld [vmem:[%s500 + $0x18] sm:$0xff]
      %v528 = vld [vmem:[%s500 + $0x20] sm:$0xff]
      %v529 = vld [vmem:[%s500 + $0x28] sm:$0xff]
      %v530 = vld [vmem:[%s500 + $0x30] sm:$0xff]
      %v531 = vld [vmem:[%s500 + $0x38] sm:$0xff]
      %v532 = vld [vmem:[%s500 + $0x40] sm:$0xff]
      %v533 = vld [vmem:[%s500 + $0x48] sm:$0xff]
      %v534 = vld [vmem:[%s500 + $0x50] sm:$0xff]
      %v535 = vld [vmem:[%s500 + $0x58] sm:$0xff]
      %v536 = vld [vmem:[%s500 + $0x60] sm:$0xff]
      %v537 = vld [vmem:[%s500 + $0x68] sm:$0xff]
      %v538 = vld [vmem:[%s500 + $0x70] sm:$0x33]
      %v539 = vunpack.c.l.bf16 %v524
      %v540 = vunpack.c.h.bf16 %v524
      %v541 = vunpack.c.l.bf16 %v525
      %v542 = vunpack.c.h.bf16 %v525
      %v543 = vunpack.c.l.bf16 %v526
      %v544 = vunpack.c.h.bf16 %v526
      %v545 = vunpack.c.l.bf16 %v527
      %v546 = vunpack.c.h.bf16 %v527
      %v547 = vunpack.c.l.bf16 %v528
      %v548 = vunpack.c.h.bf16 %v528
      %v549 = vunpack.c.l.bf16 %v529
      %v550 = vunpack.c.h.bf16 %v529
      %v551 = vunpack.c.l.bf16 %v530
      %v552 = vunpack.c.h.bf16 %v530
      %v553 = vunpack.c.l.bf16 %v531
      %v554 = vunpack.c.h.bf16 %v531
      %v555 = vunpack.c.l.bf16 %v532
      %v556 = vunpack.c.h.bf16 %v532
      %v557 = vunpack.c.l.bf16 %v533
      %v558 = vunpack.c.h.bf16 %v533
      %v559 = vunpack.c.l.bf16 %v534
      %v560 = vunpack.c.h.bf16 %v534
      %v561 = vunpack.c.l.bf16 %v535
      %v562 = vunpack.c.h.bf16 %v535
      %v563 = vunpack.c.l.bf16 %v536
      %v564 = vunpack.c.h.bf16 %v536
      %v565 = vunpack.c.l.bf16 %v537
      %v566 = vunpack.c.h.bf16 %v537
      %v567 = vunpack.c.l.bf16 %v538
      %v568 = vunpack.c.h.bf16 %v538
      %v569 = vld [vmem:[%s3] sm:$0x3]
      %v570 = vld [vmem:[%s4] sm:$0x3]
      %v571 = vld [vmem:[%s5] sm:$0xff]
      %v572 = vld [vmem:[%s5 + $0x8] sm:$0xff]
      %v573 = vld [vmem:[%s5 + $0x10] sm:$0xff]
      %v574 = vld [vmem:[%s5 + $0x18] sm:$0xff]
      %v575 = vld [vmem:[%s5 + $0x20] sm:$0xff]
      %v576 = vld [vmem:[%s5 + $0x28] sm:$0xff]
      %v577 = vld [vmem:[%s5 + $0x30] sm:$0xff]
      %v578 = vld [vmem:[%s5 + $0x38] sm:$0xff]
      %v579 = vld [vmem:[%s5 + $0x40] sm:$0xff]
      %v580 = vld [vmem:[%s5 + $0x48] sm:$0xff]
      %v581 = vld [vmem:[%s5 + $0x50] sm:$0xff]
      %v582 = vld [vmem:[%s5 + $0x58] sm:$0xff]
      %v583 = vld [vmem:[%s5 + $0x60] sm:$0xff]
      %v584 = vld [vmem:[%s5 + $0x68] sm:$0xff]
      %v585 = vld [vmem:[%s5 + $0x70] sm:$0xff]
      %v586 = vld [vmem:[%s5 + $0x78] sm:$0xff]
      %v587 = vld [vmem:[%s5 + $0x80] sm:$0xff]
      %v588 = vld [vmem:[%s5 + $0x88] sm:$0xff]
      %v589 = vld [vmem:[%s5 + $0x90] sm:$0xff]
      %v590 = vld [vmem:[%s5 + $0x98] sm:$0xff]
      %v591 = vld [vmem:[%s5 + $0xa0] sm:$0xff]
      %v592 = vld [vmem:[%s5 + $0xa8] sm:$0xff]
      %v593 = vld [vmem:[%s5 + $0xb0] sm:$0xff]
      %v594 = vld [vmem:[%s5 + $0xb8] sm:$0xff]
      %v595 = vld [vmem:[%s5 + $0xc0] sm:$0xff]
      %v596 = vld [vmem:[%s5 + $0xc8] sm:$0xff]
      %v597 = vld [vmem:[%s5 + $0xd0] sm:$0xff]
      %v598 = vld [vmem:[%s5 + $0xd8] sm:$0xff]
      %v599 = vld [vmem:[%s5 + $0xe0] sm:$0xff]
      %v600 = vld [vmem:[%s5 + $0xe8] sm:$0xff]
      %v601 = vld [vmem:[%s5 + $0xf0] sm:$0xff]
      %v602 = vld [vmem:[%s5 + $0xf8] sm:$0xff]
      %v603 = vld [vmem:[%s5 + $0x100] sm:$0xff]
      %v604 = vld [vmem:[%s5 + $0x108] sm:$0xff]
      %v605 = vld [vmem:[%s5 + $0x110] sm:$0xff]
      %v606 = vld [vmem:[%s5 + $0x118] sm:$0xff]
      %v607 = vld [vmem:[%s5 + $0x120] sm:$0xff]
      %v608 = vld [vmem:[%s5 + $0x128] sm:$0xff]
      %v609 = vld [vmem:[%s5 + $0x130] sm:$0xff]
      %v610 = vld [vmem:[%s5 + $0x138] sm:$0xff]
      %v611 = vld [vmem:[%s5 + $0x140] sm:$0xff]
      %v612 = vld [vmem:[%s5 + $0x148] sm:$0xff]
      %v613 = vld [vmem:[%s5 + $0x150] sm:$0xff]
      %v614 = vld [vmem:[%s5 + $0x158] sm:$0xff]
      %v615 = vld [vmem:[%s5 + $0x160] sm:$0xff]
      %v616 = vld [vmem:[%s5 + $0x168] sm:$0xff]
      %v617 = vld [vmem:[%s5 + $0x170] sm:$0xff]
      %v618 = vld [vmem:[%s5 + $0x178] sm:$0xff]
      %v619 = vadd.f32 %v539, %v541
      %v620 = vadd.f32 %v619, %v543
      %v621 = vadd.f32 %v620, %v545
      %v622 = vadd.f32 %v621, %v547
      %v623 = vadd.f32 %v622, %v549
      %v624 = vadd.f32 %v623, %v551
      %v625 = vadd.f32 %v624, %v553
      %v626 = vadd.f32 %v625, %v555
      %v627 = vadd.f32 %v626, %v557
      %v628 = vadd.f32 %v627, %v559
      %v629 = vadd.f32 %v628, %v561
      %v630 = vadd.f32 %v629, %v563
      %v631 = vadd.f32 %v630, %v565
      %vm632 = vcmask 1042432
      %v633 = vsel %vm632, %v567, 0.0
      %v634 = vadd.f32 %v631, %v633
      %v635 = vrot.slane %v634, 4
      %v636 = vadd.f32 %v634, %v635
      %v637 = vrot.slane %v636, 2
      %v638 = vadd.f32 %v636, %v637
      %v639 = vrot.slane %v638, 1
      %v640 = vadd.f32 %v638, %v639
      %vm641 = vcmask 523264
      %v642 = vsel %vm641, %v540, 0.0
      %v643 = vsel %vm641, %v542, 0.0
      %v644 = vadd.f32 %v642, %v643
      %v645 = vsel %vm641, %v544, 0.0
      %v646 = vadd.f32 %v644, %v645
      %v647 = vsel %vm641, %v546, 0.0
      %v648 = vadd.f32 %v646, %v647
      %v649 = vsel %vm641, %v548, 0.0
      %v650 = vadd.f32 %v648, %v649
      %v651 = vsel %vm641, %v550, 0.0
      %v652 = vadd.f32 %v650, %v651
      %v653 = vsel %vm641, %v552, 0.0
      %v654 = vadd.f32 %v652, %v653
      %v655 = vsel %vm641, %v554, 0.0
      %v656 = vadd.f32 %v654, %v655
      %v657 = vsel %vm641, %v556, 0.0
      %v658 = vadd.f32 %v656, %v657
      %v659 = vsel %vm641, %v558, 0.0
      %v660 = vadd.f32 %v658, %v659
      %v661 = vsel %vm641, %v560, 0.0
      %v662 = vadd.f32 %v660, %v661
      %v663 = vsel %vm641, %v562, 0.0
      %v664 = vadd.f32 %v662, %v663
      %v665 = vsel %vm641, %v564, 0.0
      %v666 = vadd.f32 %v664, %v665
      %v667 = vsel %vm641, %v566, 0.0
      %v668 = vadd.f32 %v666, %v667
      %vm669 = vcmask 518144
      %v670 = vsel %vm669, %v568, 0.0
      %v671 = vadd.f32 %v668, %v670
      %v672 = vrot.slane %v671, 4
      %v673 = vadd.f32 %v671, %v672
      %v674 = vrot.slane %v673, 2
      %v675 = vadd.f32 %v673, %v674
      %v676 = vrot.slane %v675, 1
      %v677 = vadd.f32 %v675, %v676
      %v678 = vmul.f32 %v539, %v539
      %v679 = vmul.f32 %v540, %v540
      %v680 = vmul.f32 %v541, %v541
      %v681 = vmul.f32 %v542, %v542
      %v682 = vmul.f32 %v543, %v543
      %v683 = vmul.f32 %v544, %v544
      %v684 = vmul.f32 %v545, %v545
      %v685 = vmul.f32 %v546, %v546
      %v686 = vmul.f32 %v547, %v547
      %v687 = vmul.f32 %v548, %v548
      %v688 = vmul.f32 %v549, %v549
      %v689 = vmul.f32 %v550, %v550
      %v690 = vmul.f32 %v551, %v551
      %v691 = vmul.f32 %v552, %v552
      %v692 = vmul.f32 %v553, %v553
      %v693 = vmul.f32 %v554, %v554
      %v694 = vmul.f32 %v555, %v555
      %v695 = vmul.f32 %v556, %v556
      %v696 = vmul.f32 %v557, %v557
      %v697 = vmul.f32 %v558, %v558
      %v698 = vmul.f32 %v559, %v559
      %v699 = vmul.f32 %v560, %v560
      %v700 = vmul.f32 %v561, %v561
      %v701 = vmul.f32 %v562, %v562
      %v702 = vmul.f32 %v563, %v563
      %v703 = vmul.f32 %v564, %v564
      %v704 = vmul.f32 %v565, %v565
      %v705 = vmul.f32 %v566, %v566
      %v706 = vmul.f32 %v567, %v567
      %v707 = vmul.f32 %v568, %v568
      %v708 = vadd.f32 %v678, %v680
      %v709 = vadd.f32 %v708, %v682
      %v710 = vadd.f32 %v709, %v684
      %v711 = vadd.f32 %v710, %v686
      %v712 = vadd.f32 %v711, %v688
      %v713 = vadd.f32 %v712, %v690
      %v714 = vadd.f32 %v713, %v692
      %v715 = vadd.f32 %v714, %v694
      %v716 = vadd.f32 %v715, %v696
      %v717 = vadd.f32 %v716, %v698
      %v718 = vadd.f32 %v717, %v700
      %v719 = vadd.f32 %v718, %v702
      %v720 = vadd.f32 %v719, %v704
      %v721 = vsel %vm632, %v706, 0.0
      %v722 = vadd.f32 %v720, %v721
      %v723 = vrot.slane %v722, 4
      %v724 = vadd.f32 %v722, %v723
      %v725 = vrot.slane %v724, 2
      %v726 = vadd.f32 %v724, %v725
      %v727 = vrot.slane %v726, 1
      %v728 = vadd.f32 %v726, %v727
      %v729 = vsel %vm641, %v679, 0.0
      %v730 = vsel %vm641, %v681, 0.0
      %v731 = vadd.f32 %v729, %v730
      %v732 = vsel %vm641, %v683, 0.0
      %v733 = vadd.f32 %v731, %v732
      %v734 = vsel %vm641, %v685, 0.0
      %v735 = vadd.f32 %v733, %v734
      %v736 = vsel %vm641, %v687, 0.0
      %v737 = vadd.f32 %v735, %v736
      %v738 = vsel %vm641, %v689, 0.0
      %v739 = vadd.f32 %v737, %v738
      %v740 = vsel %vm641, %v691, 0.0
      %v741 = vadd.f32 %v739, %v740
      %v742 = vsel %vm641, %v693, 0.0
      %v743 = vadd.f32 %v741, %v742
      %v744 = vsel %vm641, %v695, 0.0
      %v745 = vadd.f32 %v743, %v744
      %v746 = vsel %vm641, %v697, 0.0
      %v747 = vadd.f32 %v745, %v746
      %v748 = vsel %vm641, %v699, 0.0
      %v749 = vadd.f32 %v747, %v748
      %v750 = vsel %vm641, %v701, 0.0
      %v751 = vadd.f32 %v749, %v750
      %v752 = vsel %vm641, %v703, 0.0
      %v753 = vadd.f32 %v751, %v752
      %v754 = vsel %vm641, %v705, 0.0
      %v755 = vadd.f32 %v753, %v754
      %v756 = vsel %vm669, %v707, 0.0
      %v757 = vadd.f32 %v755, %v756
      %v758 = vrot.slane %v757, 4
      %v759 = vadd.f32 %v757, %v758
      %v760 = vrot.slane %v759, 2
      %v761 = vadd.f32 %v759, %v760
      %v762 = vrot.slane %v761, 1
      %v763 = vadd.f32 %v761, %v762
      %v765 = vsel %vm641, %v677, 0
      %767 = vmatprep.subr.mxu0 %v572
      %768 = vmatpush1.msra.mxu0 %v571
      %769 = vmatprep.subr.mxu0 %v574
      %770 = vmatpush1.msra.mxu0 %v573
      %771 = vmatprep.subr.mxu0 %v576
      %772 = vmatpush1.msra.mxu0 %v575
      %773 = vmatprep.subr.mxu0 %v578
      %774 = vmatpush1.msra.mxu0 %v577
      %775 = vmatprep.subr.mxu0 %v580
      %776 = vmatpush1.msra.mxu0 %v579
      %777 = vmatprep.subr.mxu0 %v582
      %778 = vmatpush1.msra.mxu0 %v581
      %779 = vmatprep.subr.mxu0 %v584
      %780 = vmatpush1.msra.mxu0 %v583
      %781 = vmatprep.subr.mxu0 %v586
      %782 = vmatpush1.msra.mxu0 %v585
      %783 = vmatprep.subr.mxu0 %v588
      %784 = vmatpush1.msra.mxu0 %v587
      %785 = vmatprep.subr.mxu0 %v590
      %786 = vmatpush1.msra.mxu0 %v589
      %787 = vmatprep.subr.mxu0 %v592
      %788 = vmatpush1.msra.mxu0 %v591
      %789 = vmatprep.subr.mxu0 %v594
      %790 = vmatpush1.msra.mxu0 %v593
      %791 = vmatprep.subr.mxu0 %v596
      %792 = vmatpush1.msra.mxu0 %v595
      %793 = vmatprep.subr.mxu0 %v598
      %794 = vmatpush1.msra.mxu0 %v597
      %795 = vmatprep.subr.mxu0 %v600
      %796 = vmatpush1.msra.mxu0 %v599
      %797 = vmatprep.subr.mxu0 %v602
      %798 = vmatpush1.msra.mxu0 %v601
      %799 = vmatprep.subr.mxu0 %v604
      %800 = vmatpush1.msra.mxu0 %v603
      %801 = vmatprep.subr.mxu0 %v606
      %802 = vmatpush1.msra.mxu0 %v605
      %803 = vmatprep.subr.mxu0 %v608
      %804 = vmatpush1.msra.mxu0 %v607
      %805 = vmatprep.subr.mxu0 %v610
      %806 = vmatpush1.msra.mxu0 %v609
      %807 = vmatprep.subr.mxu0 %v612
      %808 = vmatpush1.msra.mxu0 %v611
      %809 = vmatprep.subr.mxu0 %v614
      %810 = vmatpush1.msra.mxu0 %v613
      %811 = vmatprep.subr.mxu0 %v616
      %812 = vmatpush1.msra.mxu0 %v615
      %813 = vmatprep.subr.mxu0 %v618
      %814 = vmatpush1.msra.mxu0 %v617
      %815 = vmatprep.subr.mxu0 0.0
      %816 = vmatpush1.msra.mxu0 0.0
      %817 = vmatprep.subr.mxu0 0.0
      %818 = vmatpush1.msra.mxu0 0.0
      %819 = vmatprep.subr.mxu0 0.0
      %820 = vmatpush1.msra.mxu0 0.0
      %821 = vmatprep.subr.mxu0 0.0
      %822 = vmatpush1.msra.mxu0 0.0
      %823 = vmatprep.subr.mxu0 0.0
      %824 = vmatpush1.msra.mxu0 0.0
      %825 = vmatprep.subr.mxu0 0.0
      %826 = vmatpush1.msra.mxu0 0.0
      %827 = vmatprep.subr.mxu0 0.0
      %828 = vmatpush1.msra.mxu0 0.0
      %829 = vmatprep.subr.mxu0 0.0
      %830 = vmatpush1.msra.mxu0 0.0
      %831 = vmatprep.mubr.f32.mxu0 %v765
      %832 = vmatmul.mubr.f32.gmra.mrb[0].mxu0 %v640
      %v833 = vpop.f32.mrb[0].mxu0
      %v834 = vadd.f32 0.0, %v833
      %v835 = vpop.f32.mrb[0].mxu0
      %v836 = vadd.f32 0.0, %v835
      %837 = vdwg.mxu0
      %v839 = vsel %vm641, %v763, 0
      %841 = vmatprep.subr.mxu0 %v572
      %842 = vmatpush1.msra.mxu0 %v571
      %843 = vmatprep.subr.mxu0 %v574
      %844 = vmatpush1.msra.mxu0 %v573
      %845 = vmatprep.subr.mxu0 %v576
      %846 = vmatpush1.msra.mxu0 %v575
      %847 = vmatprep.subr.mxu0 %v578
      %848 = vmatpush1.msra.mxu0 %v577
      %849 = vmatprep.subr.mxu0 %v580
      %850 = vmatpush1.msra.mxu0 %v579
      %851 = vmatprep.subr.mxu0 %v582
      %852 = vmatpush1.msra.mxu0 %v581
      %853 = vmatprep.subr.mxu0 %v584
      %854 = vmatpush1.msra.mxu0 %v583
      %855 = vmatprep.subr.mxu0 %v586
      %856 = vmatpush1.msra.mxu0 %v585
      %857 = vmatprep.subr.mxu0 %v588
      %858 = vmatpush1.msra.mxu0 %v587
      %859 = vmatprep.subr.mxu0 %v590
      %860 = vmatpush1.msra.mxu0 %v589
      %861 = vmatprep.subr.mxu0 %v592
      %862 = vmatpush1.msra.mxu0 %v591
      %863 = vmatprep.subr.mxu0 %v594
      %864 = vmatpush1.msra.mxu0 %v593
      %865 = vmatprep.subr.mxu0 %v596
      %866 = vmatpush1.msra.mxu0 %v595
      %867 = vmatprep.subr.mxu0 %v598
      %868 = vmatpush1.msra.mxu0 %v597
      %869 = vmatprep.subr.mxu0 %v600
      %870 = vmatpush1.msra.mxu0 %v599
      %871 = vmatprep.subr.mxu0 %v602
      %872 = vmatpush1.msra.mxu0 %v601
      %873 = vmatprep.subr.mxu0 %v604
      %874 = vmatpush1.msra.mxu0 %v603
      %875 = vmatprep.subr.mxu0 %v606
      %876 = vmatpush1.msra.mxu0 %v605
      %877 = vmatprep.subr.mxu0 %v608
      %878 = vmatpush1.msra.mxu0 %v607
      %879 = vmatprep.subr.mxu0 %v610
      %880 = vmatpush1.msra.mxu0 %v609
      %881 = vmatprep.subr.mxu0 %v612
      %882 = vmatpush1.msra.mxu0 %v611
      %883 = vmatprep.subr.mxu0 %v614
      %884 = vmatpush1.msra.mxu0 %v613
      %885 = vmatprep.subr.mxu0 %v616
      %886 = vmatpush1.msra.mxu0 %v615
      %887 = vmatprep.subr.mxu0 %v618
      %888 = vmatpush1.msra.mxu0 %v617
      %889 = vmatprep.subr.mxu0 0.0
      %890 = vmatpush1.msra.mxu0 0.0
      %891 = vmatprep.subr.mxu0 0.0
      %892 = vmatpush1.msra.mxu0 0.0
      %893 = vmatprep.subr.mxu0 0.0
      %894 = vmatpush1.msra.mxu0 0.0
      %895 = vmatprep.subr.mxu0 0.0
      %896 = vmatpush1.msra.mxu0 0.0
      %897 = vmatprep.subr.mxu0 0.0
      %898 = vmatpush1.msra.mxu0 0.0
      %899 = vmatprep.subr.mxu0 0.0
      %900 = vmatpush1.msra.mxu0 0.0
      %901 = vmatprep.subr.mxu0 0.0
      %902 = vmatpush1.msra.mxu0 0.0
      %903 = vmatprep.subr.mxu0 0.0
      %904 = vmatpush1.msra.mxu0 0.0
      %905 = vmatprep.mubr.f32.mxu0 %v839
      %906 = vmatmul.mubr.f32.gmra.mrb[0].mxu0 %v728
      %v907 = vpop.f32.mrb[0].mxu0
      %v908 = vadd.f32 0.0, %v907
      %v909 = vpop.f32.mrb[0].mxu0
      %v910 = vadd.f32 0.0, %v909
      %911 = vdwg.mxu0
      %v912 = vmul.f32 %v834, 0.0026041667
      %v913 = vmul.f32 %v836, 0.0026041667
      %v914 = vmul.f32 %v908, 0.0026041667
      %v915 = vmul.f32 %v910, 0.0026041667
      %v916 = vmul.f32 %v912, %v912
      %v917 = vmul.f32 %v913, %v913
      %v918 = vsub.f32 %v914, %v916
      %v919 = vsub.f32 %v915, %v917
      %v920 = vadd.f32 %v918, 1e-05
      %v921 = vadd.f32 %v919, 1e-05
      %v922 = vrsqrt.pop %v920
      %v923 = vrsqrt.pop %v921
      %v926 = vcombine.low %v922, %v923
      %v928 = vunpack.c.l.s4 1966171168
      %v929 = vunpack.c.0.s8 %v928
      %v930 = vlaneseq
      %v931 = vshrl.u32 %v930, 7
      %v932 = vsub.s32 %v929, %v931
      %v933 = vrot.slane %v926, %v932
      %v935 = vunpack.c.l.s4 1966171168
      %v936 = vunpack.c.0.s8 %v935
      %v937 = vlaneseq
      %v938 = vshrl.u32 %v937, 7
      %v939 = vsub.s32 %v936, %v938
      %v940 = vrot.slane %v933, %v939
      %v942 = vmul.f32 %v569, %v940
      %v944 = vlaneseq
      %v945 = vshrl.u32 %v944, 7
      %v946 = vsub.s32 0, %v945
      %v947 = vrot.slane %v942, %v946
      %v948 = vlaneseq
      %v949 = vshrl.u32 %v948, 7
      %v950 = vsub.s32 1, %v949
      %v951 = vrot.slane %v942, %v950
      %v954 = vmul.f32 %v912, %v947
      %v955 = vmul.f32 %v913, %v951
      %v958 = vcombine.low %v954, %v955
      %v960 = vunpack.c.l.s4 1966171168
      %v961 = vunpack.c.0.s8 %v960
      %v962 = vlaneseq
      %v963 = vshrl.u32 %v962, 7
      %v964 = vsub.s32 %v961, %v963
      %v965 = vrot.slane %v958, %v964
      %v967 = vunpack.c.l.s4 1966171168
      %v968 = vunpack.c.0.s8 %v967
      %v969 = vlaneseq
      %v970 = vshrl.u32 %v969, 7
      %v971 = vsub.s32 %v968, %v970
      %v972 = vrot.slane %v965, %v971
      %v974 = vsub.f32 %v570, %v972
      %v975 = vmul.f32 %v539, %v947
      %v976 = vmul.f32 %v540, %v951
      %v977 = vmul.f32 %v541, %v947
      %v978 = vmul.f32 %v542, %v951
      %v979 = vmul.f32 %v543, %v947
      %v980 = vmul.f32 %v544, %v951
      %v981 = vmul.f32 %v545, %v947
      %v982 = vmul.f32 %v546, %v951
      %v983 = vmul.f32 %v547, %v947
      %v984 = vmul.f32 %v548, %v951
      %v985 = vmul.f32 %v549, %v947
      %v986 = vmul.f32 %v550, %v951
      %v987 = vmul.f32 %v551, %v947
      %v988 = vmul.f32 %v552, %v951
      %v989 = vmul.f32 %v553, %v947
      %v990 = vmul.f32 %v554, %v951
      %v991 = vmul.f32 %v555, %v947
      %v992 = vmul.f32 %v556, %v951
      %v993 = vmul.f32 %v557, %v947
      %v994 = vmul.f32 %v558, %v951
      %v995 = vmul.f32 %v559, %v947
      %v996 = vmul.f32 %v560, %v951
      %v997 = vmul.f32 %v561, %v947
      %v998 = vmul.f32 %v562, %v951
      %v999 = vmul.f32 %v563, %v947
      %v1000 = vmul.f32 %v564, %v951
      %v1001 = vmul.f32 %v565, %v947
      %v1002 = vmul.f32 %v566, %v951
      %v1004 = vlaneseq
      %v1005 = vshrl.u32 %v1004, 7
      %v1006 = vsub.s32 0, %v1005
      %v1007 = vrot.slane %v974, %v1006
      %v1008 = vlaneseq
      %v1009 = vshrl.u32 %v1008, 7
      %v1010 = vsub.s32 1, %v1009
      %v1011 = vrot.slane %v974, %v1010
      %v1014 = vadd.f32 %v975, %v1007
      %v1015 = vadd.f32 %v976, %v1011
      %v1016 = vadd.f32 %v977, %v1007
      %v1017 = vadd.f32 %v978, %v1011
      %v1018 = vadd.f32 %v979, %v1007
      %v1019 = vadd.f32 %v980, %v1011
      %v1020 = vadd.f32 %v981, %v1007
      %v1021 = vadd.f32 %v982, %v1011
      %v1022 = vadd.f32 %v983, %v1007
      %v1023 = vadd.f32 %v984, %v1011
      %v1024 = vadd.f32 %v985, %v1007
      %v1025 = vadd.f32 %v986, %v1011
      %v1026 = vadd.f32 %v987, %v1007
      %v1027 = vadd.f32 %v988, %v1011
      %v1028 = vadd.f32 %v989, %v1007
      %v1029 = vadd.f32 %v990, %v1011
      %v1030 = vadd.f32 %v991, %v1007
      %v1031 = vadd.f32 %v992, %v1011
      %v1032 = vadd.f32 %v993, %v1007
      %v1033 = vadd.f32 %v994, %v1011
      %v1034 = vadd.f32 %v995, %v1007
      %v1035 = vadd.f32 %v996, %v1011
      %v1036 = vadd.f32 %v997, %v1007
      %v1037 = vadd.f32 %v998, %v1011
      %v1038 = vadd.f32 %v999, %v1007
      %v1039 = vadd.f32 %v1000, %v1011
      %v1040 = vadd.f32 %v1001, %v1007
      %v1041 = vadd.f32 %v1002, %v1011
      %v1042 = vxor.u32 %v1014, 2147483648
      %v1043 = vxor.u32 %v1015, 2147483648
      %v1044 = vxor.u32 %v1016, 2147483648
      %v1045 = vxor.u32 %v1017, 2147483648
      %v1046 = vxor.u32 %v1018, 2147483648
      %v1047 = vxor.u32 %v1019, 2147483648
      %v1048 = vxor.u32 %v1020, 2147483648
      %v1049 = vxor.u32 %v1021, 2147483648
      %v1050 = vxor.u32 %v1022, 2147483648
      %v1051 = vxor.u32 %v1023, 2147483648
      %v1052 = vxor.u32 %v1024, 2147483648
      %v1053 = vxor.u32 %v1025, 2147483648
      %v1054 = vxor.u32 %v1026, 2147483648
      %v1055 = vxor.u32 %v1027, 2147483648
      %v1056 = vxor.u32 %v1028, 2147483648
      %v1057 = vxor.u32 %v1029, 2147483648
      %v1058 = vxor.u32 %v1030, 2147483648
      %v1059 = vxor.u32 %v1031, 2147483648
      %v1060 = vxor.u32 %v1032, 2147483648
      %v1061 = vxor.u32 %v1033, 2147483648
      %v1062 = vxor.u32 %v1034, 2147483648
      %v1063 = vxor.u32 %v1035, 2147483648
      %v1064 = vxor.u32 %v1036, 2147483648
      %v1065 = vxor.u32 %v1037, 2147483648
      %v1066 = vxor.u32 %v1038, 2147483648
      %v1067 = vxor.u32 %v1039, 2147483648
      %v1068 = vxor.u32 %v1040, 2147483648
      %v1069 = vxor.u32 %v1041, 2147483648
      %v1070 = vmul.f32 %v1042, 1.442695
      %v1071 = vpow.pop %v1070
      %v1072 = vmul.f32 %v1043, 1.442695
      %v1073 = vpow.pop %v1072
      %v1074 = vmul.f32 %v1044, 1.442695
      %v1075 = vpow.pop %v1074
      %v1076 = vmul.f32 %v1045, 1.442695
      %v1077 = vpow.pop %v1076
      %v1078 = vmul.f32 %v1046, 1.442695
      %v1079 = vpow.pop %v1078
      %v1080 = vmul.f32 %v1047, 1.442695
      %v1081 = vpow.pop %v1080
      %v1082 = vmul.f32 %v1048, 1.442695
      %v1083 = vpow.pop %v1082
      %v1084 = vmul.f32 %v1049, 1.442695
      %v1085 = vpow.pop %v1084
      %v1086 = vmul.f32 %v1050, 1.442695
      %v1087 = vpow.pop %v1086
      %v1088 = vmul.f32 %v1051, 1.442695
      %v1089 = vpow.pop %v1088
      %v1090 = vmul.f32 %v1052, 1.442695
      %v1091 = vpow.pop %v1090
      %v1092 = vmul.f32 %v1053, 1.442695
      %v1093 = vpow.pop %v1092
      %v1094 = vmul.f32 %v1054, 1.442695
      %v1095 = vpow.pop %v1094
      %v1096 = vmul.f32 %v1055, 1.442695
      %v1097 = vpow.pop %v1096
      %v1098 = vmul.f32 %v1056, 1.442695
      %v1099 = vpow.pop %v1098
      %v1100 = vmul.f32 %v1057, 1.442695
      %v1101 = vpow.pop %v1100
      %v1102 = vmul.f32 %v1058, 1.442695
      %v1103 = vpow.pop %v1102
      %v1104 = vmul.f32 %v1059, 1.442695
      %v1105 = vpow.pop %v1104
      %v1106 = vmul.f32 %v1060, 1.442695
      %v1107 = vpow.pop %v1106
      %v1108 = vmul.f32 %v1061, 1.442695
      %v1109 = vpow.pop %v1108
      %v1110 = vmul.f32 %v1062, 1.442695
      %v1111 = vpow.pop %v1110
      %v1112 = vmul.f32 %v1063, 1.442695
      %v1113 = vpow.pop %v1112
      %v1114 = vmul.f32 %v1064, 1.442695
      %v1115 = vpow.pop %v1114
      %v1116 = vmul.f32 %v1065, 1.442695
      %v1117 = vpow.pop %v1116
      %v1118 = vmul.f32 %v1066, 1.442695
      %v1119 = vpow.pop %v1118
      %v1120 = vmul.f32 %v1067, 1.442695
      %v1121 = vpow.pop %v1120
      %v1122 = vmul.f32 %v1068, 1.442695
      %v1123 = vpow.pop %v1122
      %v1124 = vmul.f32 %v1069, 1.442695
      %v1125 = vpow.pop %v1124
      %v1126 = vadd.f32 %v1071, 1.0
      %v1127 = vadd.f32 %v1073, 1.0
      %v1128 = vadd.f32 %v1075, 1.0
      %v1129 = vadd.f32 %v1077, 1.0
      %v1130 = vadd.f32 %v1079, 1.0
      %v1131 = vadd.f32 %v1081, 1.0
      %v1132 = vadd.f32 %v1083, 1.0
      %v1133 = vadd.f32 %v1085, 1.0
      %v1134 = vadd.f32 %v1087, 1.0
      %v1135 = vadd.f32 %v1089, 1.0
      %v1136 = vadd.f32 %v1091, 1.0
      %v1137 = vadd.f32 %v1093, 1.0
      %v1138 = vadd.f32 %v1095, 1.0
      %v1139 = vadd.f32 %v1097, 1.0
      %v1140 = vadd.f32 %v1099, 1.0
      %v1141 = vadd.f32 %v1101, 1.0
      %v1142 = vadd.f32 %v1103, 1.0
      %v1143 = vadd.f32 %v1105, 1.0
      %v1144 = vadd.f32 %v1107, 1.0
      %v1145 = vadd.f32 %v1109, 1.0
      %v1146 = vadd.f32 %v1111, 1.0
      %v1147 = vadd.f32 %v1113, 1.0
      %v1148 = vadd.f32 %v1115, 1.0
      %v1149 = vadd.f32 %v1117, 1.0
      %v1150 = vadd.f32 %v1119, 1.0
      %v1151 = vadd.f32 %v1121, 1.0
      %v1152 = vadd.f32 %v1123, 1.0
      %v1153 = vadd.f32 %v1125, 1.0
      %v1154 = vrcp.pop %v1126
      %v1155 = vmul.f32 1.0, %v1154
      %v1156 = vrcp.pop %v1127
      %v1157 = vmul.f32 1.0, %v1156
      %v1158 = vrcp.pop %v1128
      %v1159 = vmul.f32 1.0, %v1158
      %v1160 = vrcp.pop %v1129
      %v1161 = vmul.f32 1.0, %v1160
      %v1162 = vrcp.pop %v1130
      %v1163 = vmul.f32 1.0, %v1162
      %v1164 = vrcp.pop %v1131
      %v1165 = vmul.f32 1.0, %v1164
      %v1166 = vrcp.pop %v1132
      %v1167 = vmul.f32 1.0, %v1166
      %v1168 = vrcp.pop %v1133
      %v1169 = vmul.f32 1.0, %v1168
      %v1170 = vrcp.pop %v1134
      %v1171 = vmul.f32 1.0, %v1170
      %v1172 = vrcp.pop %v1135
      %v1173 = vmul.f32 1.0, %v1172
      %v1174 = vrcp.pop %v1136
      %v1175 = vmul.f32 1.0, %v1174
      %v1176 = vrcp.pop %v1137
      %v1177 = vmul.f32 1.0, %v1176
      %v1178 = vrcp.pop %v1138
      %v1179 = vmul.f32 1.0, %v1178
      %v1180 = vrcp.pop %v1139
      %v1181 = vmul.f32 1.0, %v1180
      %v1182 = vrcp.pop %v1140
      %v1183 = vmul.f32 1.0, %v1182
      %v1184 = vrcp.pop %v1141
      %v1185 = vmul.f32 1.0, %v1184
      %v1186 = vrcp.pop %v1142
      %v1187 = vmul.f32 1.0, %v1186
      %v1188 = vrcp.pop %v1143
      %v1189 = vmul.f32 1.0, %v1188
      %v1190 = vrcp.pop %v1144
      %v1191 = vmul.f32 1.0, %v1190
      %v1192 = vrcp.pop %v1145
      %v1193 = vmul.f32 1.0, %v1192
      %v1194 = vrcp.pop %v1146
      %v1195 = vmul.f32 1.0, %v1194
      %v1196 = vrcp.pop %v1147
      %v1197 = vmul.f32 1.0, %v1196
      %v1198 = vrcp.pop %v1148
      %v1199 = vmul.f32 1.0, %v1198
      %v1200 = vrcp.pop %v1149
      %v1201 = vmul.f32 1.0, %v1200
      %v1202 = vrcp.pop %v1150
      %v1203 = vmul.f32 1.0, %v1202
      %v1204 = vrcp.pop %v1151
      %v1205 = vmul.f32 1.0, %v1204
      %v1206 = vrcp.pop %v1152
      %v1207 = vmul.f32 1.0, %v1206
      %v1208 = vrcp.pop %v1153
      %v1209 = vmul.f32 1.0, %v1208
      %v1210 = vmul.f32 %v1014, %v1155
      %v1211 = vmul.f32 %v1015, %v1157
      %v1212 = vmul.f32 %v1016, %v1159
      %v1213 = vmul.f32 %v1017, %v1161
      %v1214 = vmul.f32 %v1018, %v1163
      %v1215 = vmul.f32 %v1019, %v1165
      %v1216 = vmul.f32 %v1020, %v1167
      %v1217 = vmul.f32 %v1021, %v1169
      %v1218 = vmul.f32 %v1022, %v1171
      %v1219 = vmul.f32 %v1023, %v1173
      %v1220 = vmul.f32 %v1024, %v1175
      %v1221 = vmul.f32 %v1025, %v1177
      %v1222 = vmul.f32 %v1026, %v1179
      %v1223 = vmul.f32 %v1027, %v1181
      %v1224 = vmul.f32 %v1028, %v1183
      %v1225 = vmul.f32 %v1029, %v1185
      %v1226 = vmul.f32 %v1030, %v1187
      %v1227 = vmul.f32 %v1031, %v1189
      %v1228 = vmul.f32 %v1032, %v1191
      %v1229 = vmul.f32 %v1033, %v1193
      %v1230 = vmul.f32 %v1034, %v1195
      %v1231 = vmul.f32 %v1035, %v1197
      %v1232 = vmul.f32 %v1036, %v1199
      %v1233 = vmul.f32 %v1037, %v1201
      %v1234 = vmul.f32 %v1038, %v1203
      %v1235 = vmul.f32 %v1039, %v1205
      %v1236 = vmul.f32 %v1040, %v1207
      %v1237 = vmul.f32 %v1041, %v1209
      %1239 = vset.pattern.permute.xlu0 0
      %1240 = vperm.xlu0 %1239, %v510
      %v1241 = vpop.permute.xlu0 %1240
      %1244 = vset.pattern.permute.xlu0 0
      %1245 = vperm.xlu0 %1244, %v511
      %v1246 = vpop.permute.xlu0 %1245
      %1249 = vset.pattern.permute.xlu0 0
      %1250 = vperm.xlu0 %1249, %v512
      %v1251 = vpop.permute.xlu0 %1250
      %1254 = vset.pattern.permute.xlu0 0
      %1255 = vperm.xlu0 %1254, %v513
      %v1256 = vpop.permute.xlu0 %1255
      %1259 = vset.pattern.permute.xlu0 0
      %1260 = vperm.xlu0 %1259, %v514
      %v1261 = vpop.permute.xlu0 %1260
      %1264 = vset.pattern.permute.xlu0 0
      %1265 = vperm.xlu0 %1264, %v515
      %v1266 = vpop.permute.xlu0 %1265
      %1269 = vset.pattern.permute.xlu0 0
      %1270 = vperm.xlu0 %1269, %v516
      %v1271 = vpop.permute.xlu0 %1270
      %1274 = vset.pattern.permute.xlu0 0
      %1275 = vperm.xlu0 %1274, %v517
      %v1276 = vpop.permute.xlu0 %1275
      %1279 = vset.pattern.permute.xlu0 0
      %1280 = vperm.xlu0 %1279, %v518
      %v1281 = vpop.permute.xlu0 %1280
      %1284 = vset.pattern.permute.xlu0 0
      %1285 = vperm.xlu0 %1284, %v519
      %v1286 = vpop.permute.xlu0 %1285
      %1289 = vset.pattern.permute.xlu0 0
      %1290 = vperm.xlu0 %1289, %v520
      %v1291 = vpop.permute.xlu0 %1290
      %1294 = vset.pattern.permute.xlu0 0
      %1295 = vperm.xlu0 %1294, %v521
      %v1296 = vpop.permute.xlu0 %1295
      %1299 = vset.pattern.permute.xlu0 0
      %1300 = vperm.xlu0 %1299, %v522
      %v1301 = vpop.permute.xlu0 %1300
      %1304 = vset.pattern.permute.xlu0 0
      %1305 = vperm.xlu0 %1304, %v523
      %v1306 = vpop.permute.xlu0 %1305
      %v1308 = vmul.f32 %v1210, %v1241
      %v1309 = vmul.f32 %v1211, %v1241
      %v1310 = vmul.f32 %v1212, %v1246
      %v1311 = vmul.f32 %v1213, %v1246
      %v1312 = vmul.f32 %v1214, %v1251
      %v1313 = vmul.f32 %v1215, %v1251
      %v1314 = vmul.f32 %v1216, %v1256
      %v1315 = vmul.f32 %v1217, %v1256
      %v1316 = vmul.f32 %v1218, %v1261
      %v1317 = vmul.f32 %v1219, %v1261
      %v1318 = vmul.f32 %v1220, %v1266
      %v1319 = vmul.f32 %v1221, %v1266
      %v1320 = vmul.f32 %v1222, %v1271
      %v1321 = vmul.f32 %v1223, %v1271
      %v1322 = vmul.f32 %v1224, %v1276
      %v1323 = vmul.f32 %v1225, %v1276
      %v1324 = vmul.f32 %v1226, %v1281
      %v1325 = vmul.f32 %v1227, %v1281
      %v1326 = vmul.f32 %v1228, %v1286
      %v1327 = vmul.f32 %v1229, %v1286
      %v1328 = vmul.f32 %v1230, %v1291
      %v1329 = vmul.f32 %v1231, %v1291
      %v1330 = vmul.f32 %v1232, %v1296
      %v1331 = vmul.f32 %v1233, %v1296
      %v1332 = vmul.f32 %v1234, %v1301
      %v1333 = vmul.f32 %v1235, %v1301
      %v1334 = vmul.f32 %v1236, %v1306
      %v1335 = vmul.f32 %v1237, %v1306
      %v1336 = vpack.c.bf16 %v1310, %v1308
      %v1337 = vpack.c.bf16 %v1311, %v1309
      %v1338 = vpack.c.bf16 %v1314, %v1312
      %v1339 = vpack.c.bf16 %v1315, %v1313
      %v1340 = vpack.c.bf16 %v1318, %v1316
      %v1341 = vpack.c.bf16 %v1319, %v1317
      %v1342 = vpack.c.bf16 %v1322, %v1320
      %v1343 = vpack.c.bf16 %v1323, %v1321
      %v1344 = vpack.c.bf16 %v1326, %v1324
      %v1345 = vpack.c.bf16 %v1327, %v1325
      %v1346 = vpack.c.bf16 %v1330, %v1328
      %v1347 = vpack.c.bf16 %v1331, %v1329
      %v1348 = vpack.c.bf16 %v1334, %v1332
      %v1349 = vpack.c.bf16 %v1335, %v1333
      %v1350 = vld [vmem:[%s6] sm:$0xff]
      %v1351 = vld [vmem:[%s6 + $0x8] sm:$0xf]
      %v1352 = vld [vmem:[%s6 + $0xc] sm:$0xff]
      %v1353 = vld [vmem:[%s6 + $0x14] sm:$0xf]
      %v1354 = vld [vmem:[%s6 + $0x18] sm:$0xff]
      %v1355 = vld [vmem:[%s6 + $0x20] sm:$0xf]
      %v1356 = vld [vmem:[%s6 + $0x24] sm:$0xff]
      %v1357 = vld [vmem:[%s6 + $0x2c] sm:$0xf]
      %v1358 = vld [vmem:[%s6 + $0x30] sm:$0xff]
      %v1359 = vld [vmem:[%s6 + $0x38] sm:$0xf]
      %v1360 = vld [vmem:[%s6 + $0x3c] sm:$0xff]
      %v1361 = vld [vmem:[%s6 + $0x44] sm:$0xf]
      %v1362 = vld [vmem:[%s6 + $0x48] sm:$0xff]
      %v1363 = vld [vmem:[%s6 + $0x50] sm:$0xf]
      %v1364 = vld [vmem:[%s6 + $0x54] sm:$0xff]
      %v1365 = vld [vmem:[%s6 + $0x5c] sm:$0xf]
      %v1366 = vld [vmem:[%s6 + $0x60] sm:$0xff]
      %v1367 = vld [vmem:[%s6 + $0x68] sm:$0xf]
      %v1368 = vld [vmem:[%s6 + $0x6c] sm:$0xff]
      %v1369 = vld [vmem:[%s6 + $0x74] sm:$0xf]
      %v1370 = vld [vmem:[%s6 + $0x78] sm:$0xff]
      %v1371 = vld [vmem:[%s6 + $0x80] sm:$0xf]
      %v1372 = vld [vmem:[%s6 + $0x84] sm:$0xff]
      %v1373 = vld [vmem:[%s6 + $0x8c] sm:$0xf]
      %v1374 = vld [vmem:[%s6 + $0x90] sm:$0xff]
      %v1375 = vld [vmem:[%s6 + $0x98] sm:$0xf]
      %v1376 = vld [vmem:[%s6 + $0x9c] sm:$0xff]
      %v1377 = vld [vmem:[%s6 + $0xa4] sm:$0xf]
      %v1378 = vld [vmem:[%s6 + $0xa8] sm:$0xff]
      %v1379 = vld [vmem:[%s6 + $0xb0] sm:$0xf]
      %v1380 = vld [vmem:[%s6 + $0xb4] sm:$0xff]
      %v1381 = vld [vmem:[%s6 + $0xbc] sm:$0xf]
      %v1382 = vld [vmem:[%s6 + $0xc0] sm:$0xff]
      %v1383 = vld [vmem:[%s6 + $0xc8] sm:$0xf]
      %v1384 = vld [vmem:[%s6 + $0xcc] sm:$0xff]
      %v1385 = vld [vmem:[%s6 + $0xd4] sm:$0xf]
      %v1386 = vld [vmem:[%s6 + $0xd8] sm:$0xff]
      %v1387 = vld [vmem:[%s6 + $0xe0] sm:$0xf]
      %v1388 = vld [vmem:[%s6 + $0xe4] sm:$0xff]
      %v1389 = vld [vmem:[%s6 + $0xec] sm:$0xf]
      %v1390 = vld [vmem:[%s6 + $0xf0] sm:$0xff]
      %v1391 = vld [vmem:[%s6 + $0xf8] sm:$0xf]
      %v1392 = vld [vmem:[%s6 + $0xfc] sm:$0xff]
      %v1393 = vld [vmem:[%s6 + $0x104] sm:$0xf]
      %v1394 = vld [vmem:[%s6 + $0x108] sm:$0xff]
      %v1395 = vld [vmem:[%s6 + $0x110] sm:$0xf]
      %v1396 = vld [vmem:[%s6 + $0x114] sm:$0xff]
      %v1397 = vld [vmem:[%s6 + $0x11c] sm:$0xf]
      %vm1398 = vsmask.f32 5376
      %v1400 = vshrl.u32 %v1336, 16
      %v1402 = vrot.slane %v1400, 2
      %v1403 = vshll.u32 %v1336, 16
      %v1405 = vrot.slane %v1403, 3
      %v1406 = vor.u32 %v1402, %v1405
      %v1408 = vshrl.u32 %v1338, 16
      %v1410 = vrot.slane %v1408, 2
      %v1411 = vshll.u32 %v1338, 16
      %v1413 = vrot.slane %v1411, 3
      %v1414 = vor.u32 %v1410, %v1413
      %v1415 = vsel %vm1398, %v1406, %v1414
      %v1417 = vshrl.u32 %v1337, 16
      %v1419 = vrot.slane %v1417, 2
      %v1420 = vshll.u32 %v1337, 16
      %v1422 = vrot.slane %v1420, 3
      %v1423 = vor.u32 %v1419, %v1422
      %v1425 = vshrl.u32 %v1339, 16
      %v1427 = vrot.slane %v1425, 2
      %v1428 = vshll.u32 %v1339, 16
      %v1430 = vrot.slane %v1428, 3
      %v1431 = vor.u32 %v1427, %v1430
      %v1432 = vsel %vm1398, %v1423, %v1431
      %v1434 = vshrl.u32 %v1340, 16
      %v1436 = vrot.slane %v1434, 2
      %v1437 = vshll.u32 %v1340, 16
      %v1439 = vrot.slane %v1437, 3
      %v1440 = vor.u32 %v1436, %v1439
      %v1441 = vsel %vm1398, %v1414, %v1440
      %v1443 = vshrl.u32 %v1341, 16
      %v1445 = vrot.slane %v1443, 2
      %v1446 = vshll.u32 %v1341, 16
      %v1448 = vrot.slane %v1446, 3
      %v1449 = vor.u32 %v1445, %v1448
      %v1450 = vsel %vm1398, %v1431, %v1449
      %v1452 = vshrl.u32 %v1342, 16
      %v1454 = vrot.slane %v1452, 2
      %v1455 = vshll.u32 %v1342, 16
      %v1457 = vrot.slane %v1455, 3
      %v1458 = vor.u32 %v1454, %v1457
      %v1459 = vsel %vm1398, %v1440, %v1458
      %v1461 = vshrl.u32 %v1343, 16
      %v1463 = vrot.slane %v1461, 2
      %v1464 = vshll.u32 %v1343, 16
      %v1466 = vrot.slane %v1464, 3
      %v1467 = vor.u32 %v1463, %v1466
      %v1468 = vsel %vm1398, %v1449, %v1467
      %v1470 = vshrl.u32 %v1344, 16
      %v1472 = vrot.slane %v1470, 2
      %v1473 = vshll.u32 %v1344, 16
      %v1475 = vrot.slane %v1473, 3
      %v1476 = vor.u32 %v1472, %v1475
      %v1477 = vsel %vm1398, %v1458, %v1476
      %v1479 = vshrl.u32 %v1345, 16
      %v1481 = vrot.slane %v1479, 2
      %v1482 = vshll.u32 %v1345, 16
      %v1484 = vrot.slane %v1482, 3
      %v1485 = vor.u32 %v1481, %v1484
      %v1486 = vsel %vm1398, %v1467, %v1485
      %v1488 = vshrl.u32 %v1346, 16
      %v1490 = vrot.slane %v1488, 2
      %v1491 = vshll.u32 %v1346, 16
      %v1493 = vrot.slane %v1491, 3
      %v1494 = vor.u32 %v1490, %v1493
      %v1495 = vsel %vm1398, %v1476, %v1494
      %v1497 = vshrl.u32 %v1347, 16
      %v1499 = vrot.slane %v1497, 2
      %v1500 = vshll.u32 %v1347, 16
      %v1502 = vrot.slane %v1500, 3
      %v1503 = vor.u32 %v1499, %v1502
      %v1504 = vsel %vm1398, %v1485, %v1503
      %v1559 = vunpack.c.l.b16 %v1350
      %v1560 = vunpack.c.h.b16 %v1350
      %v1561 = vunpack.c.l.b16 %v1351
      %v1562 = vunpack.c.l.b16 %v1352
      %v1563 = vunpack.c.h.b16 %v1352
      %v1564 = vunpack.c.l.b16 %v1353
      %v1565 = vunpack.c.l.b16 %v1354
      %v1566 = vunpack.c.h.b16 %v1354
      %v1567 = vunpack.c.l.b16 %v1355
      %v1568 = vunpack.c.l.b16 %v1356
      %v1569 = vunpack.c.h.b16 %v1356
      %v1570 = vunpack.c.l.b16 %v1357
      %v1571 = vunpack.c.l.b16 %v1358
      %v1572 = vunpack.c.h.b16 %v1358
      %v1573 = vunpack.c.l.b16 %v1359
      %v1574 = vunpack.c.l.b16 %v1360
      %v1575 = vunpack.c.h.b16 %v1360
      %v1576 = vunpack.c.l.b16 %v1361
      %v1577 = vunpack.c.l.b16 %v1362
      %v1578 = vunpack.c.h.b16 %v1362
      %v1579 = vunpack.c.l.b16 %v1363
      %v1580 = vunpack.c.l.b16 %v1364
      %v1581 = vunpack.c.h.b16 %v1364
      %v1582 = vunpack.c.l.b16 %v1365
      %v1583 = vunpack.c.l.b16 %v1366
      %v1584 = vunpack.c.h.b16 %v1366
      %v1585 = vunpack.c.l.b16 %v1367
      %v1586 = vunpack.c.l.b16 %v1368
      %v1587 = vunpack.c.h.b16 %v1368
      %v1588 = vunpack.c.l.b16 %v1369
      %v1589 = vunpack.c.l.b16 %v1370
      %v1590 = vunpack.c.h.b16 %v1370
      %v1591 = vunpack.c.l.b16 %v1371
      %v1592 = vunpack.c.l.b16 %v1372
      %v1593 = vunpack.c.h.b16 %v1372
      %v1594 = vunpack.c.l.b16 %v1373
      %v1595 = vunpack.c.l.b16 %v1374
      %v1596 = vunpack.c.h.b16 %v1374
      %v1597 = vunpack.c.l.b16 %v1375
      %v1598 = vunpack.c.l.b16 %v1376
      %v1599 = vunpack.c.h.b16 %v1376
      %v1600 = vunpack.c.l.b16 %v1377
      %v1601 = vunpack.c.l.b16 %v1378
      %v1602 = vunpack.c.h.b16 %v1378
      %v1603 = vunpack.c.l.b16 %v1379
      %v1604 = vunpack.c.l.b16 %v1380
      %v1605 = vunpack.c.h.b16 %v1380
      %v1606 = vunpack.c.l.b16 %v1381
      %v1607 = vunpack.c.l.b16 %v1382
      %v1608 = vunpack.c.h.b16 %v1382
      %v1609 = vunpack.c.l.b16 %v1383
      %v1610 = vunpack.c.l.b16 %v1384
      %v1611 = vunpack.c.h.b16 %v1384
      %v1612 = vunpack.c.l.b16 %v1385
      %v1613 = vunpack.c.l.b16 %v1386
      %v1614 = vunpack.c.h.b16 %v1386
      %v1615 = vunpack.c.l.b16 %v1387
      %v1616 = vunpack.c.l.b16 %v1388
      %v1617 = vunpack.c.h.b16 %v1388
      %v1618 = vunpack.c.l.b16 %v1389
      %v1619 = vunpack.c.l.b16 %v1390
      %v1620 = vunpack.c.h.b16 %v1390
      %v1621 = vunpack.c.l.b16 %v1391
      %v1622 = vunpack.c.l.b16 %v1392
      %v1623 = vunpack.c.h.b16 %v1392
      %v1624 = vunpack.c.l.b16 %v1393
      %v1625 = vunpack.c.l.b16 %v1394
      %v1626 = vunpack.c.h.b16 %v1394
      %v1627 = vunpack.c.l.b16 %v1395
      %v1628 = vunpack.c.l.b16 %v1396
      %v1629 = vunpack.c.h.b16 %v1396
      %v1630 = vunpack.c.l.b16 %v1397
      %v1631 = vpack.c.b16 %v1562, %v1559
      %v1632 = vpack.c.b16 %v1563, %v1560
      %v1633 = vpack.c.b16 %v1564, %v1561
      %v1634 = vpack.c.b16 %v1568, %v1565
      %v1635 = vpack.c.b16 %v1569, %v1566
      %v1636 = vpack.c.b16 %v1570, %v1567
      %v1637 = vpack.c.b16 %v1574, %v1571
      %v1638 = vpack.c.b16 %v1575, %v1572
      %v1639 = vpack.c.b16 %v1576, %v1573
      %v1640 = vpack.c.b16 %v1580, %v1577
      %v1641 = vpack.c.b16 %v1581, %v1578
      %v1642 = vpack.c.b16 %v1582, %v1579
      %v1643 = vpack.c.b16 %v1586, %v1583
      %v1644 = vpack.c.b16 %v1587, %v1584
      %v1645 = vpack.c.b16 %v1588, %v1585
      %v1646 = vpack.c.b16 %v1592, %v1589
      %v1647 = vpack.c.b16 %v1593, %v1590
      %v1648 = vpack.c.b16 %v1594, %v1591
      %v1649 = vpack.c.b16 %v1598, %v1595
      %v1650 = vpack.c.b16 %v1599, %v1596
      %v1651 = vpack.c.b16 %v1600, %v1597
      %v1652 = vpack.c.b16 %v1604, %v1601
      %v1653 = vpack.c.b16 %v1605, %v1602
      %v1654 = vpack.c.b16 %v1606, %v1603
      %v1655 = vpack.c.b16 %v1610, %v1607
      %v1656 = vpack.c.b16 %v1611, %v1608
      %v1657 = vpack.c.b16 %v1612, %v1609
      %v1658 = vpack.c.b16 %v1616, %v1613
      %v1659 = vpack.c.b16 %v1617, %v1614
      %v1660 = vpack.c.b16 %v1618, %v1615
      %v1661 = vpack.c.b16 %v1622, %v1619
      %v1662 = vpack.c.b16 %v1623, %v1620
      %v1663 = vpack.c.b16 %v1624, %v1621
      %v1664 = vpack.c.b16 %v1628, %v1625
      %v1665 = vpack.c.b16 %v1629, %v1626
      %v1666 = vpack.c.b16 %v1630, %v1627
      %v1704 = vsel %vm641, %v1432, 0
      %v1707 = vsel %vm641, %v1450, 0
      %v1710 = vsel %vm641, %v1468, 0
      %v1713 = vsel %vm641, %v1486, 0
      %v1716 = vsel %vm641, %v1504, 0
      %v1719 = vsel %vm641, %v1503, 0
      %1721 = vmatprep.subr.bf16.mxu0 %v1632
      %1722 = vmatpush1.bf16.msra.mxu0 %v1631
      %1723 = vmatprep.subr.bf16.mxu0 %v1635
      %1724 = vmatpush1.bf16.msra.mxu0 %v1634
      %1725 = vmatprep.subr.bf16.mxu0 %v1638
      %1726 = vmatpush1.bf16.msra.mxu0 %v1637
      %1727 = vmatprep.subr.bf16.mxu0 %v1641
      %1728 = vmatpush1.bf16.msra.mxu0 %v1640
      %1729 = vmatprep.subr.bf16.mxu0 %v1644
      %1730 = vmatpush1.bf16.msra.mxu0 %v1643
      %1731 = vmatprep.subr.bf16.mxu0 %v1647
      %1732 = vmatpush1.bf16.msra.mxu0 %v1646
      %1733 = vmatprep.subr.bf16.mxu0 %v1650
      %1734 = vmatpush1.bf16.msra.mxu0 %v1649
      %1735 = vmatprep.subr.bf16.mxu0 %v1653
      %1736 = vmatpush1.bf16.msra.mxu0 %v1652
      %1737 = vmatprep.subr.bf16.mxu0 %v1656
      %1738 = vmatpush1.bf16.msra.mxu0 %v1655
      %1739 = vmatprep.subr.bf16.mxu0 %v1659
      %1740 = vmatpush1.bf16.msra.mxu0 %v1658
      %1741 = vmatprep.subr.bf16.mxu0 %v1662
      %1742 = vmatpush1.bf16.msra.mxu0 %v1661
      %1743 = vmatprep.subr.bf16.mxu0 %v1665
      %1744 = vmatpush1.bf16.msra.mxu0 %v1664
      %1745 = vmatprep.subr.bf16.mxu0 0
      %1746 = vmatpush1.bf16.msra.mxu0 0
      %1747 = vmatprep.subr.bf16.mxu0 0
      %1748 = vmatpush1.bf16.msra.mxu0 0
      %1749 = vmatprep.subr.bf16.mxu0 0
      %1750 = vmatpush1.bf16.msra.mxu0 0
      %1751 = vmatprep.subr.bf16.mxu0 0
      %1752 = vmatpush1.bf16.msra.mxu0 0
      %1753 = vmatprep.mubr.bf16.mxu0 %v1704
      %1754 = vmatmul.mubr.bf16.gmra.mrb[0].mxu0 %v1415
      %v1755 = vpop.f32.mrb[0].mxu0
      %v1756 = vadd.f32 0.0, %v1755
      %v1757 = vpop.f32.mrb[0].mxu0
      %v1758 = vadd.f32 0.0, %v1757
      %v1759 = vpop.f32.mrb[0].mxu0
      %v1760 = vadd.f32 0.0, %v1759
      %v1761 = vpop.f32.mrb[0].mxu0
      %v1762 = vadd.f32 0.0, %v1761
      %1763 = vmatprep.mubr.bf16.mxu0 %v1707
      %1764 = vmatmul.mubr.bf16.gmra.mrb[0].mxu0 %v1441
      %v1765 = vpop.f32.mrb[0].mxu0
      %v1766 = vadd.f32 0.0, %v1765
      %v1767 = vpop.f32.mrb[0].mxu0
      %v1768 = vadd.f32 0.0, %v1767
      %v1769 = vpop.f32.mrb[0].mxu0
      %v1770 = vadd.f32 0.0, %v1769
      %v1771 = vpop.f32.mrb[0].mxu0
      %v1772 = vadd.f32 0.0, %v1771
      %1773 = vmatprep.mubr.bf16.mxu0 %v1710
      %1774 = vmatmul.mubr.bf16.gmra.mrb[0].mxu0 %v1459
      %v1775 = vpop.f32.mrb[0].mxu0
      %v1776 = vadd.f32 0.0, %v1775
      %v1777 = vpop.f32.mrb[0].mxu0
      %v1778 = vadd.f32 0.0, %v1777
      %v1779 = vpop.f32.mrb[0].mxu0
      %v1780 = vadd.f32 0.0, %v1779
      %v1781 = vpop.f32.mrb[0].mxu0
      %v1782 = vadd.f32 0.0, %v1781
      %1783 = vmatprep.mubr.bf16.mxu0 %v1713
      %1784 = vmatmul.mubr.bf16.gmra.mrb[0].mxu0 %v1477
      %v1785 = vpop.f32.mrb[0].mxu0
      %v1786 = vadd.f32 0.0, %v1785
      %v1787 = vpop.f32.mrb[0].mxu0
      %v1788 = vadd.f32 0.0, %v1787
      %v1789 = vpop.f32.mrb[0].mxu0
      %v1790 = vadd.f32 0.0, %v1789
      %v1791 = vpop.f32.mrb[0].mxu0
      %v1792 = vadd.f32 0.0, %v1791
      %1793 = vmatprep.mubr.bf16.mxu0 %v1716
      %1794 = vmatmul.mubr.bf16.gmra.mrb[0].mxu0 %v1495
      %v1795 = vpop.f32.mrb[0].mxu0
      %v1796 = vadd.f32 0.0, %v1795
      %v1797 = vpop.f32.mrb[0].mxu0
      %v1798 = vadd.f32 0.0, %v1797
      %v1799 = vpop.f32.mrb[0].mxu0
      %v1800 = vadd.f32 0.0, %v1799
      %v1801 = vpop.f32.mrb[0].mxu0
      %v1802 = vadd.f32 0.0, %v1801
      %1803 = vmatprep.mubr.bf16.mxu0 %v1719
      %1804 = vmatmul.mubr.bf16.gmra.mrb[0].mxu0 %v1494
      %v1805 = vpop.f32.mrb[0].mxu0
      %v1806 = vpop.f32.mrb[0].mxu0
      %v1807 = vadd.f32 0.0, %v1806
      %v1808 = vpop.f32.mrb[0].mxu0
      %v1809 = vpop.f32.mrb[0].mxu0
      %1810 = vdwg.mxu0
      %1811 = vmatprep.subr.bf16.mxu0 0
      %1812 = vmatpush1.bf16.msra.mxu0 %v1633
      %1813 = vmatprep.subr.bf16.mxu0 0
      %1814 = vmatpush1.bf16.msra.mxu0 %v1636
      %1815 = vmatprep.subr.bf16.mxu0 0
      %1816 = vmatpush1.bf16.msra.mxu0 %v1639
      %1817 = vmatprep.subr.bf16.mxu0 0
      %1818 = vmatpush1.bf16.msra.mxu0 %v1642
      %1819 = vmatprep.subr.bf16.mxu0 0
      %1820 = vmatpush1.bf16.msra.mxu0 %v1645
      %1821 = vmatprep.subr.bf16.mxu0 0
      %1822 = vmatpush1.bf16.msra.mxu0 %v1648
      %1823 = vmatprep.subr.bf16.mxu0 0
      %1824 = vmatpush1.bf16.msra.mxu0 %v1651
      %1825 = vmatprep.subr.bf16.mxu0 0
      %1826 = vmatpush1.bf16.msra.mxu0 %v1654
      %1827 = vmatprep.subr.bf16.mxu0 0
      %1828 = vmatpush1.bf16.msra.mxu0 %v1657
      %1829 = vmatprep.subr.bf16.mxu0 0
      %1830 = vmatpush1.bf16.msra.mxu0 %v1660
      %1831 = vmatprep.subr.bf16.mxu0 0
      %1832 = vmatpush1.bf16.msra.mxu0 %v1663
      %1833 = vmatprep.subr.bf16.mxu0 0
      %1834 = vmatpush1.bf16.msra.mxu0 %v1666
      %1835 = vmatprep.subr.bf16.mxu0 0
      %1836 = vmatpush1.bf16.msra.mxu0 0
      %1837 = vmatprep.subr.bf16.mxu0 0
      %1838 = vmatpush1.bf16.msra.mxu0 0
      %1839 = vmatprep.subr.bf16.mxu0 0
      %1840 = vmatpush1.bf16.msra.mxu0 0
      %1841 = vmatprep.subr.bf16.mxu0 0
      %1842 = vmatpush1.bf16.msra.mxu0 0
      %1843 = vmatprep.mubr.bf16.mxu0 %v1704
      %1844 = vmatmul.mubr.bf16.gmra.mrb[0].mxu0 %v1415
      %v1845 = vpop.f32.mrb[0].mxu0
      %v1846 = vadd.f32 0.0, %v1845
      %v1847 = vpop.f32.mrb[0].mxu0
      %v1848 = vpop.f32.mrb[0].mxu0
      %v1849 = vadd.f32 0.0, %v1848
      %v1850 = vpop.f32.mrb[0].mxu0
      %1851 = vmatprep.mubr.bf16.mxu0 %v1707
      %1852 = vmatmul.mubr.bf16.gmra.mrb[0].mxu0 %v1441
      %v1853 = vpop.f32.mrb[0].mxu0
      %v1854 = vadd.f32 0.0, %v1853
      %v1855 = vpop.f32.mrb[0].mxu0
      %v1856 = vpop.f32.mrb[0].mxu0
      %v1857 = vadd.f32 0.0, %v1856
      %v1858 = vpop.f32.mrb[0].mxu0
      %1859 = vmatprep.mubr.bf16.mxu0 %v1710
      %1860 = vmatmul.mubr.bf16.gmra.mrb[0].mxu0 %v1459
      %v1861 = vpop.f32.mrb[0].mxu0
      %v1862 = vadd.f32 0.0, %v1861
      %v1863 = vpop.f32.mrb[0].mxu0
      %v1864 = vpop.f32.mrb[0].mxu0
      %v1865 = vadd.f32 0.0, %v1864
      %v1866 = vpop.f32.mrb[0].mxu0
      %1867 = vmatprep.mubr.bf16.mxu0 %v1713
      %1868 = vmatmul.mubr.bf16.gmra.mrb[0].mxu0 %v1477
      %v1869 = vpop.f32.mrb[0].mxu0
      %v1870 = vadd.f32 0.0, %v1869
      %v1871 = vpop.f32.mrb[0].mxu0
      %v1872 = vpop.f32.mrb[0].mxu0
      %v1873 = vadd.f32 0.0, %v1872
      %v1874 = vpop.f32.mrb[0].mxu0
      %1875 = vmatprep.mubr.bf16.mxu0 %v1716
      %1876 = vmatmul.mubr.bf16.gmra.mrb[0].mxu0 %v1495
      %v1877 = vpop.f32.mrb[0].mxu0
      %v1878 = vadd.f32 0.0, %v1877
      %v1879 = vpop.f32.mrb[0].mxu0
      %v1880 = vpop.f32.mrb[0].mxu0
      %v1881 = vadd.f32 0.0, %v1880
      %v1882 = vpop.f32.mrb[0].mxu0
      %1883 = vmatprep.mubr.bf16.mxu0 %v1719
      %1884 = vmatmul.mubr.bf16.gmra.mrb[0].mxu0 %v1494
      %v1885 = vpop.f32.mrb[0].mxu0
      %v1886 = vadd.f32 0.0, %v1885
      %v1887 = vpop.f32.mrb[0].mxu0
      %v1888 = vpop.f32.mrb[0].mxu0
      %v1889 = vpop.f32.mrb[0].mxu0
      %1890 = vdwg.mxu0
      %v1891 = vadd.f32 %v1756, 0.0
      %v1892 = vadd.f32 %v1760, 0.0
      %v1893 = vadd.f32 %v1766, 0.0
      %v1894 = vadd.f32 %v1770, 0.0
      %v1895 = vadd.f32 %v1776, 0.0
      %v1896 = vadd.f32 %v1780, 0.0
      %v1897 = vadd.f32 %v1786, 0.0
      %v1898 = vadd.f32 %v1790, 0.0
      %v1899 = vadd.f32 %v1796, 0.0
      %v1900 = vadd.f32 %v1800, 0.0
      %vm1912 = vcmask 1046528
      %v1913 = vrot.slane %v1758, 1
      %v1914 = vrot.slane %v1762, 1
      %v1915 = vsel %vm1912, %v1913, %v1914
      %v1916 = vrot.slane %v1768, 1
      %v1917 = vsel %vm1912, %v1914, %v1916
      %v1918 = vrot.slane %v1772, 1
      %v1919 = vsel %vm1912, %v1916, %v1918
      %v1920 = vrot.slane %v1778, 1
      %v1921 = vsel %vm1912, %v1918, %v1920
      %v1922 = vrot.slane %v1782, 1
      %v1923 = vsel %vm1912, %v1920, %v1922
      %v1924 = vrot.slane %v1788, 1
      %v1925 = vsel %vm1912, %v1922, %v1924
      %v1926 = vrot.slane %v1792, 1
      %v1927 = vsel %vm1912, %v1924, %v1926
      %v1928 = vrot.slane %v1798, 1
      %v1929 = vsel %vm1912, %v1926, %v1928
      %v1930 = vrot.slane %v1802, 1
      %v1931 = vsel %vm1912, %v1928, %v1930
      %v1932 = vrot.slane %v1807, 1
      %v1933 = vsel %vm1912, %v1930, %v1932
      %v1944 = vadd.f32 %v1891, %v1915
      %v1945 = vadd.f32 %v1892, %v1917
      %v1946 = vadd.f32 %v1893, %v1919
      %v1947 = vadd.f32 %v1894, %v1921
      %v1948 = vadd.f32 %v1895, %v1923
      %v1949 = vadd.f32 %v1896, %v1925
      %v1950 = vadd.f32 %v1897, %v1927
      %v1951 = vadd.f32 %v1898, %v1929
      %v1952 = vadd.f32 %v1899, %v1931
      %v1953 = vadd.f32 %v1900, %v1933
      %vm1965 = vcmask 1045504
      %v1966 = vrot.slane %v1846, 2
      %v1967 = vrot.slane %v1849, 2
      %v1968 = vsel %vm1965, %v1966, %v1967
      %v1969 = vrot.slane %v1854, 2
      %v1970 = vsel %vm1965, %v1967, %v1969
      %v1971 = vrot.slane %v1857, 2
      %v1972 = vsel %vm1965, %v1969, %v1971
      %v1973 = vrot.slane %v1862, 2
      %v1974 = vsel %vm1965, %v1971, %v1973
      %v1975 = vrot.slane %v1865, 2
      %v1976 = vsel %vm1965, %v1973, %v1975
      %v1977 = vrot.slane %v1870, 2
      %v1978 = vsel %vm1965, %v1975, %v1977
      %v1979 = vrot.slane %v1873, 2
      %v1980 = vsel %vm1965, %v1977, %v1979
      %v1981 = vrot.slane %v1878, 2
      %v1982 = vsel %vm1965, %v1979, %v1981
      %v1983 = vrot.slane %v1881, 2
      %v1984 = vsel %vm1965, %v1981, %v1983
      %v1985 = vrot.slane %v1886, 2
      %v1986 = vsel %vm1965, %v1983, %v1985
      %v1997 = vadd.f32 %v1944, %v1968
      %v1998 = vadd.f32 %v1945, %v1970
      %v1999 = vadd.f32 %v1946, %v1972
      %v2000 = vadd.f32 %v1947, %v1974
      %v2001 = vadd.f32 %v1948, %v1976
      %v2002 = vadd.f32 %v1949, %v1978
      %v2003 = vadd.f32 %v1950, %v1980
      %v2004 = vadd.f32 %v1951, %v1982
      %v2005 = vadd.f32 %v1952, %v1984
      %v2006 = vadd.f32 %v1953, %v1986
      %s2007 = scalar_lea.vmem %s6, 288
      %v2008 = vld [vmem:[%s2007] sm:$0xff]
      %v2009 = vld [vmem:[%s2007 + $0x8] sm:$0xf]
      %v2010 = vld [vmem:[%s2007 + $0xc] sm:$0xff]
      %v2011 = vld [vmem:[%s2007 + $0x14] sm:$0xf]
      %v2012 = vld [vmem:[%s2007 + $0x18] sm:$0xff]
      %v2013 = vld [vmem:[%s2007 + $0x20] sm:$0xf]
      %v2014 = vld [vmem:[%s2007 + $0x24] sm:$0xff]
      %v2015 = vld [vmem:[%s2007 + $0x2c] sm:$0xf]
      %v2016 = vld [vmem:[%s2007 + $0x30] sm:$0xff]
      %v2017 = vld [vmem:[%s2007 + $0x38] sm:$0xf]
      %v2018 = vld [vmem:[%s2007 + $0x3c] sm:$0xff]
      %v2019 = vld [vmem:[%s2007 + $0x44] sm:$0xf]
      %v2020 = vld [vmem:[%s2007 + $0x48] sm:$0xff]
      %v2021 = vld [vmem:[%s2007 + $0x50] sm:$0xf]
      %v2022 = vld [vmem:[%s2007 + $0x54] sm:$0xff]
      %v2023 = vld [vmem:[%s2007 + $0x5c] sm:$0xf]
      %v2024 = vld [vmem:[%s2007 + $0x60] sm:$0xff]
      %v2025 = vld [vmem:[%s2007 + $0x68] sm:$0xf]
      %v2026 = vld [vmem:[%s2007 + $0x6c] sm:$0xff]
      %v2027 = vld [vmem:[%s2007 + $0x74] sm:$0xf]
      %v2028 = vld [vmem:[%s2007 + $0x78] sm:$0xff]
      %v2029 = vld [vmem:[%s2007 + $0x80] sm:$0xf]
      %v2030 = vld [vmem:[%s2007 + $0x84] sm:$0xff]
      %v2031 = vld [vmem:[%s2007 + $0x8c] sm:$0xf]
      %v2032 = vld [vmem:[%s2007 + $0x90] sm:$0xff]
      %v2033 = vld [vmem:[%s2007 + $0x98] sm:$0xf]
      %v2034 = vld [vmem:[%s2007 + $0x9c] sm:$0xff]
      %v2035 = vld [vmem:[%s2007 + $0xa4] sm:$0xf]
      %v2036 = vld [vmem:[%s2007 + $0xa8] sm:$0xff]
      %v2037 = vld [vmem:[%s2007 + $0xb0] sm:$0xf]
      %v2038 = vld [vmem:[%s2007 + $0xb4] sm:$0xff]
      %v2039 = vld [vmem:[%s2007 + $0xbc] sm:$0xf]
      %v2040 = vld [vmem:[%s2007 + $0xc0] sm:$0xff]
      %v2041 = vld [vmem:[%s2007 + $0xc8] sm:$0xf]
      %v2042 = vld [vmem:[%s2007 + $0xcc] sm:$0xff]
      %v2043 = vld [vmem:[%s2007 + $0xd4] sm:$0xf]
      %v2044 = vld [vmem:[%s2007 + $0xd8] sm:$0xff]
      %v2045 = vld [vmem:[%s2007 + $0xe0] sm:$0xf]
      %v2046 = vld [vmem:[%s2007 + $0xe4] sm:$0xff]
      %v2047 = vld [vmem:[%s2007 + $0xec] sm:$0xf]
      %v2048 = vld [vmem:[%s2007 + $0xf0] sm:$0xff]
      %v2049 = vld [vmem:[%s2007 + $0xf8] sm:$0xf]
      %v2050 = vld [vmem:[%s2007 + $0xfc] sm:$0xff]
      %v2051 = vld [vmem:[%s2007 + $0x104] sm:$0xf]
      %v2052 = vld [vmem:[%s2007 + $0x108] sm:$0xff]
      %v2053 = vld [vmem:[%s2007 + $0x110] sm:$0xf]
      %v2054 = vld [vmem:[%s2007 + $0x114] sm:$0xff]
      %v2055 = vld [vmem:[%s2007 + $0x11c] sm:$0xf]
      %vm2056 = vsmask.f32 256
      %v2057 = vrot.slane %v1400, 7
      %v2058 = vrot.slane %v1408, 7
      %v2059 = vor.u32 %v2058, %v1411
      %v2060 = vsel %vm2056, %v2057, %v2059
      %v2061 = vrot.slane %v1417, 7
      %v2062 = vrot.slane %v1425, 7
      %v2063 = vor.u32 %v2062, %v1428
      %v2064 = vsel %vm2056, %v2061, %v2063
      %v2065 = vrot.slane %v1434, 7
      %v2066 = vor.u32 %v2065, %v1437
      %v2067 = vsel %vm2056, %v2058, %v2066
      %v2068 = vrot.slane %v1443, 7
      %v2069 = vor.u32 %v2068, %v1446
      %v2070 = vsel %vm2056, %v2062, %v2069
      %v2071 = vrot.slane %v1452, 7
      %v2072 = vor.u32 %v2071, %v1455
      %v2073 = vsel %vm2056, %v2065, %v2072
      %v2074 = vrot.slane %v1461, 7
      %v2075 = vor.u32 %v2074, %v1464
      %v2076 = vsel %vm2056, %v2068, %v2075
      %v2077 = vrot.slane %v1470, 7
      %v2078 = vor.u32 %v2077, %v1473
      %v2079 = vsel %vm2056, %v2071, %v2078
      %v2080 = vrot.slane %v1479, 7
      %v2081 = vor.u32 %v2080, %v1482
      %v2082 = vsel %vm2056, %v2074, %v2081
      %v2083 = vrot.slane %v1488, 7
      %v2084 = vor.u32 %v2083, %v1491
      %v2085 = vsel %vm2056, %v2077, %v2084
      %v2086 = vrot.slane %v1497, 7
      %v2087 = vor.u32 %v2086, %v1500
      %v2088 = vsel %vm2056, %v2080, %v2087
      %v2090 = vshll.u32 %v1348, 16
      %v2092 = vsel %vm2056, %v2083, %v2090
      %v2094 = vshll.u32 %v1349, 16
      %v2096 = vsel %vm2056, %v2086, %v2094
      %v2151 = vunpack.c.l.b16 %v2008
      %v2152 = vunpack.c.h.b16 %v2008
      %v2153 = vunpack.c.l.b16 %v2009
      %v2154 = vunpack.c.l.b16 %v2010
      %v2155 = vunpack.c.h.b16 %v2010
      %v2156 = vunpack.c.l.b16 %v2011
      %v2157 = vunpack.c.l.b16 %v2012
      %v2158 = vunpack.c.h.b16 %v2012
      %v2159 = vunpack.c.l.b16 %v2013
      %v2160 = vunpack.c.l.b16 %v2014
      %v2161 = vunpack.c.h.b16 %v2014
      %v2162 = vunpack.c.l.b16 %v2015
      %v2163 = vunpack.c.l.b16 %v2016
      %v2164 = vunpack.c.h.b16 %v2016
      %v2165 = vunpack.c.l.b16 %v2017
      %v2166 = vunpack.c.l.b16 %v2018
      %v2167 = vunpack.c.h.b16 %v2018
      %v2168 = vunpack.c.l.b16 %v2019
      %v2169 = vunpack.c.l.b16 %v2020
      %v2170 = vunpack.c.h.b16 %v2020
      %v2171 = vunpack.c.l.b16 %v2021
      %v2172 = vunpack.c.l.b16 %v2022
      %v2173 = vunpack.c.h.b16 %v2022
      %v2174 = vunpack.c.l.b16 %v2023
      %v2175 = vunpack.c.l.b16 %v2024
      %v2176 = vunpack.c.h.b16 %v2024
      %v2177 = vunpack.c.l.b16 %v2025
      %v2178 = vunpack.c.l.b16 %v2026
      %v2179 = vunpack.c.h.b16 %v2026
      %v2180 = vunpack.c.l.b16 %v2027
      %v2181 = vunpack.c.l.b16 %v2028
      %v2182 = vunpack.c.h.b16 %v2028
      %v2183 = vunpack.c.l.b16 %v2029
      %v2184 = vunpack.c.l.b16 %v2030
      %v2185 = vunpack.c.h.b16 %v2030
      %v2186 = vunpack.c.l.b16 %v2031
      %v2187 = vunpack.c.l.b16 %v2032
      %v2188 = vunpack.c.h.b16 %v2032
      %v2189 = vunpack.c.l.b16 %v2033
      %v2190 = vunpack.c.l.b16 %v2034
      %v2191 = vunpack.c.h.b16 %v2034
      %v2192 = vunpack.c.l.b16 %v2035
      %v2193 = vunpack.c.l.b16 %v2036
      %v2194 = vunpack.c.h.b16 %v2036
      %v2195 = vunpack.c.l.b16 %v2037
      %v2196 = vunpack.c.l.b16 %v2038
      %v2197 = vunpack.c.h.b16 %v2038
      %v2198 = vunpack.c.l.b16 %v2039
      %v2199 = vunpack.c.l.b16 %v2040
      %v2200 = vunpack.c.h.b16 %v2040
      %v2201 = vunpack.c.l.b16 %v2041
      %v2202 = vunpack.c.l.b16 %v2042
      %v2203 = vunpack.c.h.b16 %v2042
      %v2204 = vunpack.c.l.b16 %v2043
      %v2205 = vunpack.c.l.b16 %v2044
      %v2206 = vunpack.c.h.b16 %v2044
      %v2207 = vunpack.c.l.b16 %v2045
      %v2208 = vunpack.c.l.b16 %v2046
      %v2209 = vunpack.c.h.b16 %v2046
      %v2210 = vunpack.c.l.b16 %v2047
      %v2211 = vunpack.c.l.b16 %v2048
      %v2212 = vunpack.c.h.b16 %v2048
      %v2213 = vunpack.c.l.b16 %v2049
      %v2214 = vunpack.c.l.b16 %v2050
      %v2215 = vunpack.c.h.b16 %v2050
      %v2216 = vunpack.c.l.b16 %v2051
      %v2217 = vunpack.c.l.b16 %v2052
      %v2218 = vunpack.c.h.b16 %v2052
      %v2219 = vunpack.c.l.b16 %v2053
      %v2220 = vunpack.c.l.b16 %v2054
      %v2221 = vunpack.c.h.b16 %v2054
      %v2222 = vunpack.c.l.b16 %v2055
      %v2223 = vpack.c.b16 %v2154, %v2151
      %v2224 = vpack.c.b16 %v2155, %v2152
      %v2225 = vpack.c.b16 %v2156, %v2153
      %v2226 = vpack.c.b16 %v2160, %v2157
      %v2227 = vpack.c.b16 %v2161, %v2158
      %v2228 = vpack.c.b16 %v2162, %v2159
      %v2229 = vpack.c.b16 %v2166, %v2163
      %v2230 = vpack.c.b16 %v2167, %v2164
      %v2231 = vpack.c.b16 %v2168, %v2165
      %v2232 = vpack.c.b16 %v2172, %v2169
      %v2233 = vpack.c.b16 %v2173, %v2170
      %v2234 = vpack.c.b16 %v2174, %v2171
      %v2235 = vpack.c.b16 %v2178, %v2175
      %v2236 = vpack.c.b16 %v2179, %v2176
      %v2237 = vpack.c.b16 %v2180, %v2177
      %v2238 = vpack.c.b16 %v2184, %v2181
      %v2239 = vpack.c.b16 %v2185, %v2182
      %v2240 = vpack.c.b16 %v2186, %v2183
      %v2241 = vpack.c.b16 %v2190, %v2187
      %v2242 = vpack.c.b16 %v2191, %v2188
      %v2243 = vpack.c.b16 %v2192, %v2189
      %v2244 = vpack.c.b16 %v2196, %v2193
      %v2245 = vpack.c.b16 %v2197, %v2194
      %v2246 = vpack.c.b16 %v2198, %v2195
      %v2247 = vpack.c.b16 %v2202, %v2199
      %v2248 = vpack.c.b16 %v2203, %v2200
      %v2249 = vpack.c.b16 %v2204, %v2201
      %v2250 = vpack.c.b16 %v2208, %v2205
      %v2251 = vpack.c.b16 %v2209, %v2206
      %v2252 = vpack.c.b16 %v2210, %v2207
      %v2253 = vpack.c.b16 %v2214, %v2211
      %v2254 = vpack.c.b16 %v2215, %v2212
      %v2255 = vpack.c.b16 %v2216, %v2213
      %v2256 = vpack.c.b16 %v2220, %v2217
      %v2257 = vpack.c.b16 %v2221, %v2218
      %v2258 = vpack.c.b16 %v2222, %v2219
      %v2296 = vsel %vm641, %v2064, 0
      %v2299 = vsel %vm641, %v2070, 0
      %v2302 = vsel %vm641, %v2076, 0
      %v2305 = vsel %vm641, %v2082, 0
      %v2308 = vsel %vm641, %v2088, 0
      %v2311 = vsel %vm641, %v2096, 0
      %2313 = vmatprep.subr.bf16.mxu0 %v2224
      %2314 = vmatpush1.bf16.msra.mxu0 %v2223
      %2315 = vmatprep.subr.bf16.mxu0 %v2227
      %2316 = vmatpush1.bf16.msra.mxu0 %v2226
      %2317 = vmatprep.subr.bf16.mxu0 %v2230
      %2318 = vmatpush1.bf16.msra.mxu0 %v2229
      %2319 = vmatprep.subr.bf16.mxu0 %v2233
      %2320 = vmatpush1.bf16.msra.mxu0 %v2232
      %2321 = vmatprep.subr.bf16.mxu0 %v2236
      %2322 = vmatpush1.bf16.msra.mxu0 %v2235
      %2323 = vmatprep.subr.bf16.mxu0 %v2239
      %2324 = vmatpush1.bf16.msra.mxu0 %v2238
      %2325 = vmatprep.subr.bf16.mxu0 %v2242
      %2326 = vmatpush1.bf16.msra.mxu0 %v2241
      %2327 = vmatprep.subr.bf16.mxu0 %v2245
      %2328 = vmatpush1.bf16.msra.mxu0 %v2244
      %2329 = vmatprep.subr.bf16.mxu0 %v2248
      %2330 = vmatpush1.bf16.msra.mxu0 %v2247
      %2331 = vmatprep.subr.bf16.mxu0 %v2251
      %2332 = vmatpush1.bf16.msra.mxu0 %v2250
      %2333 = vmatprep.subr.bf16.mxu0 %v2254
      %2334 = vmatpush1.bf16.msra.mxu0 %v2253
      %2335 = vmatprep.subr.bf16.mxu0 %v2257
      %2336 = vmatpush1.bf16.msra.mxu0 %v2256
      %2337 = vmatprep.subr.bf16.mxu0 0
      %2338 = vmatpush1.bf16.msra.mxu0 0
      %2339 = vmatprep.subr.bf16.mxu0 0
      %2340 = vmatpush1.bf16.msra.mxu0 0
      %2341 = vmatprep.subr.bf16.mxu0 0
      %2342 = vmatpush1.bf16.msra.mxu0 0
      %2343 = vmatprep.subr.bf16.mxu0 0
      %2344 = vmatpush1.bf16.msra.mxu0 0
      %2345 = vmatprep.mubr.bf16.mxu0 %v2296
      %2346 = vmatmul.mubr.bf16.gmra.mrb[0].mxu0 %v2060
      %v2347 = vpop.f32.mrb[0].mxu0
      %v2348 = vadd.f32 0.0, %v2347
      %v2349 = vpop.f32.mrb[0].mxu0
      %v2350 = vadd.f32 0.0, %v2349
      %v2351 = vpop.f32.mrb[0].mxu0
      %v2352 = vadd.f32 0.0, %v2351
      %v2353 = vpop.f32.mrb[0].mxu0
      %v2354 = vadd.f32 0.0, %v2353
      %2355 = vmatprep.mubr.bf16.mxu0 %v2299
      %2356 = vmatmul.mubr.bf16.gmra.mrb[0].mxu0 %v2067
      %v2357 = vpop.f32.mrb[0].mxu0
      %v2358 = vadd.f32 0.0, %v2357
      %v2359 = vpop.f32.mrb[0].mxu0
      %v2360 = vadd.f32 0.0, %v2359
      %v2361 = vpop.f32.mrb[0].mxu0
      %v2362 = vadd.f32 0.0, %v2361
      %v2363 = vpop.f32.mrb[0].mxu0
      %v2364 = vadd.f32 0.0, %v2363
      %2365 = vmatprep.mubr.bf16.mxu0 %v2302
      %2366 = vmatmul.mubr.bf16.gmra.mrb[0].mxu0 %v2073
      %v2367 = vpop.f32.mrb[0].mxu0
      %v2368 = vadd.f32 0.0, %v2367
      %v2369 = vpop.f32.mrb[0].mxu0
      %v2370 = vadd.f32 0.0, %v2369
      %v2371 = vpop.f32.mrb[0].mxu0
      %v2372 = vadd.f32 0.0, %v2371
      %v2373 = vpop.f32.mrb[0].mxu0
      %v2374 = vadd.f32 0.0, %v2373
      %2375 = vmatprep.mubr.bf16.mxu0 %v2305
      %2376 = vmatmul.mubr.bf16.gmra.mrb[0].mxu0 %v2079
      %v2377 = vpop.f32.mrb[0].mxu0
      %v2378 = vadd.f32 0.0, %v2377
      %v2379 = vpop.f32.mrb[0].mxu0
      %v2380 = vadd.f32 0.0, %v2379
      %v2381 = vpop.f32.mrb[0].mxu0
      %v2382 = vadd.f32 0.0, %v2381
      %v2383 = vpop.f32.mrb[0].mxu0
      %v2384 = vadd.f32 0.0, %v2383
      %2385 = vmatprep.mubr.bf16.mxu0 %v2308
      %2386 = vmatmul.mubr.bf16.gmra.mrb[0].mxu0 %v2085
      %v2387 = vpop.f32.mrb[0].mxu0
      %v2388 = vadd.f32 0.0, %v2387
      %v2389 = vpop.f32.mrb[0].mxu0
      %v2390 = vadd.f32 0.0, %v2389
      %v2391 = vpop.f32.mrb[0].mxu0
      %v2392 = vadd.f32 0.0, %v2391
      %v2393 = vpop.f32.mrb[0].mxu0
      %v2394 = vadd.f32 0.0, %v2393
      %2395 = vmatprep.mubr.bf16.mxu0 %v2311
      %2396 = vmatmul.mubr.bf16.gmra.mrb[0].mxu0 %v2092
      %v2397 = vpop.f32.mrb[0].mxu0
      %v2398 = vpop.f32.mrb[0].mxu0
      %v2399 = vadd.f32 0.0, %v2398
      %v2400 = vpop.f32.mrb[0].mxu0
      %v2401 = vpop.f32.mrb[0].mxu0
      %2402 = vdwg.mxu0
      %2403 = vmatprep.subr.bf16.mxu0 0
      %2404 = vmatpush1.bf16.msra.mxu0 %v2225
      %2405 = vmatprep.subr.bf16.mxu0 0
      %2406 = vmatpush1.bf16.msra.mxu0 %v2228
      %2407 = vmatprep.subr.bf16.mxu0 0
      %2408 = vmatpush1.bf16.msra.mxu0 %v2231
      %2409 = vmatprep.subr.bf16.mxu0 0
      %2410 = vmatpush1.bf16.msra.mxu0 %v2234
      %2411 = vmatprep.subr.bf16.mxu0 0
      %2412 = vmatpush1.bf16.msra.mxu0 %v2237
      %2413 = vmatprep.subr.bf16.mxu0 0
      %2414 = vmatpush1.bf16.msra.mxu0 %v2240
      %2415 = vmatprep.subr.bf16.mxu0 0
      %2416 = vmatpush1.bf16.msra.mxu0 %v2243
      %2417 = vmatprep.subr.bf16.mxu0 0
      %2418 = vmatpush1.bf16.msra.mxu0 %v2246
      %2419 = vmatprep.subr.bf16.mxu0 0
      %2420 = vmatpush1.bf16.msra.mxu0 %v2249
      %2421 = vmatprep.subr.bf16.mxu0 0
      %2422 = vmatpush1.bf16.msra.mxu0 %v2252
      %2423 = vmatprep.subr.bf16.mxu0 0
      %2424 = vmatpush1.bf16.msra.mxu0 %v2255
      %2425 = vmatprep.subr.bf16.mxu0 0
      %2426 = vmatpush1.bf16.msra.mxu0 %v2258
      %2427 = vmatprep.subr.bf16.mxu0 0
      %2428 = vmatpush1.bf16.msra.mxu0 0
      %2429 = vmatprep.subr.bf16.mxu0 0
      %2430 = vmatpush1.bf16.msra.mxu0 0
      %2431 = vmatprep.subr.bf16.mxu0 0
      %2432 = vmatpush1.bf16.msra.mxu0 0
      %2433 = vmatprep.subr.bf16.mxu0 0
      %2434 = vmatpush1.bf16.msra.mxu0 0
      %2435 = vmatprep.mubr.bf16.mxu0 %v2296
      %2436 = vmatmul.mubr.bf16.gmra.mrb[0].mxu0 %v2060
      %v2437 = vpop.f32.mrb[0].mxu0
      %v2438 = vadd.f32 0.0, %v2437
      %v2439 = vpop.f32.mrb[0].mxu0
      %v2440 = vpop.f32.mrb[0].mxu0
      %v2441 = vadd.f32 0.0, %v2440
      %v2442 = vpop.f32.mrb[0].mxu0
      %2443 = vmatprep.mubr.bf16.mxu0 %v2299
      %2444 = vmatmul.mubr.bf16.gmra.mrb[0].mxu0 %v2067
      %v2445 = vpop.f32.mrb[0].mxu0
      %v2446 = vadd.f32 0.0, %v2445
      %v2447 = vpop.f32.mrb[0].mxu0
      %v2448 = vpop.f32.mrb[0].mxu0
      %v2449 = vadd.f32 0.0, %v2448
      %v2450 = vpop.f32.mrb[0].mxu0
      %2451 = vmatprep.mubr.bf16.mxu0 %v2302
      %2452 = vmatmul.mubr.bf16.gmra.mrb[0].mxu0 %v2073
      %v2453 = vpop.f32.mrb[0].mxu0
      %v2454 = vadd.f32 0.0, %v2453
      %v2455 = vpop.f32.mrb[0].mxu0
      %v2456 = vpop.f32.mrb[0].mxu0
      %v2457 = vadd.f32 0.0, %v2456
      %v2458 = vpop.f32.mrb[0].mxu0
      %2459 = vmatprep.mubr.bf16.mxu0 %v2305
      %2460 = vmatmul.mubr.bf16.gmra.mrb[0].mxu0 %v2079
      %v2461 = vpop.f32.mrb[0].mxu0
      %v2462 = vadd.f32 0.0, %v2461
      %v2463 = vpop.f32.mrb[0].mxu0
      %v2464 = vpop.f32.mrb[0].mxu0
      %v2465 = vadd.f32 0.0, %v2464
      %v2466 = vpop.f32.mrb[0].mxu0
      %2467 = vmatprep.mubr.bf16.mxu0 %v2308
      %2468 = vmatmul.mubr.bf16.gmra.mrb[0].mxu0 %v2085
      %v2469 = vpop.f32.mrb[0].mxu0
      %v2470 = vadd.f32 0.0, %v2469
      %v2471 = vpop.f32.mrb[0].mxu0
      %v2472 = vpop.f32.mrb[0].mxu0
      %v2473 = vadd.f32 0.0, %v2472
      %v2474 = vpop.f32.mrb[0].mxu0
      %2475 = vmatprep.mubr.bf16.mxu0 %v2311
      %2476 = vmatmul.mubr.bf16.gmra.mrb[0].mxu0 %v2092
      %v2477 = vpop.f32.mrb[0].mxu0
      %v2478 = vadd.f32 0.0, %v2477
      %v2479 = vpop.f32.mrb[0].mxu0
      %v2480 = vpop.f32.mrb[0].mxu0
      %v2481 = vpop.f32.mrb[0].mxu0
      %2482 = vdwg.mxu0
      %v2483 = vadd.f32 %v1997, %v2348
      %v2484 = vadd.f32 %v1998, %v2352
      %v2485 = vadd.f32 %v1999, %v2358
      %v2486 = vadd.f32 %v2000, %v2362
      %v2487 = vadd.f32 %v2001, %v2368
      %v2488 = vadd.f32 %v2002, %v2372
      %v2489 = vadd.f32 %v2003, %v2378
      %v2490 = vadd.f32 %v2004, %v2382
      %v2491 = vadd.f32 %v2005, %v2388
      %v2492 = vadd.f32 %v2006, %v2392
      %v2504 = vrot.slane %v2350, 1
      %v2505 = vrot.slane %v2354, 1
      %v2506 = vsel %vm1912, %v2504, %v2505
      %v2507 = vrot.slane %v2360, 1
      %v2508 = vsel %vm1912, %v2505, %v2507
      %v2509 = vrot.slane %v2364, 1
      %v2510 = vsel %vm1912, %v2507, %v2509
      %v2511 = vrot.slane %v2370, 1
      %v2512 = vsel %vm1912, %v2509, %v2511
      %v2513 = vrot.slane %v2374, 1
      %v2514 = vsel %vm1912, %v2511, %v2513
      %v2515 = vrot.slane %v2380, 1
      %v2516 = vsel %vm1912, %v2513, %v2515
      %v2517 = vrot.slane %v2384, 1
      %v2518 = vsel %vm1912, %v2515, %v2517
      %v2519 = vrot.slane %v2390, 1
      %v2520 = vsel %vm1912, %v2517, %v2519
      %v2521 = vrot.slane %v2394, 1
      %v2522 = vsel %vm1912, %v2519, %v2521
      %v2523 = vrot.slane %v2399, 1
      %v2524 = vsel %vm1912, %v2521, %v2523
      %v2535 = vadd.f32 %v2483, %v2506
      %v2536 = vadd.f32 %v2484, %v2508
      %v2537 = vadd.f32 %v2485, %v2510
      %v2538 = vadd.f32 %v2486, %v2512
      %v2539 = vadd.f32 %v2487, %v2514
      %v2540 = vadd.f32 %v2488, %v2516
      %v2541 = vadd.f32 %v2489, %v2518
      %v2542 = vadd.f32 %v2490, %v2520
      %v2543 = vadd.f32 %v2491, %v2522
      %v2544 = vadd.f32 %v2492, %v2524
      %v2556 = vrot.slane %v2438, 2
      %v2557 = vrot.slane %v2441, 2
      %v2558 = vsel %vm1965, %v2556, %v2557
      %v2559 = vrot.slane %v2446, 2
      %v2560 = vsel %vm1965, %v2557, %v2559
      %v2561 = vrot.slane %v2449, 2
      %v2562 = vsel %vm1965, %v2559, %v2561
      %v2563 = vrot.slane %v2454, 2
      %v2564 = vsel %vm1965, %v2561, %v2563
      %v2565 = vrot.slane %v2457, 2
      %v2566 = vsel %vm1965, %v2563, %v2565
      %v2567 = vrot.slane %v2462, 2
      %v2568 = vsel %vm1965, %v2565, %v2567
      %v2569 = vrot.slane %v2465, 2
      %v2570 = vsel %vm1965, %v2567, %v2569
      %v2571 = vrot.slane %v2470, 2
      %v2572 = vsel %vm1965, %v2569, %v2571
      %v2573 = vrot.slane %v2473, 2
      %v2574 = vsel %vm1965, %v2571, %v2573
      %v2575 = vrot.slane %v2478, 2
      %v2576 = vsel %vm1965, %v2573, %v2575
      %v2587 = vadd.f32 %v2535, %v2558
      %v2588 = vadd.f32 %v2536, %v2560
      %v2589 = vadd.f32 %v2537, %v2562
      %v2590 = vadd.f32 %v2538, %v2564
      %v2591 = vadd.f32 %v2539, %v2566
      %v2592 = vadd.f32 %v2540, %v2568
      %v2593 = vadd.f32 %v2541, %v2570
      %v2594 = vadd.f32 %v2542, %v2572
      %v2595 = vadd.f32 %v2543, %v2574
      %v2596 = vadd.f32 %v2544, %v2576
      %s2597 = scalar_lea.vmem %s6, 576
      %v2598 = vld [vmem:[%s2597] sm:$0xff]
      %v2599 = vld [vmem:[%s2597 + $0x8] sm:$0xf]
      %v2600 = vld [vmem:[%s2597 + $0xc] sm:$0xff]
      %v2601 = vld [vmem:[%s2597 + $0x14] sm:$0xf]
      %v2602 = vld [vmem:[%s2597 + $0x18] sm:$0xff]
      %v2603 = vld [vmem:[%s2597 + $0x20] sm:$0xf]
      %v2604 = vld [vmem:[%s2597 + $0x24] sm:$0xff]
      %v2605 = vld [vmem:[%s2597 + $0x2c] sm:$0xf]
      %v2606 = vld [vmem:[%s2597 + $0x30] sm:$0xff]
      %v2607 = vld [vmem:[%s2597 + $0x38] sm:$0xf]
      %v2608 = vld [vmem:[%s2597 + $0x3c] sm:$0xff]
      %v2609 = vld [vmem:[%s2597 + $0x44] sm:$0xf]
      %v2610 = vld [vmem:[%s2597 + $0x48] sm:$0xff]
      %v2611 = vld [vmem:[%s2597 + $0x50] sm:$0xf]
      %v2612 = vld [vmem:[%s2597 + $0x54] sm:$0xff]
      %v2613 = vld [vmem:[%s2597 + $0x5c] sm:$0xf]
      %v2614 = vld [vmem:[%s2597 + $0x60] sm:$0xff]
      %v2615 = vld [vmem:[%s2597 + $0x68] sm:$0xf]
      %v2616 = vld [vmem:[%s2597 + $0x6c] sm:$0xff]
      %v2617 = vld [vmem:[%s2597 + $0x74] sm:$0xf]
      %v2618 = vld [vmem:[%s2597 + $0x78] sm:$0xff]
      %v2619 = vld [vmem:[%s2597 + $0x80] sm:$0xf]
      %v2620 = vld [vmem:[%s2597 + $0x84] sm:$0xff]
      %v2621 = vld [vmem:[%s2597 + $0x8c] sm:$0xf]
      %v2622 = vld [vmem:[%s2597 + $0x90] sm:$0xff]
      %v2623 = vld [vmem:[%s2597 + $0x98] sm:$0xf]
      %v2624 = vld [vmem:[%s2597 + $0x9c] sm:$0xff]
      %v2625 = vld [vmem:[%s2597 + $0xa4] sm:$0xf]
      %v2626 = vld [vmem:[%s2597 + $0xa8] sm:$0xff]
      %v2627 = vld [vmem:[%s2597 + $0xb0] sm:$0xf]
      %v2628 = vld [vmem:[%s2597 + $0xb4] sm:$0xff]
      %v2629 = vld [vmem:[%s2597 + $0xbc] sm:$0xf]
      %v2630 = vld [vmem:[%s2597 + $0xc0] sm:$0xff]
      %v2631 = vld [vmem:[%s2597 + $0xc8] sm:$0xf]
      %v2632 = vld [vmem:[%s2597 + $0xcc] sm:$0xff]
      %v2633 = vld [vmem:[%s2597 + $0xd4] sm:$0xf]
      %v2634 = vld [vmem:[%s2597 + $0xd8] sm:$0xff]
      %v2635 = vld [vmem:[%s2597 + $0xe0] sm:$0xf]
      %v2636 = vld [vmem:[%s2597 + $0xe4] sm:$0xff]
      %v2637 = vld [vmem:[%s2597 + $0xec] sm:$0xf]
      %v2638 = vld [vmem:[%s2597 + $0xf0] sm:$0xff]
      %v2639 = vld [vmem:[%s2597 + $0xf8] sm:$0xf]
      %v2640 = vld [vmem:[%s2597 + $0xfc] sm:$0xff]
      %v2641 = vld [vmem:[%s2597 + $0x104] sm:$0xf]
      %v2642 = vld [vmem:[%s2597 + $0x108] sm:$0xff]
      %v2643 = vld [vmem:[%s2597 + $0x110] sm:$0xf]
      %v2644 = vld [vmem:[%s2597 + $0x114] sm:$0xff]
      %v2645 = vld [vmem:[%s2597 + $0x11c] sm:$0xf]
      %vm2646 = vsmask.f32 3328
      %v2647 = vrot.slane %v1408, 4
      %v2648 = vrot.slane %v1411, 5
      %v2649 = vor.u32 %v2647, %v2648
      %v2650 = vrot.slane %v1434, 4
      %v2651 = vrot.slane %v1437, 5
      %v2652 = vor.u32 %v2650, %v2651
      %v2653 = vsel %vm2646, %v2649, %v2652
      %v2654 = vrot.slane %v1425, 4
      %v2655 = vrot.slane %v1428, 5
      %v2656 = vor.u32 %v2654, %v2655
      %v2657 = vrot.slane %v1443, 4
      %v2658 = vrot.slane %v1446, 5
      %v2659 = vor.u32 %v2657, %v2658
      %v2660 = vsel %vm2646, %v2656, %v2659
      %v2661 = vrot.slane %v1452, 4
      %v2662 = vrot.slane %v1455, 5
      %v2663 = vor.u32 %v2661, %v2662
      %v2664 = vsel %vm2646, %v2652, %v2663
      %v2665 = vrot.slane %v1461, 4
      %v2666 = vrot.slane %v1464, 5
      %v2667 = vor.u32 %v2665, %v2666
      %v2668 = vsel %vm2646, %v2659, %v2667
      %v2669 = vrot.slane %v1470, 4
      %v2670 = vrot.slane %v1473, 5
      %v2671 = vor.u32 %v2669, %v2670
      %v2672 = vsel %vm2646, %v2663, %v2671
      %v2673 = vrot.slane %v1479, 4
      %v2674 = vrot.slane %v1482, 5
      %v2675 = vor.u32 %v2673, %v2674
      %v2676 = vsel %vm2646, %v2667, %v2675
      %v2677 = vrot.slane %v1488, 4
      %v2678 = vrot.slane %v1491, 5
      %v2679 = vor.u32 %v2677, %v2678
      %v2680 = vsel %vm2646, %v2671, %v2679
      %v2681 = vrot.slane %v1497, 4
      %v2682 = vrot.slane %v1500, 5
      %v2683 = vor.u32 %v2681, %v2682
      %v2684 = vsel %vm2646, %v2675, %v2683
      %v2685 = vshrl.u32 %v1348, 16
      %v2687 = vrot.slane %v2685, 4
      %v2688 = vrot.slane %v2090, 5
      %v2689 = vor.u32 %v2687, %v2688
      %v2690 = vsel %vm2646, %v2679, %v2689
      %v2691 = vshrl.u32 %v1349, 16
      %v2693 = vrot.slane %v2691, 4
      %v2694 = vrot.slane %v2094, 5
      %v2695 = vor.u32 %v2693, %v2694
      %v2696 = vsel %vm2646, %v2683, %v2695
      %v2751 = vunpack.c.l.b16 %v2598
      %v2752 = vunpack.c.h.b16 %v2598
      %v2753 = vunpack.c.l.b16 %v2599
      %v2754 = vunpack.c.l.b16 %v2600
      %v2755 = vunpack.c.h.b16 %v2600
      %v2756 = vunpack.c.l.b16 %v2601
      %v2757 = vunpack.c.l.b16 %v2602
      %v2758 = vunpack.c.h.b16 %v2602
      %v2759 = vunpack.c.l.b16 %v2603
      %v2760 = vunpack.c.l.b16 %v2604
      %v2761 = vunpack.c.h.b16 %v2604
      %v2762 = vunpack.c.l.b16 %v2605
      %v2763 = vunpack.c.l.b16 %v2606
      %v2764 = vunpack.c.h.b16 %v2606
      %v2765 = vunpack.c.l.b16 %v2607
      %v2766 = vunpack.c.l.b16 %v2608
      %v2767 = vunpack.c.h.b16 %v2608
      %v2768 = vunpack.c.l.b16 %v2609
      %v2769 = vunpack.c.l.b16 %v2610
      %v2770 = vunpack.c.h.b16 %v2610
      %v2771 = vunpack.c.l.b16 %v2611
      %v2772 = vunpack.c.l.b16 %v2612
      %v2773 = vunpack.c.h.b16 %v2612
      %v2774 = vunpack.c.l.b16 %v2613
      %v2775 = vunpack.c.l.b16 %v2614
      %v2776 = vunpack.c.h.b16 %v2614
      %v2777 = vunpack.c.l.b16 %v2615
      %v2778 = vunpack.c.l.b16 %v2616
      %v2779 = vunpack.c.h.b16 %v2616
      %v2780 = vunpack.c.l.b16 %v2617
      %v2781 = vunpack.c.l.b16 %v2618
      %v2782 = vunpack.c.h.b16 %v2618
      %v2783 = vunpack.c.l.b16 %v2619
      %v2784 = vunpack.c.l.b16 %v2620
      %v2785 = vunpack.c.h.b16 %v2620
      %v2786 = vunpack.c.l.b16 %v2621
      %v2787 = vunpack.c.l.b16 %v2622
      %v2788 = vunpack.c.h.b16 %v2622
      %v2789 = vunpack.c.l.b16 %v2623
      %v2790 = vunpack.c.l.b16 %v2624
      %v2791 = vunpack.c.h.b16 %v2624
      %v2792 = vunpack.c.l.b16 %v2625
      %v2793 = vunpack.c.l.b16 %v2626
      %v2794 = vunpack.c.h.b16 %v2626
      %v2795 = vunpack.c.l.b16 %v2627
      %v2796 = vunpack.c.l.b16 %v2628
      %v2797 = vunpack.c.h.b16 %v2628
      %v2798 = vunpack.c.l.b16 %v2629
      %v2799 = vunpack.c.l.b16 %v2630
      %v2800 = vunpack.c.h.b16 %v2630
      %v2801 = vunpack.c.l.b16 %v2631
      %v2802 = vunpack.c.l.b16 %v2632
      %v2803 = vunpack.c.h.b16 %v2632
      %v2804 = vunpack.c.l.b16 %v2633
      %v2805 = vunpack.c.l.b16 %v2634
      %v2806 = vunpack.c.h.b16 %v2634
      %v2807 = vunpack.c.l.b16 %v2635
      %v2808 = vunpack.c.l.b16 %v2636
      %v2809 = vunpack.c.h.b16 %v2636
      %v2810 = vunpack.c.l.b16 %v2637
      %v2811 = vunpack.c.l.b16 %v2638
      %v2812 = vunpack.c.h.b16 %v2638
      %v2813 = vunpack.c.l.b16 %v2639
      %v2814 = vunpack.c.l.b16 %v2640
      %v2815 = vunpack.c.h.b16 %v2640
      %v2816 = vunpack.c.l.b16 %v2641
      %v2817 = vunpack.c.l.b16 %v2642
      %v2818 = vunpack.c.h.b16 %v2642
      %v2819 = vunpack.c.l.b16 %v2643
      %v2820 = vunpack.c.l.b16 %v2644
      %v2821 = vunpack.c.h.b16 %v2644
      %v2822 = vunpack.c.l.b16 %v2645
      %v2823 = vpack.c.b16 %v2754, %v2751
      %v2824 = vpack.c.b16 %v2755, %v2752
      %v2825 = vpack.c.b16 %v2756, %v2753
      %v2826 = vpack.c.b16 %v2760, %v2757
      %v2827 = vpack.c.b16 %v2761, %v2758
      %v2828 = vpack.c.b16 %v2762, %v2759
      %v2829 = vpack.c.b16 %v2766, %v2763
      %v2830 = vpack.c.b16 %v2767, %v2764
      %v2831 = vpack.c.b16 %v2768, %v2765
      %v2832 = vpack.c.b16 %v2772, %v2769
      %v2833 = vpack.c.b16 %v2773, %v2770
      %v2834 = vpack.c.b16 %v2774, %v2771
      %v2835 = vpack.c.b16 %v2778, %v2775
      %v2836 = vpack.c.b16 %v2779, %v2776
      %v2837 = vpack.c.b16 %v2780, %v2777
      %v2838 = vpack.c.b16 %v2784, %v2781
      %v2839 = vpack.c.b16 %v2785, %v2782
      %v2840 = vpack.c.b16 %v2786, %v2783
      %v2841 = vpack.c.b16 %v2790, %v2787
      %v2842 = vpack.c.b16 %v2791, %v2788
      %v2843 = vpack.c.b16 %v2792, %v2789
      %v2844 = vpack.c.b16 %v2796, %v2793
      %v2845 = vpack.c.b16 %v2797, %v2794
      %v2846 = vpack.c.b16 %v2798, %v2795
      %v2847 = vpack.c.b16 %v2802, %v2799
      %v2848 = vpack.c.b16 %v2803, %v2800
      %v2849 = vpack.c.b16 %v2804, %v2801
      %v2850 = vpack.c.b16 %v2808, %v2805
      %v2851 = vpack.c.b16 %v2809, %v2806
      %v2852 = vpack.c.b16 %v2810, %v2807
      %v2853 = vpack.c.b16 %v2814, %v2811
      %v2854 = vpack.c.b16 %v2815, %v2812
      %v2855 = vpack.c.b16 %v2816, %v2813
      %v2856 = vpack.c.b16 %v2820, %v2817
      %v2857 = vpack.c.b16 %v2821, %v2818
      %v2858 = vpack.c.b16 %v2822, %v2819
      %v2896 = vsel %vm641, %v2660, 0
      %v2899 = vsel %vm641, %v2668, 0
      %v2902 = vsel %vm641, %v2676, 0
      %v2905 = vsel %vm641, %v2684, 0
      %v2908 = vsel %vm641, %v2696, 0
      %v2911 = vsel %vm641, %v2695, 0
      %2913 = vmatprep.subr.bf16.mxu0 %v2824
      %2914 = vmatpush1.bf16.msra.mxu0 %v2823
      %2915 = vmatprep.subr.bf16.mxu0 %v2827
      %2916 = vmatpush1.bf16.msra.mxu0 %v2826
      %2917 = vmatprep.subr.bf16.mxu0 %v2830
      %2918 = vmatpush1.bf16.msra.mxu0 %v2829
      %2919 = vmatprep.subr.bf16.mxu0 %v2833
      %2920 = vmatpush1.bf16.msra.mxu0 %v2832
      %2921 = vmatprep.subr.bf16.mxu0 %v2836
      %2922 = vmatpush1.bf16.msra.mxu0 %v2835
      %2923 = vmatprep.subr.bf16.mxu0 %v2839
      %2924 = vmatpush1.bf16.msra.mxu0 %v2838
      %2925 = vmatprep.subr.bf16.mxu0 %v2842
      %2926 = vmatpush1.bf16.msra.mxu0 %v2841
      %2927 = vmatprep.subr.bf16.mxu0 %v2845
      %2928 = vmatpush1.bf16.msra.mxu0 %v2844
      %2929 = vmatprep.subr.bf16.mxu0 %v2848
      %2930 = vmatpush1.bf16.msra.mxu0 %v2847
      %2931 = vmatprep.subr.bf16.mxu0 %v2851
      %2932 = vmatpush1.bf16.msra.mxu0 %v2850
      %2933 = vmatprep.subr.bf16.mxu0 %v2854
      %2934 = vmatpush1.bf16.msra.mxu0 %v2853
      %2935 = vmatprep.subr.bf16.mxu0 %v2857
      %2936 = vmatpush1.bf16.msra.mxu0 %v2856
      %2937 = vmatprep.subr.bf16.mxu0 0
      %2938 = vmatpush1.bf16.msra.mxu0 0
      %2939 = vmatprep.subr.bf16.mxu0 0
      %2940 = vmatpush1.bf16.msra.mxu0 0
      %2941 = vmatprep.subr.bf16.mxu0 0
      %2942 = vmatpush1.bf16.msra.mxu0 0
      %2943 = vmatprep.subr.bf16.mxu0 0
      %2944 = vmatpush1.bf16.msra.mxu0 0
      %2945 = vmatprep.mubr.bf16.mxu0 %v2896
      %2946 = vmatmul.mubr.bf16.gmra.mrb[0].mxu0 %v2653
      %v2947 = vpop.f32.mrb[0].mxu0
      %v2948 = vadd.f32 0.0, %v2947
      %v2949 = vpop.f32.mrb[0].mxu0
      %v2950 = vadd.f32 0.0, %v2949
      %v2951 = vpop.f32.mrb[0].mxu0
      %v2952 = vadd.f32 0.0, %v2951
      %v2953 = vpop.f32.mrb[0].mxu0
      %v2954 = vadd.f32 0.0, %v2953
      %2955 = vmatprep.mubr.bf16.mxu0 %v2899
      %2956 = vmatmul.mubr.bf16.gmra.mrb[0].mxu0 %v2664
      %v2957 = vpop.f32.mrb[0].mxu0
      %v2958 = vadd.f32 0.0, %v2957
      %v2959 = vpop.f32.mrb[0].mxu0
      %v2960 = vadd.f32 0.0, %v2959
      %v2961 = vpop.f32.mrb[0].mxu0
      %v2962 = vadd.f32 0.0, %v2961
      %v2963 = vpop.f32.mrb[0].mxu0
      %v2964 = vadd.f32 0.0, %v2963
      %2965 = vmatprep.mubr.bf16.mxu0 %v2902
      %2966 = vmatmul.mubr.bf16.gmra.mrb[0].mxu0 %v2672
      %v2967 = vpop.f32.mrb[0].mxu0
      %v2968 = vadd.f32 0.0, %v2967
      %v2969 = vpop.f32.mrb[0].mxu0
      %v2970 = vadd.f32 0.0, %v2969
      %v2971 = vpop.f32.mrb[0].mxu0
      %v2972 = vadd.f32 0.0, %v2971
      %v2973 = vpop.f32.mrb[0].mxu0
      %v2974 = vadd.f32 0.0, %v2973
      %2975 = vmatprep.mubr.bf16.mxu0 %v2905
      %2976 = vmatmul.mubr.bf16.gmra.mrb[0].mxu0 %v2680
      %v2977 = vpop.f32.mrb[0].mxu0
      %v2978 = vadd.f32 0.0, %v2977
      %v2979 = vpop.f32.mrb[0].mxu0
      %v2980 = vadd.f32 0.0, %v2979
      %v2981 = vpop.f32.mrb[0].mxu0
      %v2982 = vadd.f32 0.0, %v2981
      %v2983 = vpop.f32.mrb[0].mxu0
      %v2984 = vadd.f32 0.0, %v2983
      %2985 = vmatprep.mubr.bf16.mxu0 %v2908
      %2986 = vmatmul.mubr.bf16.gmra.mrb[0].mxu0 %v2690
      %v2987 = vpop.f32.mrb[0].mxu0
      %v2988 = vadd.f32 0.0, %v2987
      %v2989 = vpop.f32.mrb[0].mxu0
      %v2990 = vadd.f32 0.0, %v2989
      %v2991 = vpop.f32.mrb[0].mxu0
      %v2992 = vadd.f32 0.0, %v2991
      %v2993 = vpop.f32.mrb[0].mxu0
      %v2994 = vadd.f32 0.0, %v2993
      %2995 = vmatprep.mubr.bf16.mxu0 %v2911
      %2996 = vmatmul.mubr.bf16.gmra.mrb[0].mxu0 %v2689
      %v2997 = vpop.f32.mrb[0].mxu0
      %v2998 = vpop.f32.mrb[0].mxu0
      %v2999 = vadd.f32 0.0, %v2998
      %v3000 = vpop.f32.mrb[0].mxu0
      %v3001 = vpop.f32.mrb[0].mxu0
      %3002 = vdwg.mxu0
      %3003 = vmatprep.subr.bf16.mxu0 0
      %3004 = vmatpush1.bf16.msra.mxu0 %v2825
      %3005 = vmatprep.subr.bf16.mxu0 0
      %3006 = vmatpush1.bf16.msra.mxu0 %v2828
      %3007 = vmatprep.subr.bf16.mxu0 0
      %3008 = vmatpush1.bf16.msra.mxu0 %v2831
      %3009 = vmatprep.subr.bf16.mxu0 0
      %3010 = vmatpush1.bf16.msra.mxu0 %v2834
      %3011 = vmatprep.subr.bf16.mxu0 0
      %3012 = vmatpush1.bf16.msra.mxu0 %v2837
      %3013 = vmatprep.subr.bf16.mxu0 0
      %3014 = vmatpush1.bf16.msra.mxu0 %v2840
      %3015 = vmatprep.subr.bf16.mxu0 0
      %3016 = vmatpush1.bf16.msra.mxu0 %v2843
      %3017 = vmatprep.subr.bf16.mxu0 0
      %3018 = vmatpush1.bf16.msra.mxu0 %v2846
      %3019 = vmatprep.subr.bf16.mxu0 0
      %3020 = vmatpush1.bf16.msra.mxu0 %v2849
      %3021 = vmatprep.subr.bf16.mxu0 0
      %3022 = vmatpush1.bf16.msra.mxu0 %v2852
      %3023 = vmatprep.subr.bf16.mxu0 0
      %3024 = vmatpush1.bf16.msra.mxu0 %v2855
      %3025 = vmatprep.subr.bf16.mxu0 0
      %3026 = vmatpush1.bf16.msra.mxu0 %v2858
      %3027 = vmatprep.subr.bf16.mxu0 0
      %3028 = vmatpush1.bf16.msra.mxu0 0
      %3029 = vmatprep.subr.bf16.mxu0 0
      %3030 = vmatpush1.bf16.msra.mxu0 0
      %3031 = vmatprep.subr.bf16.mxu0 0
      %3032 = vmatpush1.bf16.msra.mxu0 0
      %3033 = vmatprep.subr.bf16.mxu0 0
      %3034 = vmatpush1.bf16.msra.mxu0 0
      %3035 = vmatprep.mubr.bf16.mxu0 %v2896
      %3036 = vmatmul.mubr.bf16.gmra.mrb[0].mxu0 %v2653
      %v3037 = vpop.f32.mrb[0].mxu0
      %v3038 = vadd.f32 0.0, %v3037
      %v3039 = vpop.f32.mrb[0].mxu0
      %v3040 = vpop.f32.mrb[0].mxu0
      %v3041 = vadd.f32 0.0, %v3040
      %v3042 = vpop.f32.mrb[0].mxu0
      %3043 = vmatprep.mubr.bf16.mxu0 %v2899
      %3044 = vmatmul.mubr.bf16.gmra.mrb[0].mxu0 %v2664
      %v3045 = vpop.f32.mrb[0].mxu0
      %v3046 = vadd.f32 0.0, %v3045
      %v3047 = vpop.f32.mrb[0].mxu0
      %v3048 = vpop.f32.mrb[0].mxu0
      %v3049 = vadd.f32 0.0, %v3048
      %v3050 = vpop.f32.mrb[0].mxu0
      %3051 = vmatprep.mubr.bf16.mxu0 %v2902
      %3052 = vmatmul.mubr.bf16.gmra.mrb[0].mxu0 %v2672
      %v3053 = vpop.f32.mrb[0].mxu0
      %v3054 = vadd.f32 0.0, %v3053
      %v3055 = vpop.f32.mrb[0].mxu0
      %v3056 = vpop.f32.mrb[0].mxu0
      %v3057 = vadd.f32 0.0, %v3056
      %v3058 = vpop.f32.mrb[0].mxu0
      %3059 = vmatprep.mubr.bf16.mxu0 %v2905
      %3060 = vmatmul.mubr.bf16.gmra.mrb[0].mxu0 %v2680
      %v3061 = vpop.f32.mrb[0].mxu0
      %v3062 = vadd.f32 0.0, %v3061
      %v3063 = vpop.f32.mrb[0].mxu0
      %v3064 = vpop.f32.mrb[0].mxu0
      %v3065 = vadd.f32 0.0, %v3064
      %v3066 = vpop.f32.mrb[0].mxu0
      %3067 = vmatprep.mubr.bf16.mxu0 %v2908
      %3068 = vmatmul.mubr.bf16.gmra.mrb[0].mxu0 %v2690
      %v3069 = vpop.f32.mrb[0].mxu0
      %v3070 = vadd.f32 0.0, %v3069
      %v3071 = vpop.f32.mrb[0].mxu0
      %v3072 = vpop.f32.mrb[0].mxu0
      %v3073 = vadd.f32 0.0, %v3072
      %v3074 = vpop.f32.mrb[0].mxu0
      %3075 = vmatprep.mubr.bf16.mxu0 %v2911
      %3076 = vmatmul.mubr.bf16.gmra.mrb[0].mxu0 %v2689
      %v3077 = vpop.f32.mrb[0].mxu0
      %v3078 = vadd.f32 0.0, %v3077
      %v3079 = vpop.f32.mrb[0].mxu0
      %v3080 = vpop.f32.mrb[0].mxu0
      %v3081 = vpop.f32.mrb[0].mxu0
      %3082 = vdwg.mxu0
      %v3083 = vadd.f32 %v2587, %v2948
      %v3084 = vadd.f32 %v2588, %v2952
      %v3085 = vadd.f32 %v2589, %v2958
      %v3086 = vadd.f32 %v2590, %v2962
      %v3087 = vadd.f32 %v2591, %v2968
      %v3088 = vadd.f32 %v2592, %v2972
      %v3089 = vadd.f32 %v2593, %v2978
      %v3090 = vadd.f32 %v2594, %v2982
      %v3091 = vadd.f32 %v2595, %v2988
      %v3092 = vadd.f32 %v2596, %v2992
      %v3104 = vrot.slane %v2950, 1
      %v3105 = vrot.slane %v2954, 1
      %v3106 = vsel %vm1912, %v3104, %v3105
      %v3107 = vrot.slane %v2960, 1
      %v3108 = vsel %vm1912, %v3105, %v3107
      %v3109 = vrot.slane %v2964, 1
      %v3110 = vsel %vm1912, %v3107, %v3109
      %v3111 = vrot.slane %v2970, 1
      %v3112 = vsel %vm1912, %v3109, %v3111
      %v3113 = vrot.slane %v2974, 1
      %v3114 = vsel %vm1912, %v3111, %v3113
      %v3115 = vrot.slane %v2980, 1
      %v3116 = vsel %vm1912, %v3113, %v3115
      %v3117 = vrot.slane %v2984, 1
      %v3118 = vsel %vm1912, %v3115, %v3117
      %v3119 = vrot.slane %v2990, 1
      %v3120 = vsel %vm1912, %v3117, %v3119
      %v3121 = vrot.slane %v2994, 1
      %v3122 = vsel %vm1912, %v3119, %v3121
      %v3123 = vrot.slane %v2999, 1
      %v3124 = vsel %vm1912, %v3121, %v3123
      %v3135 = vadd.f32 %v3083, %v3106
      %v3136 = vadd.f32 %v3084, %v3108
      %v3137 = vadd.f32 %v3085, %v3110
      %v3138 = vadd.f32 %v3086, %v3112
      %v3139 = vadd.f32 %v3087, %v3114
      %v3140 = vadd.f32 %v3088, %v3116
      %v3141 = vadd.f32 %v3089, %v3118
      %v3142 = vadd.f32 %v3090, %v3120
      %v3143 = vadd.f32 %v3091, %v3122
      %v3144 = vadd.f32 %v3092, %v3124
      %v3156 = vrot.slane %v3038, 2
      %v3157 = vrot.slane %v3041, 2
      %v3158 = vsel %vm1965, %v3156, %v3157
      %v3159 = vrot.slane %v3046, 2
      %v3160 = vsel %vm1965, %v3157, %v3159
      %v3161 = vrot.slane %v3049, 2
      %v3162 = vsel %vm1965, %v3159, %v3161
      %v3163 = vrot.slane %v3054, 2
      %v3164 = vsel %vm1965, %v3161, %v3163
      %v3165 = vrot.slane %v3057, 2
      %v3166 = vsel %vm1965, %v3163, %v3165
      %v3167 = vrot.slane %v3062, 2
      %v3168 = vsel %vm1965, %v3165, %v3167
      %v3169 = vrot.slane %v3065, 2
      %v3170 = vsel %vm1965, %v3167, %v3169
      %v3171 = vrot.slane %v3070, 2
      %v3172 = vsel %vm1965, %v3169, %v3171
      %v3173 = vrot.slane %v3073, 2
      %v3174 = vsel %vm1965, %v3171, %v3173
      %v3175 = vrot.slane %v3078, 2
      %v3176 = vsel %vm1965, %v3173, %v3175
      %v3187 = vadd.f32 %v3135, %v3158
      %v3188 = vadd.f32 %v3136, %v3160
      %v3189 = vadd.f32 %v3137, %v3162
      %v3190 = vadd.f32 %v3138, %v3164
      %v3191 = vadd.f32 %v3139, %v3166
      %v3192 = vadd.f32 %v3140, %v3168
      %v3193 = vadd.f32 %v3141, %v3170
      %v3194 = vadd.f32 %v3142, %v3172
      %v3195 = vadd.f32 %v3143, %v3174
      %v3196 = vadd.f32 %v3144, %v3176
      %v3197 = vld [vmem:[%s7] sm:$0x1]
      %v3199 = vlaneseq
      %v3200 = vshrl.u32 %v3199, 7
      %v3201 = vsub.s32 0, %v3200
      %v3202 = vrot.slane %v3197, %v3201
      %v3204 = vadd.f32 %v3187, %v3202
      %v3205 = vadd.f32 %v3188, %v3202
      %v3206 = vadd.f32 %v3189, %v3202
      %v3207 = vadd.f32 %v3190, %v3202
      %v3208 = vadd.f32 %v3191, %v3202
      %v3209 = vadd.f32 %v3192, %v3202
      %v3210 = vadd.f32 %v3193, %v3202
      %v3211 = vadd.f32 %v3194, %v3202
      %v3212 = vadd.f32 %v3195, %v3202
      %v3213 = vadd.f32 %v3196, %v3202
      %v3214 = vld [vmem:[%s503] sm:$0x1]
      %v3216 = vlaneseq
      %v3217 = vshrl.u32 %v3216, 7
      %v3218 = vsub.s32 0, %v3217
      %v3219 = vrot.slane %v3214, %v3218
      %v3221 = vadd.f32 %v3204, %v3219
      %v3222 = vadd.f32 %v3205, %v3219
      %v3223 = vadd.f32 %v3206, %v3219
      %v3224 = vadd.f32 %v3207, %v3219
      %v3225 = vadd.f32 %v3208, %v3219
      %v3226 = vadd.f32 %v3209, %v3219
      %v3227 = vadd.f32 %v3210, %v3219
      %v3228 = vadd.f32 %v3211, %v3219
      %v3229 = vadd.f32 %v3212, %v3219
      %v3230 = vadd.f32 %v3213, %v3219
      %v3231 = vmul.f32 %v3221, %v1251
      %v3232 = vmul.f32 %v3222, %v1256
      %v3233 = vmul.f32 %v3223, %v1261
      %v3234 = vmul.f32 %v3224, %v1266
      %v3235 = vmul.f32 %v3225, %v1271
      %v3236 = vmul.f32 %v3226, %v1276
      %v3237 = vmul.f32 %v3227, %v1281
      %v3238 = vmul.f32 %v3228, %v1286
      %v3239 = vmul.f32 %v3229, %v1291
      %v3240 = vmul.f32 %v3230, %v1296
      %3241 = vst [vmem:[#allocation2] sm:$0xff] 0.0
      %3242 = vst [vmem:[#allocation2 + $0x8] sm:$0xff] 0.0
      %3243 = vst [vmem:[#allocation2 + $0x60] sm:$0xff] 0.0
      %3244 = vst [vmem:[#allocation2 + $0x68] sm:$0xff] 0.0
      %3245 = vst [vmem:[#allocation2 + $0x70] sm:$0x7] 0.0
      %3246 = vst [vmem:[#allocation2 + $0x10] sm:$0xff] %v3231
      %3247 = vst [vmem:[#allocation2 + $0x18] sm:$0xff] %v3232
      %3248 = vst [vmem:[#allocation2 + $0x20] sm:$0xff] %v3233
      %3249 = vst [vmem:[#allocation2 + $0x28] sm:$0xff] %v3234
      %3250 = vst [vmem:[#allocation2 + $0x30] sm:$0xff] %v3235
      %3251 = vst [vmem:[#allocation2 + $0x38] sm:$0xff] %v3236
      %3252 = vst [vmem:[#allocation2 + $0x40] sm:$0xff] %v3237
      %3253 = vst [vmem:[#allocation2 + $0x48] sm:$0xff] %v3238
      %3254 = vst [vmem:[#allocation2 + $0x50] sm:$0xff] %v3239
      %3255 = vst [vmem:[#allocation2 + $0x58] sm:$0xff] %v3240
      %v3256 = vld [vmem:[#allocation2] sm:$0xff]
      %v3257 = vld [vmem:[#allocation2 + $0x8] sm:$0xff]
      %v3258 = vld [vmem:[#allocation2 + $0x10] sm:$0xff]
      %v3259 = vld [vmem:[#allocation2 + $0x18] sm:$0xff]
      %v3260 = vld [vmem:[#allocation2 + $0x20] sm:$0xff]
      %v3261 = vld [vmem:[#allocation2 + $0x28] sm:$0xff]
      %v3262 = vld [vmem:[#allocation2 + $0x30] sm:$0xff]
      %v3263 = vld [vmem:[#allocation2 + $0x38] sm:$0xff]
      %v3264 = vld [vmem:[#allocation2 + $0x40] sm:$0xff]
      %v3265 = vld [vmem:[#allocation2 + $0x48] sm:$0xff]
      %v3266 = vld [vmem:[#allocation2 + $0x50] sm:$0xff]
      %v3267 = vld [vmem:[#allocation2 + $0x58] sm:$0xff]
      %v3268 = vld [vmem:[#allocation2 + $0x60] sm:$0xff]
      %v3269 = vld [vmem:[#allocation2 + $0x68] sm:$0xff]
      %v3270 = vld [vmem:[#allocation2 + $0x70] sm:$0x7]
      %v3271 = vld [vmem:[%s8] sm:$0x1]
      %v3272 = vld [vmem:[%s9] sm:$0x1]
      %v3273 = vld [vmem:[%s10] sm:$0xff]
      %v3274 = vld [vmem:[%s10 + $0x8] sm:$0xff]
      %v3275 = vld [vmem:[%s10 + $0x10] sm:$0xff]
      %v3276 = vld [vmem:[%s10 + $0x18] sm:$0xff]
      %v3277 = vld [vmem:[%s10 + $0x20] sm:$0xff]
      %v3278 = vld [vmem:[%s10 + $0x28] sm:$0xff]
      %v3279 = vld [vmem:[%s10 + $0x30] sm:$0xff]
      %v3280 = vld [vmem:[%s10 + $0x38] sm:$0xff]
      %v3281 = vld [vmem:[%s10 + $0x40] sm:$0xff]
      %v3282 = vld [vmem:[%s10 + $0x48] sm:$0xff]
      %v3283 = vld [vmem:[%s10 + $0x50] sm:$0xff]
      %v3284 = vld [vmem:[%s10 + $0x58] sm:$0xff]
      %v3285 = vld [vmem:[%s10 + $0x60] sm:$0xff]
      %v3286 = vld [vmem:[%s10 + $0x68] sm:$0xff]
      %v3287 = vld [vmem:[%s10 + $0x70] sm:$0xff]
      %v3288 = vld [vmem:[%s10 + $0x78] sm:$0xff]
      %v3289 = vadd.f32 %v3256, %v3257
      %v3290 = vadd.f32 %v3289, %v3258
      %v3291 = vadd.f32 %v3290, %v3259
      %v3292 = vadd.f32 %v3291, %v3260
      %v3293 = vadd.f32 %v3292, %v3261
      %v3294 = vadd.f32 %v3293, %v3262
      %v3295 = vadd.f32 %v3294, %v3263
      %v3296 = vadd.f32 %v3295, %v3264
      %v3297 = vadd.f32 %v3296, %v3265
      %v3298 = vadd.f32 %v3297, %v3266
      %v3299 = vadd.f32 %v3298, %v3267
      %v3300 = vadd.f32 %v3299, %v3268
      %v3301 = vadd.f32 %v3300, %v3269
      %v3302 = vsel %vm632, %v3270, 0.0
      %v3303 = vadd.f32 %v3301, %v3302
      %v3304 = vrot.slane %v3303, 4
      %v3305 = vadd.f32 %v3303, %v3304
      %v3306 = vrot.slane %v3305, 2
      %v3307 = vadd.f32 %v3305, %v3306
      %v3308 = vrot.slane %v3307, 1
      %v3309 = vadd.f32 %v3307, %v3308
      %v3310 = vmul.f32 %v3256, %v3256
      %v3311 = vmul.f32 %v3257, %v3257
      %v3312 = vmul.f32 %v3258, %v3258
      %v3313 = vmul.f32 %v3259, %v3259
      %v3314 = vmul.f32 %v3260, %v3260
      %v3315 = vmul.f32 %v3261, %v3261
      %v3316 = vmul.f32 %v3262, %v3262
      %v3317 = vmul.f32 %v3263, %v3263
      %v3318 = vmul.f32 %v3264, %v3264
      %v3319 = vmul.f32 %v3265, %v3265
      %v3320 = vmul.f32 %v3266, %v3266
      %v3321 = vmul.f32 %v3267, %v3267
      %v3322 = vmul.f32 %v3268, %v3268
      %v3323 = vmul.f32 %v3269, %v3269
      %v3324 = vmul.f32 %v3270, %v3270
      %v3325 = vadd.f32 %v3310, %v3311
      %v3326 = vadd.f32 %v3325, %v3312
      %v3327 = vadd.f32 %v3326, %v3313
      %v3328 = vadd.f32 %v3327, %v3314
      %v3329 = vadd.f32 %v3328, %v3315
      %v3330 = vadd.f32 %v3329, %v3316
      %v3331 = vadd.f32 %v3330, %v3317
      %v3332 = vadd.f32 %v3331, %v3318
      %v3333 = vadd.f32 %v3332, %v3319
      %v3334 = vadd.f32 %v3333, %v3320
      %v3335 = vadd.f32 %v3334, %v3321
      %v3336 = vadd.f32 %v3335, %v3322
      %v3337 = vadd.f32 %v3336, %v3323
      %v3338 = vsel %vm632, %v3324, 0.0
      %v3339 = vadd.f32 %v3337, %v3338
      %v3340 = vrot.slane %v3339, 4
      %v3341 = vadd.f32 %v3339, %v3340
      %v3342 = vrot.slane %v3341, 2
      %v3343 = vadd.f32 %v3341, %v3342
      %v3344 = vrot.slane %v3343, 1
      %v3345 = vadd.f32 %v3343, %v3344
      %3346 = vmatprep.subr.mxu0 0.0
      %3347 = vmatpush1.msra.mxu0 %v3273
      %3348 = vmatprep.subr.mxu0 0.0
      %3349 = vmatpush1.msra.mxu0 %v3274
      %3350 = vmatprep.subr.mxu0 0.0
      %3351 = vmatpush1.msra.mxu0 %v3275
      %3352 = vmatprep.subr.mxu0 0.0
      %3353 = vmatpush1.msra.mxu0 %v3276
      %3354 = vmatprep.subr.mxu0 0.0
      %3355 = vmatpush1.msra.mxu0 %v3277
      %3356 = vmatprep.subr.mxu0 0.0
      %3357 = vmatpush1.msra.mxu0 %v3278
      %3358 = vmatprep.subr.mxu0 0.0
      %3359 = vmatpush1.msra.mxu0 %v3279
      %3360 = vmatprep.subr.mxu0 0.0
      %3361 = vmatpush1.msra.mxu0 %v3280
      %3362 = vmatprep.subr.mxu0 0.0
      %3363 = vmatpush1.msra.mxu0 %v3281
      %3364 = vmatprep.subr.mxu0 0.0
      %3365 = vmatpush1.msra.mxu0 %v3282
      %3366 = vmatprep.subr.mxu0 0.0
      %3367 = vmatpush1.msra.mxu0 %v3283
      %3368 = vmatprep.subr.mxu0 0.0
      %3369 = vmatpush1.msra.mxu0 %v3284
      %3370 = vmatprep.subr.mxu0 0.0
      %3371 = vmatpush1.msra.mxu0 %v3285
      %3372 = vmatprep.subr.mxu0 0.0
      %3373 = vmatpush1.msra.mxu0 %v3286
      %3374 = vmatprep.subr.mxu0 0.0
      %3375 = vmatpush1.msra.mxu0 %v3287
      %3376 = vmatprep.subr.mxu0 0.0
      %3377 = vmatpush1.msra.mxu0 %v3288
      %3378 = vmatprep.subr.mxu0 0.0
      %3379 = vmatpush1.msra.mxu0 0.0
      %3380 = vmatprep.subr.mxu0 0.0
      %3381 = vmatpush1.msra.mxu0 0.0
      %3382 = vmatprep.subr.mxu0 0.0
      %3383 = vmatpush1.msra.mxu0 0.0
      %3384 = vmatprep.subr.mxu0 0.0
      %3385 = vmatpush1.msra.mxu0 0.0
      %3386 = vmatprep.subr.mxu0 0.0
      %3387 = vmatpush1.msra.mxu0 0.0
      %3388 = vmatprep.subr.mxu0 0.0
      %3389 = vmatpush1.msra.mxu0 0.0
      %3390 = vmatprep.subr.mxu0 0.0
      %3391 = vmatpush1.msra.mxu0 0.0
      %3392 = vmatprep.subr.mxu0 0.0
      %3393 = vmatpush1.msra.mxu0 0.0
      %3394 = vmatprep.subr.mxu0 0.0
      %3395 = vmatpush1.msra.mxu0 0.0
      %3396 = vmatprep.subr.mxu0 0.0
      %3397 = vmatpush1.msra.mxu0 0.0
      %3398 = vmatprep.subr.mxu0 0.0
      %3399 = vmatpush1.msra.mxu0 0.0
      %3400 = vmatprep.subr.mxu0 0.0
      %3401 = vmatpush1.msra.mxu0 0.0
      %3402 = vmatprep.subr.mxu0 0.0
      %3403 = vmatpush1.msra.mxu0 0.0
      %3404 = vmatprep.subr.mxu0 0.0
      %3405 = vmatpush1.msra.mxu0 0.0
      %3406 = vmatprep.subr.mxu0 0.0
      %3407 = vmatpush1.msra.mxu0 0.0
      %3408 = vmatprep.subr.mxu0 0.0
      %3409 = vmatpush1.msra.mxu0 0.0
      %3410 = vmatprep.mubr.f32.mxu0 0.0
      %3411 = vmatmul.mubr.f32.gmra.mrb[0].mxu0 %v3309
      %v3412 = vpop.f32.mrb[0].mxu0
      %v3413 = vadd.f32 0.0, %v3412
      %v3414 = vpop.f32.mrb[0].mxu0
      %3415 = vdwg.mxu0
      %3416 = vmatprep.subr.mxu0 0.0
      %3417 = vmatpush1.msra.mxu0 %v3273
      %3418 = vmatprep.subr.mxu0 0.0
      %3419 = vmatpush1.msra.mxu0 %v3274
      %3420 = vmatprep.subr.mxu0 0.0
      %3421 = vmatpush1.msra.mxu0 %v3275
      %3422 = vmatprep.subr.mxu0 0.0
      %3423 = vmatpush1.msra.mxu0 %v3276
      %3424 = vmatprep.subr.mxu0 0.0
      %3425 = vmatpush1.msra.mxu0 %v3277
      %3426 = vmatprep.subr.mxu0 0.0
      %3427 = vmatpush1.msra.mxu0 %v3278
      %3428 = vmatprep.subr.mxu0 0.0
      %3429 = vmatpush1.msra.mxu0 %v3279
      %3430 = vmatprep.subr.mxu0 0.0
      %3431 = vmatpush1.msra.mxu0 %v3280
      %3432 = vmatprep.subr.mxu0 0.0
      %3433 = vmatpush1.msra.mxu0 %v3281
      %3434 = vmatprep.subr.mxu0 0.0
      %3435 = vmatpush1.msra.mxu0 %v3282
      %3436 = vmatprep.subr.mxu0 0.0
      %3437 = vmatpush1.msra.mxu0 %v3283
      %3438 = vmatprep.subr.mxu0 0.0
      %3439 = vmatpush1.msra.mxu0 %v3284
      %3440 = vmatprep.subr.mxu0 0.0
      %3441 = vmatpush1.msra.mxu0 %v3285
      %3442 = vmatprep.subr.mxu0 0.0
      %3443 = vmatpush1.msra.mxu0 %v3286
      %3444 = vmatprep.subr.mxu0 0.0
      %3445 = vmatpush1.msra.mxu0 %v3287
      %3446 = vmatprep.subr.mxu0 0.0
      %3447 = vmatpush1.msra.mxu0 %v3288
      %3448 = vmatprep.subr.mxu0 0.0
      %3449 = vmatpush1.msra.mxu0 0.0
      %3450 = vmatprep.subr.mxu0 0.0
      %3451 = vmatpush1.msra.mxu0 0.0
      %3452 = vmatprep.subr.mxu0 0.0
      %3453 = vmatpush1.msra.mxu0 0.0
      %3454 = vmatprep.subr.mxu0 0.0
      %3455 = vmatpush1.msra.mxu0 0.0
      %3456 = vmatprep.subr.mxu0 0.0
      %3457 = vmatpush1.msra.mxu0 0.0
      %3458 = vmatprep.subr.mxu0 0.0
      %3459 = vmatpush1.msra.mxu0 0.0
      %3460 = vmatprep.subr.mxu0 0.0
      %3461 = vmatpush1.msra.mxu0 0.0
      %3462 = vmatprep.subr.mxu0 0.0
      %3463 = vmatpush1.msra.mxu0 0.0
      %3464 = vmatprep.subr.mxu0 0.0
      %3465 = vmatpush1.msra.mxu0 0.0
      %3466 = vmatprep.subr.mxu0 0.0
      %3467 = vmatpush1.msra.mxu0 0.0
      %3468 = vmatprep.subr.mxu0 0.0
      %3469 = vmatpush1.msra.mxu0 0.0
      %3470 = vmatprep.subr.mxu0 0.0
      %3471 = vmatpush1.msra.mxu0 0.0
      %3472 = vmatprep.subr.mxu0 0.0
      %3473 = vmatpush1.msra.mxu0 0.0
      %3474 = vmatprep.subr.mxu0 0.0
      %3475 = vmatpush1.msra.mxu0 0.0
      %3476 = vmatprep.subr.mxu0 0.0
      %3477 = vmatpush1.msra.mxu0 0.0
      %3478 = vmatprep.subr.mxu0 0.0
      %3479 = vmatpush1.msra.mxu0 0.0
      %3480 = vmatprep.mubr.f32.mxu0 0.0
      %3481 = vmatmul.mubr.f32.gmra.mrb[0].mxu0 %v3345
      %v3482 = vpop.f32.mrb[0].mxu0
      %v3483 = vadd.f32 0.0, %v3482
      %v3484 = vpop.f32.mrb[0].mxu0
      %3485 = vdwg.mxu0
      %v3486 = vmul.f32 %v3413, 0.00390625
      %v3487 = vmul.f32 %v3483, 0.00390625
      %v3488 = vmul.f32 %v3486, %v3486
      %v3489 = vsub.f32 %v3487, %v3488
      %v3490 = vadd.f32 %v3489, 1e-05
      %v3491 = vrsqrt.pop %v3490
      %v3492 = vmul.f32 %v3271, %v3491
      %v3493 = vmul.f32 %v3486, %v3492
      %v3494 = vsub.f32 %v3272, %v3493
      %v3496 = vlaneseq
      %v3497 = vshrl.u32 %v3496, 7
      %v3498 = vsub.s32 0, %v3497
      %v3499 = vrot.slane %v3492, %v3498
      %v3501 = vmul.f32 %v3256, %v3499
      %v3502 = vmul.f32 %v3257, %v3499
      %v3503 = vmul.f32 %v3258, %v3499
      %v3504 = vmul.f32 %v3259, %v3499
      %v3505 = vmul.f32 %v3260, %v3499
      %v3506 = vmul.f32 %v3261, %v3499
      %v3507 = vmul.f32 %v3262, %v3499
      %v3508 = vmul.f32 %v3263, %v3499
      %v3509 = vmul.f32 %v3264, %v3499
      %v3510 = vmul.f32 %v3265, %v3499
      %v3511 = vmul.f32 %v3266, %v3499
      %v3512 = vmul.f32 %v3267, %v3499
      %v3513 = vmul.f32 %v3268, %v3499
      %v3514 = vmul.f32 %v3269, %v3499
      %v3516 = vlaneseq
      %v3517 = vshrl.u32 %v3516, 7
      %v3518 = vsub.s32 0, %v3517
      %v3519 = vrot.slane %v3494, %v3518
      %v3521 = vadd.f32 %v3501, %v3519
      %v3522 = vadd.f32 %v3502, %v3519
      %v3523 = vadd.f32 %v3503, %v3519
      %v3524 = vadd.f32 %v3504, %v3519
      %v3525 = vadd.f32 %v3505, %v3519
      %v3526 = vadd.f32 %v3506, %v3519
      %v3527 = vadd.f32 %v3507, %v3519
      %v3528 = vadd.f32 %v3508, %v3519
      %v3529 = vadd.f32 %v3509, %v3519
      %v3530 = vadd.f32 %v3510, %v3519
      %v3531 = vadd.f32 %v3511, %v3519
      %v3532 = vadd.f32 %v3512, %v3519
      %v3533 = vadd.f32 %v3513, %v3519
      %v3534 = vadd.f32 %v3514, %v3519
      %v3535 = vxor.u32 %v3521, 2147483648
      %v3536 = vxor.u32 %v3522, 2147483648
      %v3537 = vxor.u32 %v3523, 2147483648
      %v3538 = vxor.u32 %v3524, 2147483648
      %v3539 = vxor.u32 %v3525, 2147483648
      %v3540 = vxor.u32 %v3526, 2147483648
      %v3541 = vxor.u32 %v3527, 2147483648
      %v3542 = vxor.u32 %v3528, 2147483648
      %v3543 = vxor.u32 %v3529, 2147483648
      %v3544 = vxor.u32 %v3530, 2147483648
      %v3545 = vxor.u32 %v3531, 2147483648
      %v3546 = vxor.u32 %v3532, 2147483648
      %v3547 = vxor.u32 %v3533, 2147483648
      %v3548 = vxor.u32 %v3534, 2147483648
      %v3549 = vmul.f32 %v3535, 1.442695
      %v3550 = vpow.pop %v3549
      %v3551 = vmul.f32 %v3536, 1.442695
      %v3552 = vpow.pop %v3551
      %v3553 = vmul.f32 %v3537, 1.442695
      %v3554 = vpow.pop %v3553
      %v3555 = vmul.f32 %v3538, 1.442695
      %v3556 = vpow.pop %v3555
      %v3557 = vmul.f32 %v3539, 1.442695
      %v3558 = vpow.pop %v3557
      %v3559 = vmul.f32 %v3540, 1.442695
      %v3560 = vpow.pop %v3559
      %v3561 = vmul.f32 %v3541, 1.442695
      %v3562 = vpow.pop %v3561
      %v3563 = vmul.f32 %v3542, 1.442695
      %v3564 = vpow.pop %v3563
      %v3565 = vmul.f32 %v3543, 1.442695
      %v3566 = vpow.pop %v3565
      %v3567 = vmul.f32 %v3544, 1.442695
      %v3568 = vpow.pop %v3567
      %v3569 = vmul.f32 %v3545, 1.442695
      %v3570 = vpow.pop %v3569
      %v3571 = vmul.f32 %v3546, 1.442695
      %v3572 = vpow.pop %v3571
      %v3573 = vmul.f32 %v3547, 1.442695
      %v3574 = vpow.pop %v3573
      %v3575 = vmul.f32 %v3548, 1.442695
      %v3576 = vpow.pop %v3575
      %v3577 = vadd.f32 %v3550, 1.0
      %v3578 = vadd.f32 %v3552, 1.0
      %v3579 = vadd.f32 %v3554, 1.0
      %v3580 = vadd.f32 %v3556, 1.0
      %v3581 = vadd.f32 %v3558, 1.0
      %v3582 = vadd.f32 %v3560, 1.0
      %v3583 = vadd.f32 %v3562, 1.0
      %v3584 = vadd.f32 %v3564, 1.0
      %v3585 = vadd.f32 %v3566, 1.0
      %v3586 = vadd.f32 %v3568, 1.0
      %v3587 = vadd.f32 %v3570, 1.0
      %v3588 = vadd.f32 %v3572, 1.0
      %v3589 = vadd.f32 %v3574, 1.0
      %v3590 = vadd.f32 %v3576, 1.0
      %v3591 = vrcp.pop %v3577
      %v3592 = vmul.f32 1.0, %v3591
      %v3593 = vrcp.pop %v3578
      %v3594 = vmul.f32 1.0, %v3593
      %v3595 = vrcp.pop %v3579
      %v3596 = vmul.f32 1.0, %v3595
      %v3597 = vrcp.pop %v3580
      %v3598 = vmul.f32 1.0, %v3597
      %v3599 = vrcp.pop %v3581
      %v3600 = vmul.f32 1.0, %v3599
      %v3601 = vrcp.pop %v3582
      %v3602 = vmul.f32 1.0, %v3601
      %v3603 = vrcp.pop %v3583
      %v3604 = vmul.f32 1.0, %v3603
      %v3605 = vrcp.pop %v3584
      %v3606 = vmul.f32 1.0, %v3605
      %v3607 = vrcp.pop %v3585
      %v3608 = vmul.f32 1.0, %v3607
      %v3609 = vrcp.pop %v3586
      %v3610 = vmul.f32 1.0, %v3609
      %v3611 = vrcp.pop %v3587
      %v3612 = vmul.f32 1.0, %v3611
      %v3613 = vrcp.pop %v3588
      %v3614 = vmul.f32 1.0, %v3613
      %v3615 = vrcp.pop %v3589
      %v3616 = vmul.f32 1.0, %v3615
      %v3617 = vrcp.pop %v3590
      %v3618 = vmul.f32 1.0, %v3617
      %v3619 = vmul.f32 %v3521, %v3592
      %v3620 = vmul.f32 %v3522, %v3594
      %v3621 = vmul.f32 %v3523, %v3596
      %v3622 = vmul.f32 %v3524, %v3598
      %v3623 = vmul.f32 %v3525, %v3600
      %v3624 = vmul.f32 %v3526, %v3602
      %v3625 = vmul.f32 %v3527, %v3604
      %v3626 = vmul.f32 %v3528, %v3606
      %v3627 = vmul.f32 %v3529, %v3608
      %v3628 = vmul.f32 %v3530, %v3610
      %v3629 = vmul.f32 %v3531, %v3612
      %v3630 = vmul.f32 %v3532, %v3614
      %v3631 = vmul.f32 %v3533, %v3616
      %v3632 = vmul.f32 %v3534, %v3618
      %v3633 = vmul.f32 %v3619, %v1241
      %v3634 = vmul.f32 %v3620, %v1246
      %v3635 = vmul.f32 %v3621, %v1251
      %v3636 = vmul.f32 %v3622, %v1256
      %v3637 = vmul.f32 %v3623, %v1261
      %v3638 = vmul.f32 %v3624, %v1266
      %v3639 = vmul.f32 %v3625, %v1271
      %v3640 = vmul.f32 %v3626, %v1276
      %v3641 = vmul.f32 %v3627, %v1281
      %v3642 = vmul.f32 %v3628, %v1286
      %v3643 = vmul.f32 %v3629, %v1291
      %v3644 = vmul.f32 %v3630, %v1296
      %v3645 = vmul.f32 %v3631, %v1301
      %v3646 = vmul.f32 %v3632, %v1306
      %v3647 = vpack.c.bf16 %v3634, %v3633
      %v3648 = vpack.c.bf16 %v3636, %v3635
      %v3649 = vpack.c.bf16 %v3638, %v3637
      %v3650 = vpack.c.bf16 %v3640, %v3639
      %v3651 = vpack.c.bf16 %v3642, %v3641
      %v3652 = vpack.c.bf16 %v3644, %v3643
      %v3653 = vpack.c.bf16 %v3646, %v3645
      %v3654 = vld [vmem:[%s11] sm:$0xff]
      %v3655 = vld [vmem:[%s11 + $0x8] sm:$0xf]
      %v3656 = vld [vmem:[%s11 + $0xc] sm:$0xff]
      %v3657 = vld [vmem:[%s11 + $0x14] sm:$0xf]
      %v3658 = vld [vmem:[%s11 + $0x18] sm:$0xff]
      %v3659 = vld [vmem:[%s11 + $0x20] sm:$0xf]
      %v3660 = vld [vmem:[%s11 + $0x24] sm:$0xff]
      %v3661 = vld [vmem:[%s11 + $0x2c] sm:$0xf]
      %v3662 = vld [vmem:[%s11 + $0x30] sm:$0xff]
      %v3663 = vld [vmem:[%s11 + $0x38] sm:$0xf]
      %v3664 = vld [vmem:[%s11 + $0x3c] sm:$0xff]
      %v3665 = vld [vmem:[%s11 + $0x44] sm:$0xf]
      %v3666 = vld [vmem:[%s11 + $0x48] sm:$0xff]
      %v3667 = vld [vmem:[%s11 + $0x50] sm:$0xf]
      %v3668 = vld [vmem:[%s11 + $0x54] sm:$0xff]
      %v3669 = vld [vmem:[%s11 + $0x5c] sm:$0xf]
      %v3670 = vld [vmem:[%s11 + $0x60] sm:$0xff]
      %v3671 = vld [vmem:[%s11 + $0x68] sm:$0xf]
      %v3672 = vld [vmem:[%s11 + $0x6c] sm:$0xff]
      %v3673 = vld [vmem:[%s11 + $0x74] sm:$0xf]
      %v3674 = vld [vmem:[%s11 + $0x78] sm:$0xff]
      %v3675 = vld [vmem:[%s11 + $0x80] sm:$0xf]
      %v3676 = vld [vmem:[%s11 + $0x84] sm:$0xff]
      %v3677 = vld [vmem:[%s11 + $0x8c] sm:$0xf]
      %v3678 = vld [vmem:[%s11 + $0x90] sm:$0xff]
      %v3679 = vld [vmem:[%s11 + $0x98] sm:$0xf]
      %v3680 = vld [vmem:[%s11 + $0x9c] sm:$0xff]
      %v3681 = vld [vmem:[%s11 + $0xa4] sm:$0xf]
      %v3682 = vld [vmem:[%s11 + $0xa8] sm:$0xff]
      %v3683 = vld [vmem:[%s11 + $0xb0] sm:$0xf]
      %v3684 = vld [vmem:[%s11 + $0xb4] sm:$0xff]
      %v3685 = vld [vmem:[%s11 + $0xbc] sm:$0xf]
      %v3687 = vshrl.u32 %v3647, 16
      %v3689 = vrot.slane %v3687, 2
      %v3690 = vshll.u32 %v3647, 16
      %v3692 = vrot.slane %v3690, 3
      %v3693 = vor.u32 %v3689, %v3692
      %v3695 = vshrl.u32 %v3648, 16
      %v3697 = vrot.slane %v3695, 2
      %v3698 = vshll.u32 %v3648, 16
      %v3700 = vrot.slane %v3698, 3
      %v3701 = vor.u32 %v3697, %v3700
      %v3702 = vsel %vm1398, %v3693, %v3701
      %v3704 = vshrl.u32 %v3649, 16
      %v3706 = vrot.slane %v3704, 2
      %v3707 = vshll.u32 %v3649, 16
      %v3709 = vrot.slane %v3707, 3
      %v3710 = vor.u32 %v3706, %v3709
      %v3711 = vsel %vm1398, %v3701, %v3710
      %v3713 = vshrl.u32 %v3650, 16
      %v3715 = vrot.slane %v3713, 2
      %v3716 = vshll.u32 %v3650, 16
      %v3718 = vrot.slane %v3716, 3
      %v3719 = vor.u32 %v3715, %v3718
      %v3720 = vsel %vm1398, %v3710, %v3719
      %v3722 = vshrl.u32 %v3651, 16
      %v3724 = vrot.slane %v3722, 2
      %v3725 = vshll.u32 %v3651, 16
      %v3727 = vrot.slane %v3725, 3
      %v3728 = vor.u32 %v3724, %v3727
      %v3729 = vsel %vm1398, %v3719, %v3728
      %v3731 = vshrl.u32 %v3652, 16
      %v3733 = vrot.slane %v3731, 2
      %v3734 = vshll.u32 %v3652, 16
      %v3736 = vrot.slane %v3734, 3
      %v3737 = vor.u32 %v3733, %v3736
      %v3738 = vsel %vm1398, %v3728, %v3737
      %v3777 = vunpack.c.l.b16 %v3654
      %v3778 = vunpack.c.h.b16 %v3654
      %v3779 = vunpack.c.l.b16 %v3655
      %v3780 = vunpack.c.l.b16 %v3656
      %v3781 = vunpack.c.h.b16 %v3656
      %v3782 = vunpack.c.l.b16 %v3657
      %v3783 = vunpack.c.l.b16 %v3658
      %v3784 = vunpack.c.h.b16 %v3658
      %v3785 = vunpack.c.l.b16 %v3659
      %v3786 = vunpack.c.l.b16 %v3660
      %v3787 = vunpack.c.h.b16 %v3660
      %v3788 = vunpack.c.l.b16 %v3661
      %v3789 = vunpack.c.l.b16 %v3662
      %v3790 = vunpack.c.h.b16 %v3662
      %v3791 = vunpack.c.l.b16 %v3663
      %v3792 = vunpack.c.l.b16 %v3664
      %v3793 = vunpack.c.h.b16 %v3664
      %v3794 = vunpack.c.l.b16 %v3665
      %v3795 = vunpack.c.l.b16 %v3666
      %v3796 = vunpack.c.h.b16 %v3666
      %v3797 = vunpack.c.l.b16 %v3667
      %v3798 = vunpack.c.l.b16 %v3668
      %v3799 = vunpack.c.h.b16 %v3668
      %v3800 = vunpack.c.l.b16 %v3669
      %v3801 = vunpack.c.l.b16 %v3670
      %v3802 = vunpack.c.h.b16 %v3670
      %v3803 = vunpack.c.l.b16 %v3671
      %v3804 = vunpack.c.l.b16 %v3672
      %v3805 = vunpack.c.h.b16 %v3672
      %v3806 = vunpack.c.l.b16 %v3673
      %v3807 = vunpack.c.l.b16 %v3674
      %v3808 = vunpack.c.h.b16 %v3674
      %v3809 = vunpack.c.l.b16 %v3675
      %v3810 = vunpack.c.l.b16 %v3676
      %v3811 = vunpack.c.h.b16 %v3676
      %v3812 = vunpack.c.l.b16 %v3677
      %v3813 = vunpack.c.l.b16 %v3678
      %v3814 = vunpack.c.h.b16 %v3678
      %v3815 = vunpack.c.l.b16 %v3679
      %v3816 = vunpack.c.l.b16 %v3680
      %v3817 = vunpack.c.h.b16 %v3680
      %v3818 = vunpack.c.l.b16 %v3681
      %v3819 = vunpack.c.l.b16 %v3682
      %v3820 = vunpack.c.h.b16 %v3682
      %v3821 = vunpack.c.l.b16 %v3683
      %v3822 = vunpack.c.l.b16 %v3684
      %v3823 = vunpack.c.h.b16 %v3684
      %v3824 = vunpack.c.l.b16 %v3685
      %v3825 = vpack.c.b16 %v3780, %v3777
      %v3826 = vpack.c.b16 %v3781, %v3778
      %v3827 = vpack.c.b16 %v3782, %v3779
      %v3828 = vpack.c.b16 %v3786, %v3783
      %v3829 = vpack.c.b16 %v3787, %v3784
      %v3830 = vpack.c.b16 %v3788, %v3785
      %v3831 = vpack.c.b16 %v3792, %v3789
      %v3832 = vpack.c.b16 %v3793, %v3790
      %v3833 = vpack.c.b16 %v3794, %v3791
      %v3834 = vpack.c.b16 %v3798, %v3795
      %v3835 = vpack.c.b16 %v3799, %v3796
      %v3836 = vpack.c.b16 %v3800, %v3797
      %v3837 = vpack.c.b16 %v3804, %v3801
      %v3838 = vpack.c.b16 %v3805, %v3802
      %v3839 = vpack.c.b16 %v3806, %v3803
      %v3840 = vpack.c.b16 %v3810, %v3807
      %v3841 = vpack.c.b16 %v3811, %v3808
      %v3842 = vpack.c.b16 %v3812, %v3809
      %v3843 = vpack.c.b16 %v3816, %v3813
      %v3844 = vpack.c.b16 %v3817, %v3814
      %v3845 = vpack.c.b16 %v3818, %v3815
      %v3846 = vpack.c.b16 %v3822, %v3819
      %v3847 = vpack.c.b16 %v3823, %v3820
      %v3848 = vpack.c.b16 %v3824, %v3821
      %3873 = vmatprep.subr.bf16.mxu0 %v3826
      %3874 = vmatpush1.bf16.msra.mxu0 %v3825
      %3875 = vmatprep.subr.bf16.mxu0 %v3829
      %3876 = vmatpush1.bf16.msra.mxu0 %v3828
      %3877 = vmatprep.subr.bf16.mxu0 %v3832
      %3878 = vmatpush1.bf16.msra.mxu0 %v3831
      %3879 = vmatprep.subr.bf16.mxu0 %v3835
      %3880 = vmatpush1.bf16.msra.mxu0 %v3834
      %3881 = vmatprep.subr.bf16.mxu0 %v3838
      %3882 = vmatpush1.bf16.msra.mxu0 %v3837
      %3883 = vmatprep.subr.bf16.mxu0 %v3841
      %3884 = vmatpush1.bf16.msra.mxu0 %v3840
      %3885 = vmatprep.subr.bf16.mxu0 %v3844
      %3886 = vmatpush1.bf16.msra.mxu0 %v3843
      %3887 = vmatprep.subr.bf16.mxu0 %v3847
      %3888 = vmatpush1.bf16.msra.mxu0 %v3846
      %3889 = vmatprep.subr.bf16.mxu0 0
      %3890 = vmatpush1.bf16.msra.mxu0 0
      %3891 = vmatprep.subr.bf16.mxu0 0
      %3892 = vmatpush1.bf16.msra.mxu0 0
      %3893 = vmatprep.subr.bf16.mxu0 0
      %3894 = vmatpush1.bf16.msra.mxu0 0
      %3895 = vmatprep.subr.bf16.mxu0 0
      %3896 = vmatpush1.bf16.msra.mxu0 0
      %3897 = vmatprep.subr.bf16.mxu0 0
      %3898 = vmatpush1.bf16.msra.mxu0 0
      %3899 = vmatprep.subr.bf16.mxu0 0
      %3900 = vmatpush1.bf16.msra.mxu0 0
      %3901 = vmatprep.subr.bf16.mxu0 0
      %3902 = vmatpush1.bf16.msra.mxu0 0
      %3903 = vmatprep.subr.bf16.mxu0 0
      %3904 = vmatpush1.bf16.msra.mxu0 0
      %3905 = vmatprep.mubr.bf16.mxu0 0
      %3906 = vmatmul.mubr.bf16.gmra.mrb[0].mxu0 %v3702
      %v3907 = vpop.f32.mrb[0].mxu0
      %v3908 = vadd.f32 0.0, %v3907
      %v3909 = vpop.f32.mrb[0].mxu0
      %v3910 = vadd.f32 0.0, %v3909
      %v3911 = vpop.f32.mrb[0].mxu0
      %v3912 = vadd.f32 0.0, %v3911
      %v3913 = vpop.f32.mrb[0].mxu0
      %v3914 = vadd.f32 0.0, %v3913
      %3915 = vmatprep.mubr.bf16.mxu0 0
      %3916 = vmatmul.mubr.bf16.gmra.mrb[0].mxu0 %v3711
      %v3917 = vpop.f32.mrb[0].mxu0
      %v3918 = vadd.f32 0.0, %v3917
      %v3919 = vpop.f32.mrb[0].mxu0
      %v3920 = vadd.f32 0.0, %v3919
      %v3921 = vpop.f32.mrb[0].mxu0
      %v3922 = vadd.f32 0.0, %v3921
      %v3923 = vpop.f32.mrb[0].mxu0
      %v3924 = vadd.f32 0.0, %v3923
      %3925 = vmatprep.mubr.bf16.mxu0 0
      %3926 = vmatmul.mubr.bf16.gmra.mrb[0].mxu0 %v3720
      %v3927 = vpop.f32.mrb[0].mxu0
      %v3928 = vadd.f32 0.0, %v3927
      %v3929 = vpop.f32.mrb[0].mxu0
      %v3930 = vadd.f32 0.0, %v3929
      %v3931 = vpop.f32.mrb[0].mxu0
      %v3932 = vadd.f32 0.0, %v3931
      %v3933 = vpop.f32.mrb[0].mxu0
      %v3934 = vadd.f32 0.0, %v3933
      %3935 = vmatprep.mubr.bf16.mxu0 0
      %3936 = vmatmul.mubr.bf16.gmra.mrb[0].mxu0 %v3729
      %v3937 = vpop.f32.mrb[0].mxu0
      %v3938 = vadd.f32 0.0, %v3937
      %v3939 = vpop.f32.mrb[0].mxu0
      %v3940 = vadd.f32 0.0, %v3939
      %v3941 = vpop.f32.mrb[0].mxu0
      %v3942 = vadd.f32 0.0, %v3941
      %v3943 = vpop.f32.mrb[0].mxu0
      %v3944 = vadd.f32 0.0, %v3943
      %3945 = vmatprep.mubr.bf16.mxu0 0
      %3946 = vmatmul.mubr.bf16.gmra.mrb[0].mxu0 %v3738
      %v3947 = vpop.f32.mrb[0].mxu0
      %v3948 = vadd.f32 0.0, %v3947
      %v3949 = vpop.f32.mrb[0].mxu0
      %v3950 = vadd.f32 0.0, %v3949
      %v3951 = vpop.f32.mrb[0].mxu0
      %v3952 = vadd.f32 0.0, %v3951
      %v3953 = vpop.f32.mrb[0].mxu0
      %v3954 = vadd.f32 0.0, %v3953
      %3955 = vmatprep.mubr.bf16.mxu0 0
      %3956 = vmatmul.mubr.bf16.gmra.mrb[0].mxu0 %v3737
      %v3957 = vpop.f32.mrb[0].mxu0
      %v3958 = vpop.f32.mrb[0].mxu0
      %v3959 = vadd.f32 0.0, %v3958
      %v3960 = vpop.f32.mrb[0].mxu0
      %v3961 = vpop.f32.mrb[0].mxu0
      %3962 = vdwg.mxu0
      %3963 = vmatprep.subr.bf16.mxu0 0
      %3964 = vmatpush1.bf16.msra.mxu0 %v3827
      %3965 = vmatprep.subr.bf16.mxu0 0
      %3966 = vmatpush1.bf16.msra.mxu0 %v3830
      %3967 = vmatprep.subr.bf16.mxu0 0
      %3968 = vmatpush1.bf16.msra.mxu0 %v3833
      %3969 = vmatprep.subr.bf16.mxu0 0
      %3970 = vmatpush1.bf16.msra.mxu0 %v3836
      %3971 = vmatprep.subr.bf16.mxu0 0
      %3972 = vmatpush1.bf16.msra.mxu0 %v3839
      %3973 = vmatprep.subr.bf16.mxu0 0
      %3974 = vmatpush1.bf16.msra.mxu0 %v3842
      %3975 = vmatprep.subr.bf16.mxu0 0
      %3976 = vmatpush1.bf16.msra.mxu0 %v3845
      %3977 = vmatprep.subr.bf16.mxu0 0
      %3978 = vmatpush1.bf16.msra.mxu0 %v3848
      %3979 = vmatprep.subr.bf16.mxu0 0
      %3980 = vmatpush1.bf16.msra.mxu0 0
      %3981 = vmatprep.subr.bf16.mxu0 0
      %3982 = vmatpush1.bf16.msra.mxu0 0
      %3983 = vmatprep.subr.bf16.mxu0 0
      %3984 = vmatpush1.bf16.msra.mxu0 0
      %3985 = vmatprep.subr.bf16.mxu0 0
      %3986 = vmatpush1.bf16.msra.mxu0 0
      %3987 = vmatprep.subr.bf16.mxu0 0
      %3988 = vmatpush1.bf16.msra.mxu0 0
      %3989 = vmatprep.subr.bf16.mxu0 0
      %3990 = vmatpush1.bf16.msra.mxu0 0
      %3991 = vmatprep.subr.bf16.mxu0 0
      %3992 = vmatpush1.bf16.msra.mxu0 0
      %3993 = vmatprep.subr.bf16.mxu0 0
      %3994 = vmatpush1.bf16.msra.mxu0 0
      %3995 = vmatprep.mubr.bf16.mxu0 0
      %3996 = vmatmul.mubr.bf16.gmra.mrb[0].mxu0 %v3702
      %v3997 = vpop.f32.mrb[0].mxu0
      %v3998 = vadd.f32 0.0, %v3997
      %v3999 = vpop.f32.mrb[0].mxu0
      %v4000 = vpop.f32.mrb[0].mxu0
      %v4001 = vadd.f32 0.0, %v4000
      %v4002 = vpop.f32.mrb[0].mxu0
      %4003 = vmatprep.mubr.bf16.mxu0 0
      %4004 = vmatmul.mubr.bf16.gmra.mrb[0].mxu0 %v3711
      %v4005 = vpop.f32.mrb[0].mxu0
      %v4006 = vadd.f32 0.0, %v4005
      %v4007 = vpop.f32.mrb[0].mxu0
      %v4008 = vpop.f32.mrb[0].mxu0
      %v4009 = vadd.f32 0.0, %v4008
      %v4010 = vpop.f32.mrb[0].mxu0
      %4011 = vmatprep.mubr.bf16.mxu0 0
      %4012 = vmatmul.mubr.bf16.gmra.mrb[0].mxu0 %v3720
      %v4013 = vpop.f32.mrb[0].mxu0
      %v4014 = vadd.f32 0.0, %v4013
      %v4015 = vpop.f32.mrb[0].mxu0
      %v4016 = vpop.f32.mrb[0].mxu0
      %v4017 = vadd.f32 0.0, %v4016
      %v4018 = vpop.f32.mrb[0].mxu0
      %4019 = vmatprep.mubr.bf16.mxu0 0
      %4020 = vmatmul.mubr.bf16.gmra.mrb[0].mxu0 %v3729
      %v4021 = vpop.f32.mrb[0].mxu0
      %v4022 = vadd.f32 0.0, %v4021
      %v4023 = vpop.f32.mrb[0].mxu0
      %v4024 = vpop.f32.mrb[0].mxu0
      %v4025 = vadd.f32 0.0, %v4024
      %v4026 = vpop.f32.mrb[0].mxu0
      %4027 = vmatprep.mubr.bf16.mxu0 0
      %4028 = vmatmul.mubr.bf16.gmra.mrb[0].mxu0 %v3738
      %v4029 = vpop.f32.mrb[0].mxu0
      %v4030 = vadd.f32 0.0, %v4029
      %v4031 = vpop.f32.mrb[0].mxu0
      %v4032 = vpop.f32.mrb[0].mxu0
      %v4033 = vadd.f32 0.0, %v4032
      %v4034 = vpop.f32.mrb[0].mxu0
      %4035 = vmatprep.mubr.bf16.mxu0 0
      %4036 = vmatmul.mubr.bf16.gmra.mrb[0].mxu0 %v3737
      %v4037 = vpop.f32.mrb[0].mxu0
      %v4038 = vadd.f32 0.0, %v4037
      %v4039 = vpop.f32.mrb[0].mxu0
      %v4040 = vpop.f32.mrb[0].mxu0
      %v4041 = vpop.f32.mrb[0].mxu0
      %4042 = vdwg.mxu0
      %v4043 = vadd.f32 %v3908, 0.0
      %v4044 = vadd.f32 %v3912, 0.0
      %v4045 = vadd.f32 %v3918, 0.0
      %v4046 = vadd.f32 %v3922, 0.0
      %v4047 = vadd.f32 %v3928, 0.0
      %v4048 = vadd.f32 %v3932, 0.0
      %v4049 = vadd.f32 %v3938, 0.0
      %v4050 = vadd.f32 %v3942, 0.0
      %v4051 = vadd.f32 %v3948, 0.0
      %v4052 = vadd.f32 %v3952, 0.0
      %v4064 = vrot.slane %v3910, 1
      %v4065 = vrot.slane %v3914, 1
      %v4066 = vsel %vm1912, %v4064, %v4065
      %v4067 = vrot.slane %v3920, 1
      %v4068 = vsel %vm1912, %v4065, %v4067
      %v4069 = vrot.slane %v3924, 1
      %v4070 = vsel %vm1912, %v4067, %v4069
      %v4071 = vrot.slane %v3930, 1
      %v4072 = vsel %vm1912, %v4069, %v4071
      %v4073 = vrot.slane %v3934, 1
      %v4074 = vsel %vm1912, %v4071, %v4073
      %v4075 = vrot.slane %v3940, 1
      %v4076 = vsel %vm1912, %v4073, %v4075
      %v4077 = vrot.slane %v3944, 1
      %v4078 = vsel %vm1912, %v4075, %v4077
      %v4079 = vrot.slane %v3950, 1
      %v4080 = vsel %vm1912, %v4077, %v4079
      %v4081 = vrot.slane %v3954, 1
      %v4082 = vsel %vm1912, %v4079, %v4081
      %v4083 = vrot.slane %v3959, 1
      %v4084 = vsel %vm1912, %v4081, %v4083
      %v4095 = vadd.f32 %v4043, %v4066
      %v4096 = vadd.f32 %v4044, %v4068
      %v4097 = vadd.f32 %v4045, %v4070
      %v4098 = vadd.f32 %v4046, %v4072
      %v4099 = vadd.f32 %v4047, %v4074
      %v4100 = vadd.f32 %v4048, %v4076
      %v4101 = vadd.f32 %v4049, %v4078
      %v4102 = vadd.f32 %v4050, %v4080
      %v4103 = vadd.f32 %v4051, %v4082
      %v4104 = vadd.f32 %v4052, %v4084
      %v4116 = vrot.slane %v3998, 2
      %v4117 = vrot.slane %v4001, 2
      %v4118 = vsel %vm1965, %v4116, %v4117
      %v4119 = vrot.slane %v4006, 2
      %v4120 = vsel %vm1965, %v4117, %v4119
      %v4121 = vrot.slane %v4009, 2
      %v4122 = vsel %vm1965, %v4119, %v4121
      %v4123 = vrot.slane %v4014, 2
      %v4124 = vsel %vm1965, %v4121, %v4123
      %v4125 = vrot.slane %v4017, 2
      %v4126 = vsel %vm1965, %v4123, %v4125
      %v4127 = vrot.slane %v4022, 2
      %v4128 = vsel %vm1965, %v4125, %v4127
      %v4129 = vrot.slane %v4025, 2
      %v4130 = vsel %vm1965, %v4127, %v4129
      %v4131 = vrot.slane %v4030, 2
      %v4132 = vsel %vm1965, %v4129, %v4131
      %v4133 = vrot.slane %v4033, 2
      %v4134 = vsel %vm1965, %v4131, %v4133
      %v4135 = vrot.slane %v4038, 2
      %v4136 = vsel %vm1965, %v4133, %v4135
      %v4147 = vadd.f32 %v4095, %v4118
      %v4148 = vadd.f32 %v4096, %v4120
      %v4149 = vadd.f32 %v4097, %v4122
      %v4150 = vadd.f32 %v4098, %v4124
      %v4151 = vadd.f32 %v4099, %v4126
      %v4152 = vadd.f32 %v4100, %v4128
      %v4153 = vadd.f32 %v4101, %v4130
      %v4154 = vadd.f32 %v4102, %v4132
      %v4155 = vadd.f32 %v4103, %v4134
      %v4156 = vadd.f32 %v4104, %v4136
      %s4157 = scalar_lea.vmem %s11, 192
      %v4158 = vld [vmem:[%s4157] sm:$0xff]
      %v4159 = vld [vmem:[%s4157 + $0x8] sm:$0xf]
      %v4160 = vld [vmem:[%s4157 + $0xc] sm:$0xff]
      %v4161 = vld [vmem:[%s4157 + $0x14] sm:$0xf]
      %v4162 = vld [vmem:[%s4157 + $0x18] sm:$0xff]
      %v4163 = vld [vmem:[%s4157 + $0x20] sm:$0xf]
      %v4164 = vld [vmem:[%s4157 + $0x24] sm:$0xff]
      %v4165 = vld [vmem:[%s4157 + $0x2c] sm:$0xf]
      %v4166 = vld [vmem:[%s4157 + $0x30] sm:$0xff]
      %v4167 = vld [vmem:[%s4157 + $0x38] sm:$0xf]
      %v4168 = vld [vmem:[%s4157 + $0x3c] sm:$0xff]
      %v4169 = vld [vmem:[%s4157 + $0x44] sm:$0xf]
      %v4170 = vld [vmem:[%s4157 + $0x48] sm:$0xff]
      %v4171 = vld [vmem:[%s4157 + $0x50] sm:$0xf]
      %v4172 = vld [vmem:[%s4157 + $0x54] sm:$0xff]
      %v4173 = vld [vmem:[%s4157 + $0x5c] sm:$0xf]
      %v4174 = vld [vmem:[%s4157 + $0x60] sm:$0xff]
      %v4175 = vld [vmem:[%s4157 + $0x68] sm:$0xf]
      %v4176 = vld [vmem:[%s4157 + $0x6c] sm:$0xff]
      %v4177 = vld [vmem:[%s4157 + $0x74] sm:$0xf]
      %v4178 = vld [vmem:[%s4157 + $0x78] sm:$0xff]
      %v4179 = vld [vmem:[%s4157 + $0x80] sm:$0xf]
      %v4180 = vld [vmem:[%s4157 + $0x84] sm:$0xff]
      %v4181 = vld [vmem:[%s4157 + $0x8c] sm:$0xf]
      %v4182 = vld [vmem:[%s4157 + $0x90] sm:$0xff]
      %v4183 = vld [vmem:[%s4157 + $0x98] sm:$0xf]
      %v4184 = vld [vmem:[%s4157 + $0x9c] sm:$0xff]
      %v4185 = vld [vmem:[%s4157 + $0xa4] sm:$0xf]
      %v4186 = vld [vmem:[%s4157 + $0xa8] sm:$0xff]
      %v4187 = vld [vmem:[%s4157 + $0xb0] sm:$0xf]
      %v4188 = vld [vmem:[%s4157 + $0xb4] sm:$0xff]
      %v4189 = vld [vmem:[%s4157 + $0xbc] sm:$0xf]
      %v4190 = vrot.slane %v3687, 7
      %v4191 = vrot.slane %v3695, 7
      %v4192 = vor.u32 %v4191, %v3698
      %v4193 = vsel %vm2056, %v4190, %v4192
      %v4194 = vrot.slane %v3704, 7
      %v4195 = vor.u32 %v4194, %v3707
      %v4196 = vsel %vm2056, %v4191, %v4195
      %v4197 = vrot.slane %v3713, 7
      %v4198 = vor.u32 %v4197, %v3716
      %v4199 = vsel %vm2056, %v4194, %v4198
      %v4200 = vrot.slane %v3722, 7
      %v4201 = vor.u32 %v4200, %v3725
      %v4202 = vsel %vm2056, %v4197, %v4201
      %v4203 = vrot.slane %v3731, 7
      %v4204 = vor.u32 %v4203, %v3734
      %v4205 = vsel %vm2056, %v4200, %v4204
      %v4207 = vshll.u32 %v3653, 16
      %v4209 = vsel %vm2056, %v4203, %v4207
      %v4248 = vunpack.c.l.b16 %v4158
      %v4249 = vunpack.c.h.b16 %v4158
      %v4250 = vunpack.c.l.b16 %v4159
      %v4251 = vunpack.c.l.b16 %v4160
      %v4252 = vunpack.c.h.b16 %v4160
      %v4253 = vunpack.c.l.b16 %v4161
      %v4254 = vunpack.c.l.b16 %v4162
      %v4255 = vunpack.c.h.b16 %v4162
      %v4256 = vunpack.c.l.b16 %v4163
      %v4257 = vunpack.c.l.b16 %v4164
      %v4258 = vunpack.c.h.b16 %v4164
      %v4259 = vunpack.c.l.b16 %v4165
      %v4260 = vunpack.c.l.b16 %v4166
      %v4261 = vunpack.c.h.b16 %v4166
      %v4262 = vunpack.c.l.b16 %v4167
      %v4263 = vunpack.c.l.b16 %v4168
      %v4264 = vunpack.c.h.b16 %v4168
      %v4265 = vunpack.c.l.b16 %v4169
      %v4266 = vunpack.c.l.b16 %v4170
      %v4267 = vunpack.c.h.b16 %v4170
      %v4268 = vunpack.c.l.b16 %v4171
      %v4269 = vunpack.c.l.b16 %v4172
      %v4270 = vunpack.c.h.b16 %v4172
      %v4271 = vunpack.c.l.b16 %v4173
      %v4272 = vunpack.c.l.b16 %v4174
      %v4273 = vunpack.c.h.b16 %v4174
      %v4274 = vunpack.c.l.b16 %v4175
      %v4275 = vunpack.c.l.b16 %v4176
      %v4276 = vunpack.c.h.b16 %v4176
      %v4277 = vunpack.c.l.b16 %v4177
      %v4278 = vunpack.c.l.b16 %v4178
      %v4279 = vunpack.c.h.b16 %v4178
      %v4280 = vunpack.c.l.b16 %v4179
      %v4281 = vunpack.c.l.b16 %v4180
      %v4282 = vunpack.c.h.b16 %v4180
      %v4283 = vunpack.c.l.b16 %v4181
      %v4284 = vunpack.c.l.b16 %v4182
      %v4285 = vunpack.c.h.b16 %v4182
      %v4286 = vunpack.c.l.b16 %v4183
      %v4287 = vunpack.c.l.b16 %v4184
      %v4288 = vunpack.c.h.b16 %v4184
      %v4289 = vunpack.c.l.b16 %v4185
      %v4290 = vunpack.c.l.b16 %v4186
      %v4291 = vunpack.c.h.b16 %v4186
      %v4292 = vunpack.c.l.b16 %v4187
      %v4293 = vunpack.c.l.b16 %v4188
      %v4294 = vunpack.c.h.b16 %v4188
      %v4295 = vunpack.c.l.b16 %v4189
      %v4296 = vpack.c.b16 %v4251, %v4248
      %v4297 = vpack.c.b16 %v4252, %v4249
      %v4298 = vpack.c.b16 %v4253, %v4250
      %v4299 = vpack.c.b16 %v4257, %v4254
      %v4300 = vpack.c.b16 %v4258, %v4255
      %v4301 = vpack.c.b16 %v4259, %v4256
      %v4302 = vpack.c.b16 %v4263, %v4260
      %v4303 = vpack.c.b16 %v4264, %v4261
      %v4304 = vpack.c.b16 %v4265, %v4262
      %v4305 = vpack.c.b16 %v4269, %v4266
      %v4306 = vpack.c.b16 %v4270, %v4267
      %v4307 = vpack.c.b16 %v4271, %v4268
      %v4308 = vpack.c.b16 %v4275, %v4272
      %v4309 = vpack.c.b16 %v4276, %v4273
      %v4310 = vpack.c.b16 %v4277, %v4274
      %v4311 = vpack.c.b16 %v4281, %v4278
      %v4312 = vpack.c.b16 %v4282, %v4279
      %v4313 = vpack.c.b16 %v4283, %v4280
      %v4314 = vpack.c.b16 %v4287, %v4284
      %v4315 = vpack.c.b16 %v4288, %v4285
      %v4316 = vpack.c.b16 %v4289, %v4286
      %v4317 = vpack.c.b16 %v4293, %v4290
      %v4318 = vpack.c.b16 %v4294, %v4291
      %v4319 = vpack.c.b16 %v4295, %v4292
      %4344 = vmatprep.subr.bf16.mxu0 %v4297
      %4345 = vmatpush1.bf16.msra.mxu0 %v4296
      %4346 = vmatprep.subr.bf16.mxu0 %v4300
      %4347 = vmatpush1.bf16.msra.mxu0 %v4299
      %4348 = vmatprep.subr.bf16.mxu0 %v4303
      %4349 = vmatpush1.bf16.msra.mxu0 %v4302
      %4350 = vmatprep.subr.bf16.mxu0 %v4306
      %4351 = vmatpush1.bf16.msra.mxu0 %v4305
      %4352 = vmatprep.subr.bf16.mxu0 %v4309
      %4353 = vmatpush1.bf16.msra.mxu0 %v4308
      %4354 = vmatprep.subr.bf16.mxu0 %v4312
      %4355 = vmatpush1.bf16.msra.mxu0 %v4311
      %4356 = vmatprep.subr.bf16.mxu0 %v4315
      %4357 = vmatpush1.bf16.msra.mxu0 %v4314
      %4358 = vmatprep.subr.bf16.mxu0 %v4318
      %4359 = vmatpush1.bf16.msra.mxu0 %v4317
      %4360 = vmatprep.subr.bf16.mxu0 0
      %4361 = vmatpush1.bf16.msra.mxu0 0
      %4362 = vmatprep.subr.bf16.mxu0 0
      %4363 = vmatpush1.bf16.msra.mxu0 0
      %4364 = vmatprep.subr.bf16.mxu0 0
      %4365 = vmatpush1.bf16.msra.mxu0 0
      %4366 = vmatprep.subr.bf16.mxu0 0
      %4367 = vmatpush1.bf16.msra.mxu0 0
      %4368 = vmatprep.subr.bf16.mxu0 0
      %4369 = vmatpush1.bf16.msra.mxu0 0
      %4370 = vmatprep.subr.bf16.mxu0 0
      %4371 = vmatpush1.bf16.msra.mxu0 0
      %4372 = vmatprep.subr.bf16.mxu0 0
      %4373 = vmatpush1.bf16.msra.mxu0 0
      %4374 = vmatprep.subr.bf16.mxu0 0
      %4375 = vmatpush1.bf16.msra.mxu0 0
      %4376 = vmatprep.mubr.bf16.mxu0 0
      %4377 = vmatmul.mubr.bf16.gmra.mrb[0].mxu0 %v4193
      %v4378 = vpop.f32.mrb[0].mxu0
      %v4379 = vadd.f32 0.0, %v4378
      %v4380 = vpop.f32.mrb[0].mxu0
      %v4381 = vadd.f32 0.0, %v4380
      %v4382 = vpop.f32.mrb[0].mxu0
      %v4383 = vadd.f32 0.0, %v4382
      %v4384 = vpop.f32.mrb[0].mxu0
      %v4385 = vadd.f32 0.0, %v4384
      %4386 = vmatprep.mubr.bf16.mxu0 0
      %4387 = vmatmul.mubr.bf16.gmra.mrb[0].mxu0 %v4196
      %v4388 = vpop.f32.mrb[0].mxu0
      %v4389 = vadd.f32 0.0, %v4388
      %v4390 = vpop.f32.mrb[0].mxu0
      %v4391 = vadd.f32 0.0, %v4390
      %v4392 = vpop.f32.mrb[0].mxu0
      %v4393 = vadd.f32 0.0, %v4392
      %v4394 = vpop.f32.mrb[0].mxu0
      %v4395 = vadd.f32 0.0, %v4394
      %4396 = vmatprep.mubr.bf16.mxu0 0
      %4397 = vmatmul.mubr.bf16.gmra.mrb[0].mxu0 %v4199
      %v4398 = vpop.f32.mrb[0].mxu0
      %v4399 = vadd.f32 0.0, %v4398
      %v4400 = vpop.f32.mrb[0].mxu0
      %v4401 = vadd.f32 0.0, %v4400
      %v4402 = vpop.f32.mrb[0].mxu0
      %v4403 = vadd.f32 0.0, %v4402
      %v4404 = vpop.f32.mrb[0].mxu0
      %v4405 = vadd.f32 0.0, %v4404
      %4406 = vmatprep.mubr.bf16.mxu0 0
      %4407 = vmatmul.mubr.bf16.gmra.mrb[0].mxu0 %v4202
      %v4408 = vpop.f32.mrb[0].mxu0
      %v4409 = vadd.f32 0.0, %v4408
      %v4410 = vpop.f32.mrb[0].mxu0
      %v4411 = vadd.f32 0.0, %v4410
      %v4412 = vpop.f32.mrb[0].mxu0
      %v4413 = vadd.f32 0.0, %v4412
      %v4414 = vpop.f32.mrb[0].mxu0
      %v4415 = vadd.f32 0.0, %v4414
      %4416 = vmatprep.mubr.bf16.mxu0 0
      %4417 = vmatmul.mubr.bf16.gmra.mrb[0].mxu0 %v4205
      %v4418 = vpop.f32.mrb[0].mxu0
      %v4419 = vadd.f32 0.0, %v4418
      %v4420 = vpop.f32.mrb[0].mxu0
      %v4421 = vadd.f32 0.0, %v4420
      %v4422 = vpop.f32.mrb[0].mxu0
      %v4423 = vadd.f32 0.0, %v4422
      %v4424 = vpop.f32.mrb[0].mxu0
      %v4425 = vadd.f32 0.0, %v4424
      %4426 = vmatprep.mubr.bf16.mxu0 0
      %4427 = vmatmul.mubr.bf16.gmra.mrb[0].mxu0 %v4209
      %v4428 = vpop.f32.mrb[0].mxu0
      %v4429 = vpop.f32.mrb[0].mxu0
      %v4430 = vadd.f32 0.0, %v4429
      %v4431 = vpop.f32.mrb[0].mxu0
      %v4432 = vpop.f32.mrb[0].mxu0
      %4433 = vdwg.mxu0
      %4434 = vmatprep.subr.bf16.mxu0 0
      %4435 = vmatpush1.bf16.msra.mxu0 %v4298
      %4436 = vmatprep.subr.bf16.mxu0 0
      %4437 = vmatpush1.bf16.msra.mxu0 %v4301
      %4438 = vmatprep.subr.bf16.mxu0 0
      %4439 = vmatpush1.bf16.msra.mxu0 %v4304
      %4440 = vmatprep.subr.bf16.mxu0 0
      %4441 = vmatpush1.bf16.msra.mxu0 %v4307
      %4442 = vmatprep.subr.bf16.mxu0 0
      %4443 = vmatpush1.bf16.msra.mxu0 %v4310
      %4444 = vmatprep.subr.bf16.mxu0 0
      %4445 = vmatpush1.bf16.msra.mxu0 %v4313
      %4446 = vmatprep.subr.bf16.mxu0 0
      %4447 = vmatpush1.bf16.msra.mxu0 %v4316
      %4448 = vmatprep.subr.bf16.mxu0 0
      %4449 = vmatpush1.bf16.msra.mxu0 %v4319
      %4450 = vmatprep.subr.bf16.mxu0 0
      %4451 = vmatpush1.bf16.msra.mxu0 0
      %4452 = vmatprep.subr.bf16.mxu0 0
      %4453 = vmatpush1.bf16.msra.mxu0 0
      %4454 = vmatprep.subr.bf16.mxu0 0
      %4455 = vmatpush1.bf16.msra.mxu0 0
      %4456 = vmatprep.subr.bf16.mxu0 0
      %4457 = vmatpush1.bf16.msra.mxu0 0
      %4458 = vmatprep.subr.bf16.mxu0 0
      %4459 = vmatpush1.bf16.msra.mxu0 0
      %4460 = vmatprep.subr.bf16.mxu0 0
      %4461 = vmatpush1.bf16.msra.mxu0 0
      %4462 = vmatprep.subr.bf16.mxu0 0
      %4463 = vmatpush1.bf16.msra.mxu0 0
      %4464 = vmatprep.subr.bf16.mxu0 0
      %4465 = vmatpush1.bf16.msra.mxu0 0
      %4466 = vmatprep.mubr.bf16.mxu0 0
      %4467 = vmatmul.mubr.bf16.gmra.mrb[0].mxu0 %v4193
      %v4468 = vpop.f32.mrb[0].mxu0
      %v4469 = vadd.f32 0.0, %v4468
      %v4470 = vpop.f32.mrb[0].mxu0
      %v4471 = vpop.f32.mrb[0].mxu0
      %v4472 = vadd.f32 0.0, %v4471
      %v4473 = vpop.f32.mrb[0].mxu0
      %4474 = vmatprep.mubr.bf16.mxu0 0
      %4475 = vmatmul.mubr.bf16.gmra.mrb[0].mxu0 %v4196
      %v4476 = vpop.f32.mrb[0].mxu0
      %v4477 = vadd.f32 0.0, %v4476
      %v4478 = vpop.f32.mrb[0].mxu0
      %v4479 = vpop.f32.mrb[0].mxu0
      %v4480 = vadd.f32 0.0, %v4479
      %v4481 = vpop.f32.mrb[0].mxu0
      %4482 = vmatprep.mubr.bf16.mxu0 0
      %4483 = vmatmul.mubr.bf16.gmra.mrb[0].mxu0 %v4199
      %v4484 = vpop.f32.mrb[0].mxu0
      %v4485 = vadd.f32 0.0, %v4484
      %v4486 = vpop.f32.mrb[0].mxu0
      %v4487 = vpop.f32.mrb[0].mxu0
      %v4488 = vadd.f32 0.0, %v4487
      %v4489 = vpop.f32.mrb[0].mxu0
      %4490 = vmatprep.mubr.bf16.mxu0 0
      %4491 = vmatmul.mubr.bf16.gmra.mrb[0].mxu0 %v4202
      %v4492 = vpop.f32.mrb[0].mxu0
      %v4493 = vadd.f32 0.0, %v4492
      %v4494 = vpop.f32.mrb[0].mxu0
      %v4495 = vpop.f32.mrb[0].mxu0
      %v4496 = vadd.f32 0.0, %v4495
      %v4497 = vpop.f32.mrb[0].mxu0
      %4498 = vmatprep.mubr.bf16.mxu0 0
      %4499 = vmatmul.mubr.bf16.gmra.mrb[0].mxu0 %v4205
      %v4500 = vpop.f32.mrb[0].mxu0
      %v4501 = vadd.f32 0.0, %v4500
      %v4502 = vpop.f32.mrb[0].mxu0
      %v4503 = vpop.f32.mrb[0].mxu0
      %v4504 = vadd.f32 0.0, %v4503
      %v4505 = vpop.f32.mrb[0].mxu0
      %4506 = vmatprep.mubr.bf16.mxu0 0
      %4507 = vmatmul.mubr.bf16.gmra.mrb[0].mxu0 %v4209
      %v4508 = vpop.f32.mrb[0].mxu0
      %v4509 = vadd.f32 0.0, %v4508
      %v4510 = vpop.f32.mrb[0].mxu0
      %v4511 = vpop.f32.mrb[0].mxu0
      %v4512 = vpop.f32.mrb[0].mxu0
      %4513 = vdwg.mxu0
      %v4514 = vadd.f32 %v4147, %v4379
      %v4515 = vadd.f32 %v4148, %v4383
      %v4516 = vadd.f32 %v4149, %v4389
      %v4517 = vadd.f32 %v4150, %v4393
      %v4518 = vadd.f32 %v4151, %v4399
      %v4519 = vadd.f32 %v4152, %v4403
      %v4520 = vadd.f32 %v4153, %v4409
      %v4521 = vadd.f32 %v4154, %v4413
      %v4522 = vadd.f32 %v4155, %v4419
      %v4523 = vadd.f32 %v4156, %v4423
      %v4535 = vrot.slane %v4381, 1
      %v4536 = vrot.slane %v4385, 1
      %v4537 = vsel %vm1912, %v4535, %v4536
      %v4538 = vrot.slane %v4391, 1
      %v4539 = vsel %vm1912, %v4536, %v4538
      %v4540 = vrot.slane %v4395, 1
      %v4541 = vsel %vm1912, %v4538, %v4540
      %v4542 = vrot.slane %v4401, 1
      %v4543 = vsel %vm1912, %v4540, %v4542
      %v4544 = vrot.slane %v4405, 1
      %v4545 = vsel %vm1912, %v4542, %v4544
      %v4546 = vrot.slane %v4411, 1
      %v4547 = vsel %vm1912, %v4544, %v4546
      %v4548 = vrot.slane %v4415, 1
      %v4549 = vsel %vm1912, %v4546, %v4548
      %v4550 = vrot.slane %v4421, 1
      %v4551 = vsel %vm1912, %v4548, %v4550
      %v4552 = vrot.slane %v4425, 1
      %v4553 = vsel %vm1912, %v4550, %v4552
      %v4554 = vrot.slane %v4430, 1
      %v4555 = vsel %vm1912, %v4552, %v4554
      %v4566 = vadd.f32 %v4514, %v4537
      %v4567 = vadd.f32 %v4515, %v4539
      %v4568 = vadd.f32 %v4516, %v4541
      %v4569 = vadd.f32 %v4517, %v4543
      %v4570 = vadd.f32 %v4518, %v4545
      %v4571 = vadd.f32 %v4519, %v4547
      %v4572 = vadd.f32 %v4520, %v4549
      %v4573 = vadd.f32 %v4521, %v4551
      %v4574 = vadd.f32 %v4522, %v4553
      %v4575 = vadd.f32 %v4523, %v4555
      %v4587 = vrot.slane %v4469, 2
      %v4588 = vrot.slane %v4472, 2
      %v4589 = vsel %vm1965, %v4587, %v4588
      %v4590 = vrot.slane %v4477, 2
      %v4591 = vsel %vm1965, %v4588, %v4590
      %v4592 = vrot.slane %v4480, 2
      %v4593 = vsel %vm1965, %v4590, %v4592
      %v4594 = vrot.slane %v4485, 2
      %v4595 = vsel %vm1965, %v4592, %v4594
      %v4596 = vrot.slane %v4488, 2
      %v4597 = vsel %vm1965, %v4594, %v4596
      %v4598 = vrot.slane %v4493, 2
      %v4599 = vsel %vm1965, %v4596, %v4598
      %v4600 = vrot.slane %v4496, 2
      %v4601 = vsel %vm1965, %v4598, %v4600
      %v4602 = vrot.slane %v4501, 2
      %v4603 = vsel %vm1965, %v4600, %v4602
      %v4604 = vrot.slane %v4504, 2
      %v4605 = vsel %vm1965, %v4602, %v4604
      %v4606 = vrot.slane %v4509, 2
      %v4607 = vsel %vm1965, %v4604, %v4606
      %v4618 = vadd.f32 %v4566, %v4589
      %v4619 = vadd.f32 %v4567, %v4591
      %v4620 = vadd.f32 %v4568, %v4593
      %v4621 = vadd.f32 %v4569, %v4595
      %v4622 = vadd.f32 %v4570, %v4597
      %v4623 = vadd.f32 %v4571, %v4599
      %v4624 = vadd.f32 %v4572, %v4601
      %v4625 = vadd.f32 %v4573, %v4603
      %v4626 = vadd.f32 %v4574, %v4605
      %v4627 = vadd.f32 %v4575, %v4607
      %s4628 = scalar_lea.vmem %s11, 384
      %v4629 = vld [vmem:[%s4628] sm:$0xff]
      %v4630 = vld [vmem:[%s4628 + $0x8] sm:$0xf]
      %v4631 = vld [vmem:[%s4628 + $0xc] sm:$0xff]
      %v4632 = vld [vmem:[%s4628 + $0x14] sm:$0xf]
      %v4633 = vld [vmem:[%s4628 + $0x18] sm:$0xff]
      %v4634 = vld [vmem:[%s4628 + $0x20] sm:$0xf]
      %v4635 = vld [vmem:[%s4628 + $0x24] sm:$0xff]
      %v4636 = vld [vmem:[%s4628 + $0x2c] sm:$0xf]
      %v4637 = vld [vmem:[%s4628 + $0x30] sm:$0xff]
      %v4638 = vld [vmem:[%s4628 + $0x38] sm:$0xf]
      %v4639 = vld [vmem:[%s4628 + $0x3c] sm:$0xff]
      %v4640 = vld [vmem:[%s4628 + $0x44] sm:$0xf]
      %v4641 = vld [vmem:[%s4628 + $0x48] sm:$0xff]
      %v4642 = vld [vmem:[%s4628 + $0x50] sm:$0xf]
      %v4643 = vld [vmem:[%s4628 + $0x54] sm:$0xff]
      %v4644 = vld [vmem:[%s4628 + $0x5c] sm:$0xf]
      %v4645 = vld [vmem:[%s4628 + $0x60] sm:$0xff]
      %v4646 = vld [vmem:[%s4628 + $0x68] sm:$0xf]
      %v4647 = vld [vmem:[%s4628 + $0x6c] sm:$0xff]
      %v4648 = vld [vmem:[%s4628 + $0x74] sm:$0xf]
      %v4649 = vld [vmem:[%s4628 + $0x78] sm:$0xff]
      %v4650 = vld [vmem:[%s4628 + $0x80] sm:$0xf]
      %v4651 = vld [vmem:[%s4628 + $0x84] sm:$0xff]
      %v4652 = vld [vmem:[%s4628 + $0x8c] sm:$0xf]
      %v4653 = vld [vmem:[%s4628 + $0x90] sm:$0xff]
      %v4654 = vld [vmem:[%s4628 + $0x98] sm:$0xf]
      %v4655 = vld [vmem:[%s4628 + $0x9c] sm:$0xff]
      %v4656 = vld [vmem:[%s4628 + $0xa4] sm:$0xf]
      %v4657 = vld [vmem:[%s4628 + $0xa8] sm:$0xff]
      %v4658 = vld [vmem:[%s4628 + $0xb0] sm:$0xf]
      %v4659 = vld [vmem:[%s4628 + $0xb4] sm:$0xff]
      %v4660 = vld [vmem:[%s4628 + $0xbc] sm:$0xf]
      %v4661 = vrot.slane %v3695, 4
      %v4662 = vrot.slane %v3698, 5
      %v4663 = vor.u32 %v4661, %v4662
      %v4664 = vrot.slane %v3704, 4
      %v4665 = vrot.slane %v3707, 5
      %v4666 = vor.u32 %v4664, %v4665
      %v4667 = vsel %vm2646, %v4663, %v4666
      %v4668 = vrot.slane %v3713, 4
      %v4669 = vrot.slane %v3716, 5
      %v4670 = vor.u32 %v4668, %v4669
      %v4671 = vsel %vm2646, %v4666, %v4670
      %v4672 = vrot.slane %v3722, 4
      %v4673 = vrot.slane %v3725, 5
      %v4674 = vor.u32 %v4672, %v4673
      %v4675 = vsel %vm2646, %v4670, %v4674
      %v4676 = vrot.slane %v3731, 4
      %v4677 = vrot.slane %v3734, 5
      %v4678 = vor.u32 %v4676, %v4677
      %v4679 = vsel %vm2646, %v4674, %v4678
      %v4680 = vshrl.u32 %v3653, 16
      %v4682 = vrot.slane %v4680, 4
      %v4683 = vrot.slane %v4207, 5
      %v4684 = vor.u32 %v4682, %v4683
      %v4685 = vsel %vm2646, %v4678, %v4684
      %v4724 = vunpack.c.l.b16 %v4629
      %v4725 = vunpack.c.h.b16 %v4629
      %v4726 = vunpack.c.l.b16 %v4630
      %v4727 = vunpack.c.l.b16 %v4631
      %v4728 = vunpack.c.h.b16 %v4631
      %v4729 = vunpack.c.l.b16 %v4632
      %v4730 = vunpack.c.l.b16 %v4633
      %v4731 = vunpack.c.h.b16 %v4633
      %v4732 = vunpack.c.l.b16 %v4634
      %v4733 = vunpack.c.l.b16 %v4635
      %v4734 = vunpack.c.h.b16 %v4635
      %v4735 = vunpack.c.l.b16 %v4636
      %v4736 = vunpack.c.l.b16 %v4637
      %v4737 = vunpack.c.h.b16 %v4637
      %v4738 = vunpack.c.l.b16 %v4638
      %v4739 = vunpack.c.l.b16 %v4639
      %v4740 = vunpack.c.h.b16 %v4639
      %v4741 = vunpack.c.l.b16 %v4640
      %v4742 = vunpack.c.l.b16 %v4641
      %v4743 = vunpack.c.h.b16 %v4641
      %v4744 = vunpack.c.l.b16 %v4642
      %v4745 = vunpack.c.l.b16 %v4643
      %v4746 = vunpack.c.h.b16 %v4643
      %v4747 = vunpack.c.l.b16 %v4644
      %v4748 = vunpack.c.l.b16 %v4645
      %v4749 = vunpack.c.h.b16 %v4645
      %v4750 = vunpack.c.l.b16 %v4646
      %v4751 = vunpack.c.l.b16 %v4647
      %v4752 = vunpack.c.h.b16 %v4647
      %v4753 = vunpack.c.l.b16 %v4648
      %v4754 = vunpack.c.l.b16 %v4649
      %v4755 = vunpack.c.h.b16 %v4649
      %v4756 = vunpack.c.l.b16 %v4650
      %v4757 = vunpack.c.l.b16 %v4651
      %v4758 = vunpack.c.h.b16 %v4651
      %v4759 = vunpack.c.l.b16 %v4652
      %v4760 = vunpack.c.l.b16 %v4653
      %v4761 = vunpack.c.h.b16 %v4653
      %v4762 = vunpack.c.l.b16 %v4654
      %v4763 = vunpack.c.l.b16 %v4655
      %v4764 = vunpack.c.h.b16 %v4655
      %v4765 = vunpack.c.l.b16 %v4656
      %v4766 = vunpack.c.l.b16 %v4657
      %v4767 = vunpack.c.h.b16 %v4657
      %v4768 = vunpack.c.l.b16 %v4658
      %v4769 = vunpack.c.l.b16 %v4659
      %v4770 = vunpack.c.h.b16 %v4659
      %v4771 = vunpack.c.l.b16 %v4660
      %v4772 = vpack.c.b16 %v4727, %v4724
      %v4773 = vpack.c.b16 %v4728, %v4725
      %v4774 = vpack.c.b16 %v4729, %v4726
      %v4775 = vpack.c.b16 %v4733, %v4730
      %v4776 = vpack.c.b16 %v4734, %v4731
      %v4777 = vpack.c.b16 %v4735, %v4732
      %v4778 = vpack.c.b16 %v4739, %v4736
      %v4779 = vpack.c.b16 %v4740, %v4737
      %v4780 = vpack.c.b16 %v4741, %v4738
      %v4781 = vpack.c.b16 %v4745, %v4742
      %v4782 = vpack.c.b16 %v4746, %v4743
      %v4783 = vpack.c.b16 %v4747, %v4744
      %v4784 = vpack.c.b16 %v4751, %v4748
      %v4785 = vpack.c.b16 %v4752, %v4749
      %v4786 = vpack.c.b16 %v4753, %v4750
      %v4787 = vpack.c.b16 %v4757, %v4754
      %v4788 = vpack.c.b16 %v4758, %v4755
      %v4789 = vpack.c.b16 %v4759, %v4756
      %v4790 = vpack.c.b16 %v4763, %v4760
      %v4791 = vpack.c.b16 %v4764, %v4761
      %v4792 = vpack.c.b16 %v4765, %v4762
      %v4793 = vpack.c.b16 %v4769, %v4766
      %v4794 = vpack.c.b16 %v4770, %v4767
      %v4795 = vpack.c.b16 %v4771, %v4768
      %4820 = vmatprep.subr.bf16.mxu0 %v4773
      %4821 = vmatpush1.bf16.msra.mxu0 %v4772
      %4822 = vmatprep.subr.bf16.mxu0 %v4776
      %4823 = vmatpush1.bf16.msra.mxu0 %v4775
      %4824 = vmatprep.subr.bf16.mxu0 %v4779
      %4825 = vmatpush1.bf16.msra.mxu0 %v4778
      %4826 = vmatprep.subr.bf16.mxu0 %v4782
      %4827 = vmatpush1.bf16.msra.mxu0 %v4781
      %4828 = vmatprep.subr.bf16.mxu0 %v4785
      %4829 = vmatpush1.bf16.msra.mxu0 %v4784
      %4830 = vmatprep.subr.bf16.mxu0 %v4788
      %4831 = vmatpush1.bf16.msra.mxu0 %v4787
      %4832 = vmatprep.subr.bf16.mxu0 %v4791
      %4833 = vmatpush1.bf16.msra.mxu0 %v4790
      %4834 = vmatprep.subr.bf16.mxu0 %v4794
      %4835 = vmatpush1.bf16.msra.mxu0 %v4793
      %4836 = vmatprep.subr.bf16.mxu0 0
      %4837 = vmatpush1.bf16.msra.mxu0 0
      %4838 = vmatprep.subr.bf16.mxu0 0
      %4839 = vmatpush1.bf16.msra.mxu0 0
      %4840 = vmatprep.subr.bf16.mxu0 0
      %4841 = vmatpush1.bf16.msra.mxu0 0
      %4842 = vmatprep.subr.bf16.mxu0 0
      %4843 = vmatpush1.bf16.msra.mxu0 0
      %4844 = vmatprep.subr.bf16.mxu0 0
      %4845 = vmatpush1.bf16.msra.mxu0 0
      %4846 = vmatprep.subr.bf16.mxu0 0
      %4847 = vmatpush1.bf16.msra.mxu0 0
      %4848 = vmatprep.subr.bf16.mxu0 0
      %4849 = vmatpush1.bf16.msra.mxu0 0
      %4850 = vmatprep.subr.bf16.mxu0 0
      %4851 = vmatpush1.bf16.msra.mxu0 0
      %4852 = vmatprep.mubr.bf16.mxu0 0
      %4853 = vmatmul.mubr.bf16.gmra.mrb[0].mxu0 %v4667
      %v4854 = vpop.f32.mrb[0].mxu0
      %v4855 = vadd.f32 0.0, %v4854
      %v4856 = vpop.f32.mrb[0].mxu0
      %v4857 = vadd.f32 0.0, %v4856
      %v4858 = vpop.f32.mrb[0].mxu0
      %v4859 = vadd.f32 0.0, %v4858
      %v4860 = vpop.f32.mrb[0].mxu0
      %v4861 = vadd.f32 0.0, %v4860
      %4862 = vmatprep.mubr.bf16.mxu0 0
      %4863 = vmatmul.mubr.bf16.gmra.mrb[0].mxu0 %v4671
      %v4864 = vpop.f32.mrb[0].mxu0
      %v4865 = vadd.f32 0.0, %v4864
      %v4866 = vpop.f32.mrb[0].mxu0
      %v4867 = vadd.f32 0.0, %v4866
      %v4868 = vpop.f32.mrb[0].mxu0
      %v4869 = vadd.f32 0.0, %v4868
      %v4870 = vpop.f32.mrb[0].mxu0
      %v4871 = vadd.f32 0.0, %v4870
      %4872 = vmatprep.mubr.bf16.mxu0 0
      %4873 = vmatmul.mubr.bf16.gmra.mrb[0].mxu0 %v4675
      %v4874 = vpop.f32.mrb[0].mxu0
      %v4875 = vadd.f32 0.0, %v4874
      %v4876 = vpop.f32.mrb[0].mxu0
      %v4877 = vadd.f32 0.0, %v4876
      %v4878 = vpop.f32.mrb[0].mxu0
      %v4879 = vadd.f32 0.0, %v4878
      %v4880 = vpop.f32.mrb[0].mxu0
      %v4881 = vadd.f32 0.0, %v4880
      %4882 = vmatprep.mubr.bf16.mxu0 0
      %4883 = vmatmul.mubr.bf16.gmra.mrb[0].mxu0 %v4679
      %v4884 = vpop.f32.mrb[0].mxu0
      %v4885 = vadd.f32 0.0, %v4884
      %v4886 = vpop.f32.mrb[0].mxu0
      %v4887 = vadd.f32 0.0, %v4886
      %v4888 = vpop.f32.mrb[0].mxu0
      %v4889 = vadd.f32 0.0, %v4888
      %v4890 = vpop.f32.mrb[0].mxu0
      %v4891 = vadd.f32 0.0, %v4890
      %4892 = vmatprep.mubr.bf16.mxu0 0
      %4893 = vmatmul.mubr.bf16.gmra.mrb[0].mxu0 %v4685
      %v4894 = vpop.f32.mrb[0].mxu0
      %v4895 = vadd.f32 0.0, %v4894
      %v4896 = vpop.f32.mrb[0].mxu0
      %v4897 = vadd.f32 0.0, %v4896
      %v4898 = vpop.f32.mrb[0].mxu0
      %v4899 = vadd.f32 0.0, %v4898
      %v4900 = vpop.f32.mrb[0].mxu0
      %v4901 = vadd.f32 0.0, %v4900
      %4902 = vmatprep.mubr.bf16.mxu0 0
      %4903 = vmatmul.mubr.bf16.gmra.mrb[0].mxu0 %v4684
      %v4904 = vpop.f32.mrb[0].mxu0
      %v4905 = vpop.f32.mrb[0].mxu0
      %v4906 = vadd.f32 0.0, %v4905
      %v4907 = vpop.f32.mrb[0].mxu0
      %v4908 = vpop.f32.mrb[0].mxu0
      %4909 = vdwg.mxu0
      %4910 = vmatprep.subr.bf16.mxu0 0
      %4911 = vmatpush1.bf16.msra.mxu0 %v4774
      %4912 = vmatprep.subr.bf16.mxu0 0
      %4913 = vmatpush1.bf16.msra.mxu0 %v4777
      %4914 = vmatprep.subr.bf16.mxu0 0
      %4915 = vmatpush1.bf16.msra.mxu0 %v4780
      %4916 = vmatprep.subr.bf16.mxu0 0
      %4917 = vmatpush1.bf16.msra.mxu0 %v4783
      %4918 = vmatprep.subr.bf16.mxu0 0
      %4919 = vmatpush1.bf16.msra.mxu0 %v4786
      %4920 = vmatprep.subr.bf16.mxu0 0
      %4921 = vmatpush1.bf16.msra.mxu0 %v4789
      %4922 = vmatprep.subr.bf16.mxu0 0
      %4923 = vmatpush1.bf16.msra.mxu0 %v4792
      %4924 = vmatprep.subr.bf16.mxu0 0
      %4925 = vmatpush1.bf16.msra.mxu0 %v4795
      %4926 = vmatprep.subr.bf16.mxu0 0
      %4927 = vmatpush1.bf16.msra.mxu0 0
      %4928 = vmatprep.subr.bf16.mxu0 0
      %4929 = vmatpush1.bf16.msra.mxu0 0
      %4930 = vmatprep.subr.bf16.mxu0 0
      %4931 = vmatpush1.bf16.msra.mxu0 0
      %4932 = vmatprep.subr.bf16.mxu0 0
      %4933 = vmatpush1.bf16.msra.mxu0 0
      %4934 = vmatprep.subr.bf16.mxu0 0
      %4935 = vmatpush1.bf16.msra.mxu0 0
      %4936 = vmatprep.subr.bf16.mxu0 0
      %4937 = vmatpush1.bf16.msra.mxu0 0
      %4938 = vmatprep.subr.bf16.mxu0 0
      %4939 = vmatpush1.bf16.msra.mxu0 0
      %4940 = vmatprep.subr.bf16.mxu0 0
      %4941 = vmatpush1.bf16.msra.mxu0 0
      %4942 = vmatprep.mubr.bf16.mxu0 0
      %4943 = vmatmul.mubr.bf16.gmra.mrb[0].mxu0 %v4667
      %v4944 = vpop.f32.mrb[0].mxu0
      %v4945 = vadd.f32 0.0, %v4944
      %v4946 = vpop.f32.mrb[0].mxu0
      %v4947 = vpop.f32.mrb[0].mxu0
      %v4948 = vadd.f32 0.0, %v4947
      %v4949 = vpop.f32.mrb[0].mxu0
      %4950 = vmatprep.mubr.bf16.mxu0 0
      %4951 = vmatmul.mubr.bf16.gmra.mrb[0].mxu0 %v4671
      %v4952 = vpop.f32.mrb[0].mxu0
      %v4953 = vadd.f32 0.0, %v4952
      %v4954 = vpop.f32.mrb[0].mxu0
      %v4955 = vpop.f32.mrb[0].mxu0
      %v4956 = vadd.f32 0.0, %v4955
      %v4957 = vpop.f32.mrb[0].mxu0
      %4958 = vmatprep.mubr.bf16.mxu0 0
      %4959 = vmatmul.mubr.bf16.gmra.mrb[0].mxu0 %v4675
      %v4960 = vpop.f32.mrb[0].mxu0
      %v4961 = vadd.f32 0.0, %v4960
      %v4962 = vpop.f32.mrb[0].mxu0
      %v4963 = vpop.f32.mrb[0].mxu0
      %v4964 = vadd.f32 0.0, %v4963
      %v4965 = vpop.f32.mrb[0].mxu0
      %4966 = vmatprep.mubr.bf16.mxu0 0
      %4967 = vmatmul.mubr.bf16.gmra.mrb[0].mxu0 %v4679
      %v4968 = vpop.f32.mrb[0].mxu0
      %v4969 = vadd.f32 0.0, %v4968
      %v4970 = vpop.f32.mrb[0].mxu0
      %v4971 = vpop.f32.mrb[0].mxu0
      %v4972 = vadd.f32 0.0, %v4971
      %v4973 = vpop.f32.mrb[0].mxu0
      %4974 = vmatprep.mubr.bf16.mxu0 0
      %4975 = vmatmul.mubr.bf16.gmra.mrb[0].mxu0 %v4685
      %v4976 = vpop.f32.mrb[0].mxu0
      %v4977 = vadd.f32 0.0, %v4976
      %v4978 = vpop.f32.mrb[0].mxu0
      %v4979 = vpop.f32.mrb[0].mxu0
      %v4980 = vadd.f32 0.0, %v4979
      %v4981 = vpop.f32.mrb[0].mxu0
      %4982 = vmatprep.mubr.bf16.mxu0 0
      %4983 = vmatmul.mubr.bf16.gmra.mrb[0].mxu0 %v4684
      %v4984 = vpop.f32.mrb[0].mxu0
      %v4985 = vadd.f32 0.0, %v4984
      %v4986 = vpop.f32.mrb[0].mxu0
      %v4987 = vpop.f32.mrb[0].mxu0
      %v4988 = vpop.f32.mrb[0].mxu0
      %4989 = vdwg.mxu0
      %v4990 = vadd.f32 %v4618, %v4855
      %v4991 = vadd.f32 %v4619, %v4859
      %v4992 = vadd.f32 %v4620, %v4865
      %v4993 = vadd.f32 %v4621, %v4869
      %v4994 = vadd.f32 %v4622, %v4875
      %v4995 = vadd.f32 %v4623, %v4879
      %v4996 = vadd.f32 %v4624, %v4885
      %v4997 = vadd.f32 %v4625, %v4889
      %v4998 = vadd.f32 %v4626, %v4895
      %v4999 = vadd.f32 %v4627, %v4899
      %v5011 = vrot.slane %v4857, 1
      %v5012 = vrot.slane %v4861, 1
      %v5013 = vsel %vm1912, %v5011, %v5012
      %v5014 = vrot.slane %v4867, 1
      %v5015 = vsel %vm1912, %v5012, %v5014
      %v5016 = vrot.slane %v4871, 1
      %v5017 = vsel %vm1912, %v5014, %v5016
      %v5018 = vrot.slane %v4877, 1
      %v5019 = vsel %vm1912, %v5016, %v5018
      %v5020 = vrot.slane %v4881, 1
      %v5021 = vsel %vm1912, %v5018, %v5020
      %v5022 = vrot.slane %v4887, 1
      %v5023 = vsel %vm1912, %v5020, %v5022
      %v5024 = vrot.slane %v4891, 1
      %v5025 = vsel %vm1912, %v5022, %v5024
      %v5026 = vrot.slane %v4897, 1
      %v5027 = vsel %vm1912, %v5024, %v5026
      %v5028 = vrot.slane %v4901, 1
      %v5029 = vsel %vm1912, %v5026, %v5028
      %v5030 = vrot.slane %v4906, 1
      %v5031 = vsel %vm1912, %v5028, %v5030
      %v5042 = vadd.f32 %v4990, %v5013
      %v5043 = vadd.f32 %v4991, %v5015
      %v5044 = vadd.f32 %v4992, %v5017
      %v5045 = vadd.f32 %v4993, %v5019
      %v5046 = vadd.f32 %v4994, %v5021
      %v5047 = vadd.f32 %v4995, %v5023
      %v5048 = vadd.f32 %v4996, %v5025
      %v5049 = vadd.f32 %v4997, %v5027
      %v5050 = vadd.f32 %v4998, %v5029
      %v5051 = vadd.f32 %v4999, %v5031
      %v5063 = vrot.slane %v4945, 2
      %v5064 = vrot.slane %v4948, 2
      %v5065 = vsel %vm1965, %v5063, %v5064
      %v5066 = vrot.slane %v4953, 2
      %v5067 = vsel %vm1965, %v5064, %v5066
      %v5068 = vrot.slane %v4956, 2
      %v5069 = vsel %vm1965, %v5066, %v5068
      %v5070 = vrot.slane %v4961, 2
      %v5071 = vsel %vm1965, %v5068, %v5070
      %v5072 = vrot.slane %v4964, 2
      %v5073 = vsel %vm1965, %v5070, %v5072
      %v5074 = vrot.slane %v4969, 2
      %v5075 = vsel %vm1965, %v5072, %v5074
      %v5076 = vrot.slane %v4972, 2
      %v5077 = vsel %vm1965, %v5074, %v5076
      %v5078 = vrot.slane %v4977, 2
      %v5079 = vsel %vm1965, %v5076, %v5078
      %v5080 = vrot.slane %v4980, 2
      %v5081 = vsel %vm1965, %v5078, %v5080
      %v5082 = vrot.slane %v4985, 2
      %v5083 = vsel %vm1965, %v5080, %v5082
      %v5094 = vadd.f32 %v5042, %v5065
      %v5095 = vadd.f32 %v5043, %v5067
      %v5096 = vadd.f32 %v5044, %v5069
      %v5097 = vadd.f32 %v5045, %v5071
      %v5098 = vadd.f32 %v5046, %v5073
      %v5099 = vadd.f32 %v5047, %v5075
      %v5100 = vadd.f32 %v5048, %v5077
      %v5101 = vadd.f32 %v5049, %v5079
      %v5102 = vadd.f32 %v5050, %v5081
      %v5103 = vadd.f32 %v5051, %v5083
      %v5104 = vld [vmem:[%s500 + $0x10] sm:$0xff]
      %v5105 = vld [vmem:[%s500 + $0x18] sm:$0xff]
      %v5106 = vld [vmem:[%s500 + $0x20] sm:$0xff]
      %v5107 = vld [vmem:[%s500 + $0x28] sm:$0xff]
      %v5108 = vld [vmem:[%s500 + $0x30] sm:$0xff]
      %v5109 = vld [vmem:[%s500 + $0x38] sm:$0xff]
      %v5110 = vld [vmem:[%s500 + $0x40] sm:$0xff]
      %v5111 = vld [vmem:[%s500 + $0x48] sm:$0xff]
      %v5112 = vld [vmem:[%s500 + $0x50] sm:$0xff]
      %v5113 = vld [vmem:[%s500 + $0x58] sm:$0xff]
      %v5114 = vld [vmem:[%s13] sm:$0xf]
      %v5115 = vld [vmem:[%s13 + $0x4] sm:$0xf]
      %v5116 = vld [vmem:[%s13 + $0x8] sm:$0xf]
      %v5117 = vld [vmem:[%s13 + $0xc] sm:$0xf]
      %v5118 = vld [vmem:[%s13 + $0x10] sm:$0xf]
      %v5119 = vld [vmem:[%s13 + $0x14] sm:$0xf]
      %v5120 = vld [vmem:[%s13 + $0x18] sm:$0xf]
      %v5121 = vld [vmem:[%s13 + $0x1c] sm:$0xf]
      %v5122 = vld [vmem:[%s13 + $0x20] sm:$0xf]
      %v5123 = vld [vmem:[%s13 + $0x24] sm:$0xf]
      %v5124 = vld [vmem:[%s13 + $0x28] sm:$0xf]
      %v5125 = vld [vmem:[%s13 + $0x2c] sm:$0xf]
      %v5126 = vld [vmem:[%s13 + $0x30] sm:$0xf]
      %v5127 = vld [vmem:[%s13 + $0x34] sm:$0xf]
      %v5128 = vld [vmem:[%s13 + $0x38] sm:$0xf]
      %v5129 = vld [vmem:[%s13 + $0x3c] sm:$0xf]
      %v5130 = vld [vmem:[%s13 + $0x40] sm:$0xf]
      %v5131 = vld [vmem:[%s13 + $0x44] sm:$0xf]
      %v5132 = vld [vmem:[%s13 + $0x48] sm:$0xf]
      %v5133 = vld [vmem:[%s13 + $0x4c] sm:$0xf]
      %v5134 = vld [vmem:[%s13 + $0x50] sm:$0xf]
      %v5135 = vld [vmem:[%s13 + $0x54] sm:$0xf]
      %v5136 = vld [vmem:[%s13 + $0x58] sm:$0xf]
      %v5137 = vld [vmem:[%s13 + $0x5c] sm:$0xf]
      %v5138 = vld [vmem:[%s14] sm:$0x1]
      %v5140 = vlaneseq
      %v5141 = vshrl.u32 %v5140, 7
      %v5142 = vsub.s32 0, %v5141
      %v5143 = vrot.slane %v5138, %v5142
      %v5155 = vunpack.c.l.b16 %v5104
      %v5156 = vunpack.c.h.b16 %v5104
      %v5157 = vunpack.c.l.b16 %v5105
      %v5158 = vunpack.c.h.b16 %v5105
      %v5159 = vunpack.c.l.b16 %v5106
      %v5160 = vunpack.c.h.b16 %v5106
      %v5161 = vunpack.c.l.b16 %v5107
      %v5162 = vunpack.c.h.b16 %v5107
      %v5163 = vunpack.c.l.b16 %v5108
      %v5164 = vunpack.c.h.b16 %v5108
      %v5165 = vunpack.c.l.b16 %v5109
      %v5166 = vunpack.c.h.b16 %v5109
      %v5167 = vunpack.c.l.b16 %v5110
      %v5168 = vunpack.c.h.b16 %v5110
      %v5169 = vunpack.c.l.b16 %v5111
      %v5170 = vunpack.c.h.b16 %v5111
      %v5171 = vunpack.c.l.b16 %v5112
      %v5172 = vunpack.c.h.b16 %v5112
      %v5173 = vunpack.c.l.b16 %v5113
      %v5174 = vunpack.c.h.b16 %v5113
      %v5175 = vpack.c.b16 %v5157, %v5155
      %v5176 = vpack.c.b16 %v5158, %v5156
      %v5177 = vpack.c.b16 %v5161, %v5159
      %v5178 = vpack.c.b16 %v5162, %v5160
      %v5179 = vpack.c.b16 %v5165, %v5163
      %v5180 = vpack.c.b16 %v5166, %v5164
      %v5181 = vpack.c.b16 %v5169, %v5167
      %v5182 = vpack.c.b16 %v5170, %v5168
      %v5183 = vpack.c.b16 %v5173, %v5171
      %v5184 = vpack.c.b16 %v5174, %v5172
      %v5214 = vunpack.c.l.b16 %v5114
      %v5215 = vunpack.c.l.b16 %v5115
      %v5216 = vunpack.c.l.b16 %v5116
      %v5217 = vunpack.c.l.b16 %v5117
      %v5218 = vunpack.c.l.b16 %v5118
      %v5219 = vunpack.c.l.b16 %v5119
      %v5220 = vunpack.c.l.b16 %v5120
      %v5221 = vunpack.c.l.b16 %v5121
      %v5222 = vunpack.c.l.b16 %v5122
      %v5223 = vunpack.c.l.b16 %v5123
      %v5224 = vunpack.c.l.b16 %v5124
      %v5225 = vunpack.c.l.b16 %v5125
      %v5226 = vunpack.c.l.b16 %v5126
      %v5227 = vunpack.c.l.b16 %v5127
      %v5228 = vunpack.c.l.b16 %v5128
      %v5229 = vunpack.c.l.b16 %v5129
      %v5230 = vunpack.c.l.b16 %v5130
      %v5231 = vunpack.c.l.b16 %v5131
      %v5232 = vunpack.c.l.b16 %v5132
      %v5233 = vunpack.c.l.b16 %v5133
      %v5234 = vunpack.c.l.b16 %v5134
      %v5235 = vunpack.c.l.b16 %v5135
      %v5236 = vunpack.c.l.b16 %v5136
      %v5237 = vunpack.c.l.b16 %v5137
      %v5238 = vpack.c.b16 %v5215, %v5214
      %v5239 = vpack.c.b16 %v5217, %v5216
      %v5240 = vpack.c.b16 %v5219, %v5218
      %v5241 = vpack.c.b16 %v5221, %v5220
      %v5242 = vpack.c.b16 %v5223, %v5222
      %v5243 = vpack.c.b16 %v5225, %v5224
      %v5244 = vpack.c.b16 %v5227, %v5226
      %v5245 = vpack.c.b16 %v5229, %v5228
      %v5246 = vpack.c.b16 %v5231, %v5230
      %v5247 = vpack.c.b16 %v5233, %v5232
      %v5248 = vpack.c.b16 %v5235, %v5234
      %v5249 = vpack.c.b16 %v5237, %v5236
      %v5263 = vsel %vm641, %v5176, 0
      %v5266 = vsel %vm641, %v5178, 0
      %v5269 = vsel %vm641, %v5180, 0
      %v5272 = vsel %vm641, %v5182, 0
      %v5275 = vsel %vm641, %v5184, 0
      %5277 = vmatprep.subr.bf16.mxu0 0
      %5278 = vmatpush1.bf16.msra.mxu0 %v5238
      %5279 = vmatprep.subr.bf16.mxu0 0
      %5280 = vmatpush1.bf16.msra.mxu0 %v5239
      %5281 = vmatprep.subr.bf16.mxu0 0
      %5282 = vmatpush1.bf16.msra.mxu0 %v5240
      %5283 = vmatprep.subr.bf16.mxu0 0
      %5284 = vmatpush1.bf16.msra.mxu0 %v5241
      %5285 = vmatprep.subr.bf16.mxu0 0
      %5286 = vmatpush1.bf16.msra.mxu0 %v5242
      %5287 = vmatprep.subr.bf16.mxu0 0
      %5288 = vmatpush1.bf16.msra.mxu0 %v5243
      %5289 = vmatprep.subr.bf16.mxu0 0
      %5290 = vmatpush1.bf16.msra.mxu0 %v5244
      %5291 = vmatprep.subr.bf16.mxu0 0
      %5292 = vmatpush1.bf16.msra.mxu0 %v5245
      %5293 = vmatprep.subr.bf16.mxu0 0
      %5294 = vmatpush1.bf16.msra.mxu0 %v5246
      %5295 = vmatprep.subr.bf16.mxu0 0
      %5296 = vmatpush1.bf16.msra.mxu0 %v5247
      %5297 = vmatprep.subr.bf16.mxu0 0
      %5298 = vmatpush1.bf16.msra.mxu0 %v5248
      %5299 = vmatprep.subr.bf16.mxu0 0
      %5300 = vmatpush1.bf16.msra.mxu0 %v5249
      %5301 = vmatprep.subr.bf16.mxu0 0
      %5302 = vmatpush1.bf16.msra.mxu0 0
      %5303 = vmatprep.subr.bf16.mxu0 0
      %5304 = vmatpush1.bf16.msra.mxu0 0
      %5305 = vmatprep.subr.bf16.mxu0 0
      %5306 = vmatpush1.bf16.msra.mxu0 0
      %5307 = vmatprep.subr.bf16.mxu0 0
      %5308 = vmatpush1.bf16.msra.mxu0 0
      %5309 = vmatprep.mubr.bf16.mxu0 %v5263
      %5310 = vmatmul.mubr.bf16.gmra.mrb[0].mxu0 %v5175
      %v5311 = vpop.f32.mrb[0].mxu0
      %v5312 = vadd.f32 %v5143, %v5311
      %v5313 = vpop.f32.mrb[0].mxu0
      %v5314 = vpop.f32.mrb[0].mxu0
      %v5315 = vadd.f32 %v5143, %v5314
      %v5316 = vpop.f32.mrb[0].mxu0
      %5317 = vmatprep.mubr.bf16.mxu0 %v5266
      %5318 = vmatmul.mubr.bf16.gmra.mrb[0].mxu0 %v5177
      %v5319 = vpop.f32.mrb[0].mxu0
      %v5320 = vadd.f32 %v5143, %v5319
      %v5321 = vpop.f32.mrb[0].mxu0
      %v5322 = vpop.f32.mrb[0].mxu0
      %v5323 = vadd.f32 %v5143, %v5322
      %v5324 = vpop.f32.mrb[0].mxu0
      %5325 = vmatprep.mubr.bf16.mxu0 %v5269
      %5326 = vmatmul.mubr.bf16.gmra.mrb[0].mxu0 %v5179
      %v5327 = vpop.f32.mrb[0].mxu0
      %v5328 = vadd.f32 %v5143, %v5327
      %v5329 = vpop.f32.mrb[0].mxu0
      %v5330 = vpop.f32.mrb[0].mxu0
      %v5331 = vadd.f32 %v5143, %v5330
      %v5332 = vpop.f32.mrb[0].mxu0
      %5333 = vmatprep.mubr.bf16.mxu0 %v5272
      %5334 = vmatmul.mubr.bf16.gmra.mrb[0].mxu0 %v5181
      %v5335 = vpop.f32.mrb[0].mxu0
      %v5336 = vadd.f32 %v5143, %v5335
      %v5337 = vpop.f32.mrb[0].mxu0
      %v5338 = vpop.f32.mrb[0].mxu0
      %v5339 = vadd.f32 %v5143, %v5338
      %v5340 = vpop.f32.mrb[0].mxu0
      %5341 = vmatprep.mubr.bf16.mxu0 %v5275
      %5342 = vmatmul.mubr.bf16.gmra.mrb[0].mxu0 %v5183
      %v5343 = vpop.f32.mrb[0].mxu0
      %v5344 = vadd.f32 %v5143, %v5343
      %v5345 = vpop.f32.mrb[0].mxu0
      %v5346 = vpop.f32.mrb[0].mxu0
      %v5347 = vadd.f32 %v5143, %v5346
      %v5348 = vpop.f32.mrb[0].mxu0
      %5349 = vdwg.mxu0
      %v5350 = vld [vmem:[%s12] sm:$0x1]
      %v5352 = vlaneseq
      %v5353 = vshrl.u32 %v5352, 7
      %v5354 = vsub.s32 0, %v5353
      %v5355 = vrot.slane %v5350, %v5354
      %v5357 = vadd.f32 %v5094, %v5355
      %v5358 = vadd.f32 %v5095, %v5355
      %v5359 = vadd.f32 %v5096, %v5355
      %v5360 = vadd.f32 %v5097, %v5355
      %v5361 = vadd.f32 %v5098, %v5355
      %v5362 = vadd.f32 %v5099, %v5355
      %v5363 = vadd.f32 %v5100, %v5355
      %v5364 = vadd.f32 %v5101, %v5355
      %v5365 = vadd.f32 %v5102, %v5355
      %v5366 = vadd.f32 %v5103, %v5355
      %v5367 = vadd.f32 %v5357, %v5312
      %v5368 = vadd.f32 %v5358, %v5315
      %v5369 = vadd.f32 %v5359, %v5320
      %v5370 = vadd.f32 %v5360, %v5323
      %v5371 = vadd.f32 %v5361, %v5328
      %v5372 = vadd.f32 %v5362, %v5331
      %v5373 = vadd.f32 %v5363, %v5336
      %v5374 = vadd.f32 %v5364, %v5339
      %v5375 = vadd.f32 %v5365, %v5344
      %v5376 = vadd.f32 %v5366, %v5347
      %v5379 = vrot.slane %v5368, 2
      %v5380 = vrot.slane %v5369, 2
      %v5381 = vsel %vm1965, %v5379, %v5380
      %vm5384 = vcmask 1043456
      %v5385 = vrot.slane %v5369, 4
      %v5386 = vrot.slane %v5370, 4
      %v5387 = vsel %vm5384, %v5385, %v5386
      %vm5390 = vcmask 1041408
      %v5391 = vrot.slane %v5370, 6
      %v5392 = vrot.slane %v5371, 6
      %v5393 = vsel %vm5390, %v5391, %v5392
      %v5397 = vrot.slane %v5373, 2
      %v5398 = vrot.slane %v5374, 2
      %v5399 = vsel %vm1965, %v5397, %v5398
      %v5402 = vrot.slane %v5374, 4
      %v5403 = vrot.slane %v5375, 4
      %v5404 = vsel %vm5384, %v5402, %v5403
      %v5407 = vrot.slane %v5375, 6
      %v5408 = vrot.slane %v5376, 6
      %v5409 = vsel %vm5390, %v5407, %v5408
      %v5411 = vpack.c.bf16 %v5381, %v5367
      %v5412 = vpack.c.bf16 %v5393, %v5387
      %v5413 = vpack.c.bf16 %v5399, %v5372
      %v5414 = vpack.c.bf16 %v5409, %v5404
      %v5419 = vunpack.c.l.b16 %v5411
      %v5420 = vunpack.c.h.b16 %v5411
      %v5421 = vunpack.c.l.b16 %v5412
      %v5422 = vunpack.c.h.b16 %v5412
      %v5423 = vunpack.c.l.b16 %v5413
      %v5424 = vunpack.c.h.b16 %v5413
      %v5425 = vunpack.c.l.b16 %v5414
      %v5426 = vunpack.c.h.b16 %v5414
      %v5427 = vpack.c.b16 %v5419, %v5419
      %v5428 = vpack.c.b16 %v5420, %v5420
      %v5429 = vpack.c.b16 %v5421, %v5421
      %v5430 = vpack.c.b16 %v5422, %v5422
      %v5431 = vpack.c.b16 %v5423, %v5423
      %v5432 = vpack.c.b16 %v5424, %v5424
      %v5433 = vpack.c.b16 %v5425, %v5425
      %v5434 = vpack.c.b16 %v5426, %v5426
      %5443 = vst [vmem:[%s508] sm:$0xf] %v5427
      %5444 = vst [vmem:[%s508 + $0x4] sm:$0xf] %v5428
      %5445 = vst [vmem:[%s508 + $0x8] sm:$0xf] %v5429
      %5446 = vst [vmem:[%s508 + $0xc] sm:$0xf] %v5430
      %5447 = vst [vmem:[%s508 + $0x10] sm:$0xf] %v5431
      %5448 = vst [vmem:[%s508 + $0x14] sm:$0xf] %v5432
      %5449 = vst [vmem:[%s508 + $0x18] sm:$0xf] %v5433
      %5450 = vst [vmem:[%s508 + $0x1c] sm:$0xf] %v5434
      %p5451 = scmp.lt.s32.totalorder %s26, 1
      %s5452 = scalar_select %p5451, %s26, 1
      %s5453 = smul.addr %s5452, 8
      %s5454 = smul.addr %s5453, 4
      %s5455 = scalar_lea.vmem %s15, %s5454
      // Predicated region
      $region81: #{up_block_forward.2} parent=79 // pred_check
        %p5456 = pneg %p369
      $region82: #{up_block_forward.2} parent=79 // pred_check_branch
        %5458 = sbr.rel (%p5456) target = $region84
      $region83: #{up_block_forward.2} parent=79 // pred_region
        _
      $region84: #{up_block_forward.2} parent=79 // pred_fallthru
        _
    $region80: #{up_block_forward.2} parent=5 // pred_fallthru
      _
    %p5459 = scmp.le.s32.totalorder 2, %s21
    // Predicated region
    $region85: #{up_block_forward.2} parent=5 // pred_check
      %p5460 = pneg %p5459
    $region86: #{up_block_forward.2} parent=5 // pred_check_branch
      %5462 = sbr.rel (%p5460) target = $region88
    $region87: #{up_block_forward.2} parent=5 // pred_region
      %s5463 = ssub.s32 %s21, 2
      // Predicated region
      $region89: #{up_block_forward.2} parent=87 // pred_check
        %p5464 = pneg %p375
      $region90: #{up_block_forward.2} parent=87 // pred_check_branch
        %5466 = sbr.rel (%p5464) target = $region92
      $region91: #{up_block_forward.2} parent=87 // pred_region
        %p5467 = scmp.lt.s32.totalorder %s27, 1
        %s5468 = scalar_select %p5467, %s27, 1
        %s5469 = smul.addr %s5468, 8
        %s5470 = smul.addr %s5469, 4
        %s5471 = scalar_lea.vmem %s15, %s5470
      $region92: #{up_block_forward.2} parent=87 // pred_fallthru
        _
    $region88: #{up_block_forward.2} parent=5 // pred_fallthru
      _
  $region6: #{up_block_forward.2} parent=0 // loop_footer
    %s25 = sadd.s32 1, %s21
  $region7: #{up_block_forward.2} parent=0 // loop_footer_branch
    %20 = sbr.rel target = $region3
  $region8: #{up_block_forward.2} parent=0 // loop_exit
    _

</llo_original>
